<compile_context>
chip_gen: v6e
topology: v6e:2x2x1
jax: 0.10.0
libtpu: 0.0.40
codegen_flags: <defaults>
</compile_context>

<pallas_src>
import functools
import math

import jax
import jax.numpy as jnp
from jax.experimental import pallas as pl
from jax.experimental.pallas import tpu as pltpu


def _encoder_kernel(
    vid_ref, txt_ref, vmadd_ref, tmadd_ref, vpos_ref, tpos_ref,
    ws_qk_ref, ws_vo_ref, bs_ref,
    wc_ref, bc_ref,
    w1_ref, b1_ref, w2_ref, b2_ref, ln_ref,
    vid_out_ref, attn_out_ref,
    ctx_scr,
    *, nheads):
  """One encoder layer (grid axis 1) for one block of Bt batch elements."""
  Bt, Lv, D = vid_ref.shape
  Lt = txt_ref.shape[1]
  H = nheads
  dh = D // H
  f32 = jnp.float32
  bf16 = jnp.bfloat16

  layer = pl.program_id(1)

  # Layer 0: seed the resident output block with the initial video stream.
  @pl.when(layer == 0)
  def _():
    vid_out_ref[...] = vid_ref[...]

  # Running video stream (resident in VMEM across the layer axis).
  x = vid_out_ref[...].reshape(Bt * Lv, D)
  txt = txt_ref[...].reshape(Bt * Lt, D)
  vpos = vpos_ref[...].reshape(Bt * Lv, D)
  tpos = tpos_ref[...].reshape(Bt * Lt, D)
  vmask = vmadd_ref[...]          # (Bt, 1, Lv) additive key-pad mask, f32
  tmask = tmadd_ref[...]          # (Bt, 1, Lt)
  ln = ln_ref[...]                # (6, D)  [g1,b1,g2,b2,g3,b3]
  bs = bs_ref[...]                # (4, D)  self-attn biases (bq pre-scaled)
  bc = bc_ref[...]                # (4, D)  cross-attn biases (bq pre-scaled)

  def layer_norm(t, g, b):
    mu = jnp.mean(t, axis=-1, keepdims=True)
    var = jnp.mean(jnp.square(t - mu), axis=-1, keepdims=True)
    return (t - mu) * jax.lax.rsqrt(var + 1e-5) * g + b

  def attend(q, k, v, mask3, Lq, Lk, want_attn):
    """Multi-head attention; scale already folded into Wq.

    q: (Bt*Lq, D) f32, k/v: (Bt*Lk, D) f32, mask3: (Bt, 1, Lk) additive f32.
    Returns concat-head context (Bt*Lq, D) f32 and optionally the
    head-averaged probabilities (Bt, Lq, Lk).
    """
    q3 = q.astype(bf16).reshape(Bt, Lq, D)
    k3 = k.astype(bf16).reshape(Bt, Lk, D)
    v3 = v.astype(bf16).reshape(Bt, Lk, D)
    # Hoisted: one mask broadcast per attend call, not one per head.
    mask_full = jnp.broadcast_to(mask3, (Bt, Lq, Lk))
    attn_sum = jnp.zeros((Bt, Lq, Lk), f32) if want_attn else None
    for h in range(H):                       # static head loop only
      sl = slice(h * dh, (h + 1) * dh)
      s = jnp.einsum('bqd,bkd->bqk', q3[:, :, sl], k3[:, :, sl],
                     preferred_element_type=f32)
      s = s + mask_full
      s = s - jnp.max(s, axis=-1, keepdims=True)
      p = jnp.exp(s)
      p = p * pl.reciprocal(jnp.sum(p, axis=-1, keepdims=True), approx=True)
      if want_attn:
        attn_sum = attn_sum + p
      # Write this head's context directly into the scratch slab (no concats).
      ctx_scr[:, :, sl] = jnp.einsum('bqk,bkd->bqd', p.astype(bf16),
                                     v3[:, :, sl], preferred_element_type=f32)
    ctx = ctx_scr[...].reshape(Bt * Lq, D)
    attn_avg = attn_sum * (1.0 / H) if want_attn else None
    return ctx, attn_avg

  # ---------------- video self-attention ----------------
  qk_in = (x + vpos).astype(bf16)
  qk_proj = jnp.dot(qk_in, ws_qk_ref[...], preferred_element_type=f32)
  q_s = qk_proj[:, :D] + bs[0:1, :]            # scale folded into Wq/bq
  k_s = qk_proj[:, D:2 * D] + bs[1:2, :]
  v_s = jnp.dot(x.astype(bf16), ws_vo_ref[0],
                preferred_element_type=f32) + bs[2:3, :]
  ctx_s, _ = attend(q_s, k_s, v_s, vmask, Lv, Lv, False)
  self_out = jnp.dot(ctx_s.astype(bf16), ws_vo_ref[1],
                     preferred_element_type=f32) + bs[3:4, :]
  x = layer_norm(x + self_out, ln[0:1, :], ln[1:2, :])

  # ---------------- video -> text cross-attention ----------------
  q_c = jnp.dot((x + vpos).astype(bf16), wc_ref[0],
                preferred_element_type=f32) + bc[0:1, :]
  k_c = jnp.dot((txt + tpos).astype(bf16), wc_ref[1],
                preferred_element_type=f32) + bc[1:2, :]
  v_c = jnp.dot(txt.astype(bf16), wc_ref[2],
                preferred_element_type=f32) + bc[2:3, :]
  ctx_c, attn = attend(q_c, k_c, v_c, tmask, Lv, Lt, True)
  cross_out = jnp.dot(ctx_c.astype(bf16), wc_ref[3],
                      preferred_element_type=f32) + bc[3:4, :]
  x = layer_norm(x + cross_out, ln[2:3, :], ln[3:4, :])

  # ---------------- FFN ----------------
  # TODO(synk): for very large Fdim on v7x (64 MiB VMEM), tile the FFN over
  # Fdim with an inner pltpu.emit_pipeline instead of loading w1/w2 whole.
  hmid = jnp.maximum(
      jnp.dot(x.astype(bf16), w1_ref[...],
              preferred_element_type=f32) + b1_ref[...], 0.0)
  ffn = jnp.dot(hmid.astype(bf16), w2_ref[...],
                preferred_element_type=f32) + b2_ref[...]
  x = layer_norm(x + ffn, ln[4:5, :], ln[5:6, :])

  # Update resident state; HBM writeback happens once per batch block.
  vid_out_ref[...] = x.reshape(Bt, Lv, D)
  # Only the last layer's value survives until writeback (= PyTorch's attn).
  attn_out_ref[...] = attn


def _vmem_capacity_bytes():
  try:
    return int(pltpu.get_tpu_info().vmem_capacity_bytes)
  except Exception:
    return 128 * 1024 * 1024


def _vmem_limit_bytes(cap):
  # ~56 MiB on 64 MiB v7x, 96 MiB on 128 MiB v5e/v6e.
  return max(32 * 1024 * 1024, min(cap - 8 * 1024 * 1024, 96 * 1024 * 1024))


def _choose_bt(B, Lv, target_rows):
  """Largest divisor of B with slab <= target_rows and >=2 batch grid steps."""
  best = 1
  for cand in range(1, B + 1):
    if B % cand != 0:
      continue
    if cand * Lv > max(target_rows, Lv):
      continue
    if B >= 2 and B // cand < 2:
      continue          # keep >=2 steps on the parallel axis for v7x megacore
    best = cand
  return best


def encoder_forward(vid, txt, vmadd, tmadd, vpos, tpos, sp, nheads):
  """Runs all layers in one pallas_call: grid = (batch blocks, layers)."""
  B, Lv, D = vid.shape
  Lt = txt.shape[1]
  NL = sp["ws_qk"].shape[0]
  Fdim = sp["w1"].shape[2]

  cap = _vmem_capacity_bytes()
  Bt = _choose_bt(B, Lv, target_rows=512 if cap >= 100 * 1024 * 1024 else 256)
  grid = (B // Bt, NL)

  kernel = functools.partial(_encoder_kernel, nheads=nheads)

  batched = lambda shp: pl.BlockSpec(shp, lambda g, l: (g, 0, 0))
  layerw = lambda shp: pl.BlockSpec((None,) + shp,
                                    lambda g, l: (l,) + (0,) * len(shp))

  in_specs = [
      batched((Bt, Lv, D)),          # vid_src (read only at layer 0)
      batched((Bt, Lt, D)),          # txt_src
      batched((Bt, 1, Lv)),          # vid additive key-pad mask
      batched((Bt, 1, Lt)),          # txt additive key-pad mask
      batched((Bt, Lv, D)),          # vid_pos
      batched((Bt, Lt, D)),          # txt_pos
      layerw((D, 2 * D)),            # self-attn fused [Wq|Wk]   (bf16)
      layerw((2, D, D)),             # self-attn [Wv, Wo]        (bf16)
      layerw((4, D)),                # self-attn biases          (f32)
      layerw((4, D, D)),             # cross-attn Wq/Wk/Wv/Wo    (bf16)
      layerw((4, D)),                # cross-attn biases         (f32)
      layerw((D, Fdim)),             # linear1 W                 (bf16)
      layerw((1, Fdim)),             # linear1 b                 (f32)
      layerw((Fdim, D)),             # linear2 W                 (bf16)
      layerw((1, D)),                # linear2 b                 (f32)
      layerw((6, D)),                # LayerNorm gammas/betas    (f32)
  ]
  out_specs = (batched((Bt, Lv, D)), batched((Bt, Lv, Lt)))
  out_shape = (jax.ShapeDtypeStruct((B, Lv, D), jnp.float32),
               jax.ShapeDtypeStruct((B, Lv, Lt), jnp.float32))

  vid_out, attn = pl.pallas_call(
      kernel,
      out_shape=out_shape,
      grid=grid,
      in_specs=in_specs,
      out_specs=out_specs,
      scratch_shapes=[pltpu.VMEM((Bt, Lv, D), jnp.float32)],
      compiler_params=pltpu.CompilerParams(
          dimension_semantics=("parallel", "arbitrary"),
          vmem_limit_bytes=_vmem_limit_bytes(cap)),
  )(vid, txt, vmadd, tmadd, vpos, tpos,
    sp["ws_qk"], sp["ws_vo"], sp["bs"], sp["wc"], sp["bc"],
    sp["w1"], sp["b1"], sp["w2"], sp["b2"], sp["ln"])
  return vid_out, attn


def init_layer_params(key, d_model, dim_ff):
  """Deterministic xavier-uniform weights, zero biases, unit LN gains."""
  keys = jax.random.split(key, 4)

  def xav(k, shape, fan_in, fan_out):
    lim = math.sqrt(6.0 / (fan_in + fan_out))
    return jax.random.uniform(k, shape, jnp.float32, -lim, lim)

  return dict(
      ws=xav(keys[0], (4, d_model, d_model), d_model, d_model),
      bs=jnp.zeros((4, d_model), jnp.float32),
      wc=xav(keys[1], (4, d_model, d_model), d_model, d_model),
      bc=jnp.zeros((4, d_model), jnp.float32),
      w1=xav(keys[2], (d_model, dim_ff), d_model, dim_ff),
      b1=jnp.zeros((1, dim_ff), jnp.float32),
      w2=xav(keys[3], (dim_ff, d_model), dim_ff, d_model),
      b2=jnp.zeros((1, d_model), jnp.float32),
      ln=jnp.tile(
          jnp.stack([jnp.ones((d_model,), jnp.float32),
                     jnp.zeros((d_model,), jnp.float32)], axis=0),
          (3, 1)),                      # (6, D): g1,b1,g2,b2,g3,b3
  )


def prepare_encoder_params(params_list, d_model, nheads):
  """Layer-stacked kernel layout: fused QK weight, scale folded into Wq/bq,
  bf16 matmul weights, f32 biases/LayerNorm."""
  dh = d_model // nheads
  scale = 1.0 / math.sqrt(dh)

  def one(p):
    ws, bsv, wc, bcv = p["ws"], p["bs"], p["wc"], p["bc"]
    ws_qk = jnp.concatenate([ws[0] * scale, ws[1]], axis=1)     # (D, 2D)
    ws_vo = jnp.stack([ws[2], ws[3]], axis=0)                   # (2, D, D)
    bs_f = jnp.concatenate([bsv[0:1] * scale, bsv[1:4]], axis=0)
    wc_f = jnp.concatenate([wc[0:1] * scale, wc[1:4]], axis=0)
    bc_f = jnp.concatenate([bcv[0:1] * scale, bcv[1:4]], axis=0)
    return dict(ws_qk=ws_qk.astype(jnp.bfloat16),
                ws_vo=ws_vo.astype(jnp.bfloat16),
                bs=bs_f.astype(jnp.float32),
                wc=wc_f.astype(jnp.bfloat16),
                bc=bc_f.astype(jnp.float32),
                w1=p["w1"].astype(jnp.bfloat16),
                b1=p["b1"].astype(jnp.float32),
                w2=p["w2"].astype(jnp.bfloat16),
                b2=p["b2"].astype(jnp.float32),
                ln=p["ln"].astype(jnp.float32))

  per_layer = [one(p) for p in params_list]
  return {k: jnp.stack([lp[k] for lp in per_layer], axis=0)
          for k in per_layer[0]}


def video_centered_encoder(params_list, vid_src, txt_src, vid_mask, txt_mask,
                           vid_pos, txt_pos, nheads):
  """Matches VideoCenteredEncoder.forward (pre_norm=False, dropout=identity).

  Inputs follow the PyTorch call convention (pre-permute):
    vid_src/vid_pos: (B, Lv, D); txt_src/txt_pos: (B, Lt, D)
    vid_mask: (B, Lv) bool (True = padded); txt_mask: (B, Lt) bool.
  """
  D = vid_src.shape[-1]
  # Additive key-padding masks, shaped (B, 1, L) so BlockSpec last-two dims
  # are full; computed once for all layers/heads.
  vmadd = jnp.where(vid_mask, jnp.float32(-1e30), jnp.float32(0.0))[:, None, :]
  tmadd = jnp.where(txt_mask, jnp.float32(-1e30), jnp.float32(0.0))[:, None, :]
  sp = prepare_encoder_params(params_list, D, nheads)

  vid, attn = encoder_forward(vid_src, txt_src, vmadd, tmadd,
                              vid_pos, txt_pos, sp, nheads)

  # Back to PyTorch's seq-first return layout.
  vid_pos_s = jnp.transpose(vid_pos, (1, 0, 2))
  txt_pos_s = jnp.transpose(txt_pos, (1, 0, 2))
  vid_s = jnp.transpose(vid, (1, 0, 2))
  txt_s = jnp.transpose(txt_src, (1, 0, 2))

  pos_cat = jnp.concatenate([vid_pos_s, txt_pos_s], axis=0)   # (Lv+Lt, B, D)
  mask_cat = jnp.concatenate([vid_mask, txt_mask], axis=1)    # (B, Lv+Lt)
  src_cat = jnp.concatenate([vid_s, txt_s], axis=0)           # (Lv+Lt, B, D)
  return pos_cat, mask_cat, src_cat, attn                     # attn: (B, Lv, Lt)


if __name__ == "__main__":
  B, Lv, Lt, D, H, FF, NLAYERS = 2, 16, 8, 32, 4, 64, 2

  key = jax.random.PRNGKey(0)
  k1, k2, k3, k4, kp = jax.random.split(key, 5)
  vid_src = jax.random.normal(k1, (B, Lv, D), jnp.float32)
  txt_src = jax.random.normal(k2, (B, Lt, D), jnp.float32)
  vid_pos = jax.random.normal(k3, (B, Lv, D), jnp.float32)
  txt_pos = jax.random.normal(k4, (B, Lt, D), jnp.float32)
  # key_padding masks: True = padded; last couple of positions are padding.
  vid_mask = jnp.zeros((B, Lv), jnp.bool_).at[:, Lv - 2:].set(True)
  txt_mask = jnp.zeros((B, Lt), jnp.bool_).at[:, Lt - 1:].set(True)

  layer_keys = jax.random.split(kp, NLAYERS)
  params_list = [init_layer_params(k, D, FF) for k in layer_keys]

  pos_cat, mask_cat, src_cat, attn = video_centered_encoder(
      params_list, vid_src, txt_src, vid_mask, txt_mask, vid_pos, txt_pos, H)
  jax.block_until_ready((pos_cat, mask_cat, src_cat, attn))

  assert pos_cat.shape == (Lv + Lt, B, D)
  assert mask_cat.shape == (B, Lv + Lt)
  assert src_cat.shape == (Lv + Lt, B, D)
  assert attn.shape == (B, Lv, Lt)
  assert bool(jnp.all(jnp.isfinite(src_cat)))
  assert bool(jnp.all(jnp.isfinite(attn)))
  # TODO(synk): dropout layers are stochastic; implemented as identity (eval).
  # TODO(synk): for production shapes with D/Lt not multiples of 128, pad the
  # lane dims (and fold the Lt padding into the key-pad mask) in the wrapper
  # to get lane-dense unmasked stores and full MXU contraction depth.
  print("KERNEL_OK")
</pallas_src>

<mosaic_0001>
module attributes {stable_mosaic.version = 11 : i64} {
  func.func @_encoder_kernel(%arg0: i32, %arg1: i32, %arg2: memref<1x16x32xf32, #tpu.memory_space<vmem>>, %arg3: memref<1x8x32xf32, #tpu.memory_space<vmem>>, %arg4: memref<1x1x16xf32, #tpu.memory_space<vmem>>, %arg5: memref<1x1x8xf32, #tpu.memory_space<vmem>>, %arg6: memref<1x16x32xf32, #tpu.memory_space<vmem>>, %arg7: memref<1x8x32xf32, #tpu.memory_space<vmem>>, %arg8: memref<1x32x64xbf16, #tpu.memory_space<vmem>>, %arg9: memref<1x2x32x32xbf16, #tpu.memory_space<vmem>>, %arg10: memref<1x4x32xf32, #tpu.memory_space<vmem>>, %arg11: memref<1x4x32x32xbf16, #tpu.memory_space<vmem>>, %arg12: memref<1x4x32xf32, #tpu.memory_space<vmem>>, %arg13: memref<1x32x64xbf16, #tpu.memory_space<vmem>>, %arg14: memref<1x1x64xf32, #tpu.memory_space<vmem>>, %arg15: memref<1x64x32xbf16, #tpu.memory_space<vmem>>, %arg16: memref<1x1x32xf32, #tpu.memory_space<vmem>>, %arg17: memref<1x6x32xf32, #tpu.memory_space<vmem>>, %arg18: memref<1x16x32xf32, #tpu.memory_space<vmem>>, %arg19: memref<1x16x8xf32, #tpu.memory_space<vmem>>, %arg20: memref<1x16x32xf32, #tpu.memory_space<vmem>>) attributes {dimension_semantics = [#tpu.dimension_semantics<parallel>, #tpu.dimension_semantics<arbitrary>], iteration_bounds = array<i64: 2, 2>, scalar_prefetch = 0 : i64, scratch_operands = 1 : i64, tpu.core_type = #tpu.core_type<tc>, window_params = [{transform_indices = @transform_0, window_bounds = array<i64: 1, 16, 32>}, {transform_indices = @transform_1, window_bounds = array<i64: 1, 8, 32>}, {transform_indices = @transform_2, window_bounds = array<i64: 1, 1, 16>}, {transform_indices = @transform_3, window_bounds = array<i64: 1, 1, 8>}, {transform_indices = @transform_4, window_bounds = array<i64: 1, 16, 32>}, {transform_indices = @transform_5, window_bounds = array<i64: 1, 8, 32>}, {transform_indices = @transform_6, window_bounds = array<i64: 1, 32, 64>}, {transform_indices = @transform_7, window_bounds = array<i64: 1, 2, 32, 32>}, {transform_indices = @transform_8, window_bounds = array<i64: 1, 4, 32>}, {transform_indices = @transform_9, window_bounds = array<i64: 1, 4, 32, 32>}, {transform_indices = @transform_10, window_bounds = array<i64: 1, 4, 32>}, {transform_indices = @transform_11, window_bounds = array<i64: 1, 32, 64>}, {transform_indices = @transform_12, window_bounds = array<i64: 1, 1, 64>}, {transform_indices = @transform_13, window_bounds = array<i64: 1, 64, 32>}, {transform_indices = @transform_14, window_bounds = array<i64: 1, 1, 32>}, {transform_indices = @transform_15, window_bounds = array<i64: 1, 6, 32>}, {transform_indices = @transform_16, window_bounds = array<i64: 1, 16, 32>}, {transform_indices = @transform_17, window_bounds = array<i64: 1, 16, 8>}]} {
    %c0_i32 = arith.constant 0 : i32
    %0 = arith.cmpi eq, %arg1, %c0_i32 : i32
    %1 = arith.extui %0 : i1 to i32
    %c0_i32_0 = arith.constant 0 : i32
    %2 = arith.cmpi ne, %1, %c0_i32_0 : i32
    scf.if %2 {
      %c0_154 = arith.constant 0 : index
      %c0_155 = arith.constant 0 : index
      %c0_156 = arith.constant 0 : index
      %343 = vector.load %arg2[%c0_154, %c0_155, %c0_156] : memref<1x16x32xf32, #tpu.memory_space<vmem>>, vector<1x16x32xf32>
      %c0_157 = arith.constant 0 : index
      %c0_158 = arith.constant 0 : index
      %c0_159 = arith.constant 0 : index
      %344 = vector.load %arg18[%c0_157, %c0_158, %c0_159] : memref<1x16x32xf32, #tpu.memory_space<vmem>>, vector<1x16x32xf32>
      tpu.vector_store %arg18[%c0_157, %c0_158, %c0_159], %343 {strides = array<i32>} : memref<1x16x32xf32, #tpu.memory_space<vmem>>, vector<1x16x32xf32>,
    } else {
    }
    %c0 = arith.constant 0 : index
    %c0_1 = arith.constant 0 : index
    %c0_2 = arith.constant 0 : index
    %3 = vector.load %arg18[%c0, %c0_1, %c0_2] : memref<1x16x32xf32, #tpu.memory_space<vmem>>, vector<1x16x32xf32>
    %4 = vector.shape_cast %3 : vector<1x16x32xf32> to vector<16x32xf32>
    %c0_3 = arith.constant 0 : index
    %c0_4 = arith.constant 0 : index
    %c0_5 = arith.constant 0 : index
    %5 = vector.load %arg3[%c0_3, %c0_4, %c0_5] : memref<1x8x32xf32, #tpu.memory_space<vmem>>, vector<1x8x32xf32>
    %6 = vector.shape_cast %5 : vector<1x8x32xf32> to vector<8x32xf32>
    %c0_6 = arith.constant 0 : index
    %c0_7 = arith.constant 0 : index
    %c0_8 = arith.constant 0 : index
    %7 = vector.load %arg6[%c0_6, %c0_7, %c0_8] : memref<1x16x32xf32, #tpu.memory_space<vmem>>, vector<1x16x32xf32>
    %8 = vector.shape_cast %7 : vector<1x16x32xf32> to vector<16x32xf32>
    %c0_9 = arith.constant 0 : index
    %c0_10 = arith.constant 0 : index
    %c0_11 = arith.constant 0 : index
    %9 = vector.load %arg7[%c0_9, %c0_10, %c0_11] : memref<1x8x32xf32, #tpu.memory_space<vmem>>, vector<1x8x32xf32>
    %10 = vector.shape_cast %9 : vector<1x8x32xf32> to vector<8x32xf32>
    %c0_12 = arith.constant 0 : index
    %c0_13 = arith.constant 0 : index
    %c0_14 = arith.constant 0 : index
    %11 = vector.load %arg4[%c0_12, %c0_13, %c0_14] : memref<1x1x16xf32, #tpu.memory_space<vmem>>, vector<1x1x16xf32>
    %c0_15 = arith.constant 0 : index
    %c0_16 = arith.constant 0 : index
    %c0_17 = arith.constant 0 : index
    %12 = vector.load %arg5[%c0_15, %c0_16, %c0_17] : memref<1x1x8xf32, #tpu.memory_space<vmem>>, vector<1x1x8xf32>
    %c0_18 = arith.constant 0 : index
    %c0_19 = arith.constant 0 : index
    %c0_20 = arith.constant 0 : index
    %13 = vector.load %arg17[%c0_18, %c0_19, %c0_20] : memref<1x6x32xf32, #tpu.memory_space<vmem>>, vector<1x6x32xf32>
    %14 = vector.shape_cast %13 : vector<1x6x32xf32> to vector<6x32xf32>
    %c0_21 = arith.constant 0 : index
    %c0_22 = arith.constant 0 : index
    %c0_23 = arith.constant 0 : index
    %15 = vector.load %arg10[%c0_21, %c0_22, %c0_23] : memref<1x4x32xf32, #tpu.memory_space<vmem>>, vector<1x4x32xf32>
    %16 = vector.shape_cast %15 : vector<1x4x32xf32> to vector<4x32xf32>
    %c0_24 = arith.constant 0 : index
    %c0_25 = arith.constant 0 : index
    %c0_26 = arith.constant 0 : index
    %17 = vector.load %arg12[%c0_24, %c0_25, %c0_26] : memref<1x4x32xf32, #tpu.memory_space<vmem>>, vector<1x4x32xf32>
    %18 = vector.shape_cast %17 : vector<1x4x32xf32> to vector<4x32xf32>
    %19 = arith.addf %4, %8 : vector<16x32xf32>
    %20 = arith.truncf %19 : vector<16x32xf32> to vector<16x32xbf16>
    %c0_27 = arith.constant 0 : index
    %c0_28 = arith.constant 0 : index
    %c0_29 = arith.constant 0 : index
    %21 = vector.load %arg8[%c0_27, %c0_28, %c0_29] : memref<1x32x64xbf16, #tpu.memory_space<vmem>>, vector<1x32x64xbf16>
    %22 = vector.shape_cast %21 : vector<1x32x64xbf16> to vector<32x64xbf16>
    %cst = arith.constant dense<0.000000e+00> : vector<16x64xf32>
    %23 = tpu.matmul %20, %22, %cst {dimension_numbers = #tpu.dot_dimension_numbers<[1], [0], [0], [1], [0, 0, 1, 1], [], []>} : vector<16x32xbf16>, vector<32x64xbf16>, vector<16x64xf32> -> vector<16x64xf32>
    %24 = vector.extract_strided_slice %23 {offsets = [0, 0], sizes = [16, 32], strides = [1, 1]} : vector<16x64xf32> to vector<16x32xf32>
    %25 = vector.extract_strided_slice %16 {offsets = [0, 0], sizes = [1, 32], strides = [1, 1]} : vector<4x32xf32> to vector<1x32xf32>
    %26 = vector.broadcast %25 : vector<1x32xf32> to vector<16x32xf32>
    %27 = arith.addf %24, %26 : vector<16x32xf32>
    %28 = vector.extract_strided_slice %23 {offsets = [0, 32], sizes = [16, 32], strides = [1, 1]} : vector<16x64xf32> to vector<16x32xf32>
    %29 = vector.extract_strided_slice %16 {offsets = [1, 0], sizes = [1, 32], strides = [1, 1]} : vector<4x32xf32> to vector<1x32xf32>
    %30 = vector.broadcast %29 : vector<1x32xf32> to vector<16x32xf32>
    %31 = arith.addf %28, %30 : vector<16x32xf32>
    %32 = arith.truncf %4 : vector<16x32xf32> to vector<16x32xbf16>
    %c0_30 = arith.constant 0 : index
    %c0_31 = arith.constant 0 : index
    %c0_32 = arith.constant 0 : index
    %c0_33 = arith.constant 0 : index
    %33 = vector.load %arg9[%c0_30, %c0_31, %c0_32, %c0_33] : memref<1x2x32x32xbf16, #tpu.memory_space<vmem>>, vector<1x1x32x32xbf16>
    %34 = vector.shape_cast %33 : vector<1x1x32x32xbf16> to vector<32x32xbf16>
    %cst_34 = arith.constant dense<0.000000e+00> : vector<16x32xf32>
    %35 = tpu.matmul %32, %34, %cst_34 {dimension_numbers = #tpu.dot_dimension_numbers<[1], [0], [0], [1], [0, 0, 1, 1], [], []>} : vector<16x32xbf16>, vector<32x32xbf16>, vector<16x32xf32> -> vector<16x32xf32>
    %36 = vector.extract_strided_slice %16 {offsets = [2, 0], sizes = [1, 32], strides = [1, 1]} : vector<4x32xf32> to vector<1x32xf32>
    %37 = vector.broadcast %36 : vector<1x32xf32> to vector<16x32xf32>
    %38 = arith.addf %35, %37 : vector<16x32xf32>
    %39 = arith.truncf %27 : vector<16x32xf32> to vector<16x32xbf16>
    %40 = vector.shape_cast %39 : vector<16x32xbf16> to vector<1x16x32xbf16>
    %41 = arith.truncf %31 : vector<16x32xf32> to vector<16x32xbf16>
    %42 = vector.shape_cast %41 : vector<16x32xbf16> to vector<1x16x32xbf16>
    %43 = arith.truncf %38 : vector<16x32xf32> to vector<16x32xbf16>
    %44 = vector.shape_cast %43 : vector<16x32xbf16> to vector<1x16x32xbf16>
    %45 = vector.shape_cast %11 : vector<1x1x16xf32> to vector<1x1x16xf32>
    %46 = vector.broadcast %45 : vector<1x1x16xf32> to vector<1x16x16xf32>
    %47 = vector.extract_strided_slice %40 {offsets = [0, 0, 0], sizes = [1, 16, 8], strides = [1, 1, 1]} : vector<1x16x32xbf16> to vector<1x16x8xbf16>
    %48 = vector.extract_strided_slice %42 {offsets = [0, 0, 0], sizes = [1, 16, 8], strides = [1, 1, 1]} : vector<1x16x32xbf16> to vector<1x16x8xbf16>
    "tpu.trace_start"() <{level = 10 : i32, message = "bqd,bkd->bqk"}> : () -> ()
    %cst_35 = arith.constant dense<0.000000e+00> : vector<1x16x16xf32>
    %49 = tpu.matmul %47, %48, %cst_35 {dimension_numbers = #tpu.dot_dimension_numbers<[2], [2], [1], [1], [0, 0, 0, 1, 1, 1], [0], [0]>} : vector<1x16x8xbf16>, vector<1x16x8xbf16>, vector<1x16x16xf32> -> vector<1x16x16xf32>
    "tpu.trace_stop"() : () -> ()
    %50 = arith.addf %49, %46 : vector<1x16x16xf32>
    %cst_36 = arith.constant dense<0xFF800000> : vector<1x16xf32>
    %51 = vector.multi_reduction <maximumf>, %50, %cst_36 [2] : vector<1x16x16xf32> to vector<1x16xf32>
    %52 = vector.shape_cast %51 : vector<1x16xf32> to vector<1x16x1xf32>
    %53 = vector.broadcast %52 : vector<1x16x1xf32> to vector<1x16x16xf32>
    %54 = arith.subf %50, %53 : vector<1x16x16xf32>
    %55 = math.exp %54 : vector<1x16x16xf32>
    %cst_37 = arith.constant dense<0.000000e+00> : vector<1x16xf32>
    %56 = vector.multi_reduction <add>, %55, %cst_37 [2] : vector<1x16x16xf32> to vector<1x16xf32>
    %57 = vector.shape_cast %56 : vector<1x16xf32> to vector<1x16x1xf32>
    %58 = tpu.reciprocal %57 {approx = true} : vector<1x16x1xf32> -> vector<1x16x1xf32>
    %59 = vector.broadcast %58 : vector<1x16x1xf32> to vector<1x16x16xf32>
    %60 = arith.mulf %55, %59 : vector<1x16x16xf32>
    %61 = arith.truncf %60 : vector<1x16x16xf32> to vector<1x16x16xbf16>
    %62 = vector.extract_strided_slice %44 {offsets = [0, 0, 0], sizes = [1, 16, 8], strides = [1, 1, 1]} : vector<1x16x32xbf16> to vector<1x16x8xbf16>
    "tpu.trace_start"() <{level = 10 : i32, message = "bqk,bkd->bqd"}> : () -> ()
    %cst_38 = arith.constant dense<0.000000e+00> : vector<1x16x8xf32>
    %63 = tpu.matmul %61, %62, %cst_38 {dimension_numbers = #tpu.dot_dimension_numbers<[2], [1], [1], [2], [0, 0, 0, 1, 1, 2], [0], [0]>} : vector<1x16x16xbf16>, vector<1x16x8xbf16>, vector<1x16x8xf32> -> vector<1x16x8xf32>
    "tpu.trace_stop"() : () -> ()
    %c0_39 = arith.constant 0 : index
    %c0_40 = arith.constant 0 : index
    %c0_41 = arith.constant 0 : index
    %64 = vector.load %arg20[%c0_39, %c0_40, %c0_41] : memref<1x16x32xf32, #tpu.memory_space<vmem>>, vector<1x16x8xf32>
    tpu.vector_store %arg20[%c0_39, %c0_40, %c0_41], %63 {strides = array<i32>} : memref<1x16x32xf32, #tpu.memory_space<vmem>>, vector<1x16x8xf32>,
    %65 = vector.extract_strided_slice %40 {offsets = [0, 0, 8], sizes = [1, 16, 8], strides = [1, 1, 1]} : vector<1x16x32xbf16> to vector<1x16x8xbf16>
    %66 = vector.extract_strided_slice %42 {offsets = [0, 0, 8], sizes = [1, 16, 8], strides = [1, 1, 1]} : vector<1x16x32xbf16> to vector<1x16x8xbf16>
    "tpu.trace_start"() <{level = 10 : i32, message = "bqd,bkd->bqk"}> : () -> ()
    %cst_42 = arith.constant dense<0.000000e+00> : vector<1x16x16xf32>
    %67 = tpu.matmul %65, %66, %cst_42 {dimension_numbers = #tpu.dot_dimension_numbers<[2], [2], [1], [1], [0, 0, 0, 1, 1, 1], [0], [0]>} : vector<1x16x8xbf16>, vector<1x16x8xbf16>, vector<1x16x16xf32> -> vector<1x16x16xf32>
    "tpu.trace_stop"() : () -> ()
    %68 = arith.addf %67, %46 : vector<1x16x16xf32>
    %cst_43 = arith.constant dense<0xFF800000> : vector<1x16xf32>
    %69 = vector.multi_reduction <maximumf>, %68, %cst_43 [2] : vector<1x16x16xf32> to vector<1x16xf32>
    %70 = vector.shape_cast %69 : vector<1x16xf32> to vector<1x16x1xf32>
    %71 = vector.broadcast %70 : vector<1x16x1xf32> to vector<1x16x16xf32>
    %72 = arith.subf %68, %71 : vector<1x16x16xf32>
    %73 = math.exp %72 : vector<1x16x16xf32>
    %cst_44 = arith.constant dense<0.000000e+00> : vector<1x16xf32>
    %74 = vector.multi_reduction <add>, %73, %cst_44 [2] : vector<1x16x16xf32> to vector<1x16xf32>
    %75 = vector.shape_cast %74 : vector<1x16xf32> to vector<1x16x1xf32>
    %76 = tpu.reciprocal %75 {approx = true} : vector<1x16x1xf32> -> vector<1x16x1xf32>
    %77 = vector.broadcast %76 : vector<1x16x1xf32> to vector<1x16x16xf32>
    %78 = arith.mulf %73, %77 : vector<1x16x16xf32>
    %79 = arith.truncf %78 : vector<1x16x16xf32> to vector<1x16x16xbf16>
    %80 = vector.extract_strided_slice %44 {offsets = [0, 0, 8], sizes = [1, 16, 8], strides = [1, 1, 1]} : vector<1x16x32xbf16> to vector<1x16x8xbf16>
    "tpu.trace_start"() <{level = 10 : i32, message = "bqk,bkd->bqd"}> : () -> ()
    %cst_45 = arith.constant dense<0.000000e+00> : vector<1x16x8xf32>
    %81 = tpu.matmul %79, %80, %cst_45 {dimension_numbers = #tpu.dot_dimension_numbers<[2], [1], [1], [2], [0, 0, 0, 1, 1, 2], [0], [0]>} : vector<1x16x16xbf16>, vector<1x16x8xbf16>, vector<1x16x8xf32> -> vector<1x16x8xf32>
    "tpu.trace_stop"() : () -> ()
    %c0_46 = arith.constant 0 : index
    %c0_47 = arith.constant 0 : index
    %c8 = arith.constant 8 : index
    %82 = vector.load %arg20[%c0_46, %c0_47, %c8] : memref<1x16x32xf32, #tpu.memory_space<vmem>>, vector<1x16x8xf32>
    tpu.vector_store %arg20[%c0_46, %c0_47, %c8], %81 {strides = array<i32>} : memref<1x16x32xf32, #tpu.memory_space<vmem>>, vector<1x16x8xf32>,
    %83 = vector.extract_strided_slice %40 {offsets = [0, 0, 16], sizes = [1, 16, 8], strides = [1, 1, 1]} : vector<1x16x32xbf16> to vector<1x16x8xbf16>
    %84 = vector.extract_strided_slice %42 {offsets = [0, 0, 16], sizes = [1, 16, 8], strides = [1, 1, 1]} : vector<1x16x32xbf16> to vector<1x16x8xbf16>
    "tpu.trace_start"() <{level = 10 : i32, message = "bqd,bkd->bqk"}> : () -> ()
    %cst_48 = arith.constant dense<0.000000e+00> : vector<1x16x16xf32>
    %85 = tpu.matmul %83, %84, %cst_48 {dimension_numbers = #tpu.dot_dimension_numbers<[2], [2], [1], [1], [0, 0, 0, 1, 1, 1], [0], [0]>} : vector<1x16x8xbf16>, vector<1x16x8xbf16>, vector<1x16x16xf32> -> vector<1x16x16xf32>
    "tpu.trace_stop"() : () -> ()
    %86 = arith.addf %85, %46 : vector<1x16x16xf32>
    %cst_49 = arith.constant dense<0xFF800000> : vector<1x16xf32>
    %87 = vector.multi_reduction <maximumf>, %86, %cst_49 [2] : vector<1x16x16xf32> to vector<1x16xf32>
    %88 = vector.shape_cast %87 : vector<1x16xf32> to vector<1x16x1xf32>
    %89 = vector.broadcast %88 : vector<1x16x1xf32> to vector<1x16x16xf32>
    %90 = arith.subf %86, %89 : vector<1x16x16xf32>
    %91 = math.exp %90 : vector<1x16x16xf32>
    %cst_50 = arith.constant dense<0.000000e+00> : vector<1x16xf32>
    %92 = vector.multi_reduction <add>, %91, %cst_50 [2] : vector<1x16x16xf32> to vector<1x16xf32>
    %93 = vector.shape_cast %92 : vector<1x16xf32> to vector<1x16x1xf32>
    %94 = tpu.reciprocal %93 {approx = true} : vector<1x16x1xf32> -> vector<1x16x1xf32>
    %95 = vector.broadcast %94 : vector<1x16x1xf32> to vector<1x16x16xf32>
    %96 = arith.mulf %91, %95 : vector<1x16x16xf32>
    %97 = arith.truncf %96 : vector<1x16x16xf32> to vector<1x16x16xbf16>
    %98 = vector.extract_strided_slice %44 {offsets = [0, 0, 16], sizes = [1, 16, 8], strides = [1, 1, 1]} : vector<1x16x32xbf16> to vector<1x16x8xbf16>
    "tpu.trace_start"() <{level = 10 : i32, message = "bqk,bkd->bqd"}> : () -> ()
    %cst_51 = arith.constant dense<0.000000e+00> : vector<1x16x8xf32>
    %99 = tpu.matmul %97, %98, %cst_51 {dimension_numbers = #tpu.dot_dimension_numbers<[2], [1], [1], [2], [0, 0, 0, 1, 1, 2], [0], [0]>} : vector<1x16x16xbf16>, vector<1x16x8xbf16>, vector<1x16x8xf32> -> vector<1x16x8xf32>
    "tpu.trace_stop"() : () -> ()
    %c0_52 = arith.constant 0 : index
    %c0_53 = arith.constant 0 : index
    %c16 = arith.constant 16 : index
    %100 = vector.load %arg20[%c0_52, %c0_53, %c16] : memref<1x16x32xf32, #tpu.memory_space<vmem>>, vector<1x16x8xf32>
    tpu.vector_store %arg20[%c0_52, %c0_53, %c16], %99 {strides = array<i32>} : memref<1x16x32xf32, #tpu.memory_space<vmem>>, vector<1x16x8xf32>,
    %101 = vector.extract_strided_slice %40 {offsets = [0, 0, 24], sizes = [1, 16, 8], strides = [1, 1, 1]} : vector<1x16x32xbf16> to vector<1x16x8xbf16>
    %102 = vector.extract_strided_slice %42 {offsets = [0, 0, 24], sizes = [1, 16, 8], strides = [1, 1, 1]} : vector<1x16x32xbf16> to vector<1x16x8xbf16>
    "tpu.trace_start"() <{level = 10 : i32, message = "bqd,bkd->bqk"}> : () -> ()
    %cst_54 = arith.constant dense<0.000000e+00> : vector<1x16x16xf32>
    %103 = tpu.matmul %101, %102, %cst_54 {dimension_numbers = #tpu.dot_dimension_numbers<[2], [2], [1], [1], [0, 0, 0, 1, 1, 1], [0], [0]>} : vector<1x16x8xbf16>, vector<1x16x8xbf16>, vector<1x16x16xf32> -> vector<1x16x16xf32>
    "tpu.trace_stop"() : () -> ()
    %104 = arith.addf %103, %46 : vector<1x16x16xf32>
    %cst_55 = arith.constant dense<0xFF800000> : vector<1x16xf32>
    %105 = vector.multi_reduction <maximumf>, %104, %cst_55 [2] : vector<1x16x16xf32> to vector<1x16xf32>
    %106 = vector.shape_cast %105 : vector<1x16xf32> to vector<1x16x1xf32>
    %107 = vector.broadcast %106 : vector<1x16x1xf32> to vector<1x16x16xf32>
    %108 = arith.subf %104, %107 : vector<1x16x16xf32>
    %109 = math.exp %108 : vector<1x16x16xf32>
    %cst_56 = arith.constant dense<0.000000e+00> : vector<1x16xf32>
    %110 = vector.multi_reduction <add>, %109, %cst_56 [2] : vector<1x16x16xf32> to vector<1x16xf32>
    %111 = vector.shape_cast %110 : vector<1x16xf32> to vector<1x16x1xf32>
    %112 = tpu.reciprocal %111 {approx = true} : vector<1x16x1xf32> -> vector<1x16x1xf32>
    %113 = vector.broadcast %112 : vector<1x16x1xf32> to vector<1x16x16xf32>
    %114 = arith.mulf %109, %113 : vector<1x16x16xf32>
    %115 = arith.truncf %114 : vector<1x16x16xf32> to vector<1x16x16xbf16>
    %116 = vector.extract_strided_slice %44 {offsets = [0, 0, 24], sizes = [1, 16, 8], strides = [1, 1, 1]} : vector<1x16x32xbf16> to vector<1x16x8xbf16>
    "tpu.trace_start"() <{level = 10 : i32, message = "bqk,bkd->bqd"}> : () -> ()
    %cst_57 = arith.constant dense<0.000000e+00> : vector<1x16x8xf32>
    %117 = tpu.matmul %115, %116, %cst_57 {dimension_numbers = #tpu.dot_dimension_numbers<[2], [1], [1], [2], [0, 0, 0, 1, 1, 2], [0], [0]>} : vector<1x16x16xbf16>, vector<1x16x8xbf16>, vector<1x16x8xf32> -> vector<1x16x8xf32>
    "tpu.trace_stop"() : () -> ()
    %c0_58 = arith.constant 0 : index
    %c0_59 = arith.constant 0 : index
    %c24 = arith.constant 24 : index
    %118 = vector.load %arg20[%c0_58, %c0_59, %c24] : memref<1x16x32xf32, #tpu.memory_space<vmem>>, vector<1x16x8xf32>
    tpu.vector_store %arg20[%c0_58, %c0_59, %c24], %117 {strides = array<i32>} : memref<1x16x32xf32, #tpu.memory_space<vmem>>, vector<1x16x8xf32>,
    %c0_60 = arith.constant 0 : index
    %c0_61 = arith.constant 0 : index
    %c0_62 = arith.constant 0 : index
    %119 = vector.load %arg20[%c0_60, %c0_61, %c0_62] : memref<1x16x32xf32, #tpu.memory_space<vmem>>, vector<1x16x32xf32>
    %120 = vector.shape_cast %119 : vector<1x16x32xf32> to vector<16x32xf32>
    %121 = arith.truncf %120 : vector<16x32xf32> to vector<16x32xbf16>
    %c0_63 = arith.constant 0 : index
    %c1 = arith.constant 1 : index
    %c0_64 = arith.constant 0 : index
    %c0_65 = arith.constant 0 : index
    %122 = vector.load %arg9[%c0_63, %c1, %c0_64, %c0_65] : memref<1x2x32x32xbf16, #tpu.memory_space<vmem>>, vector<1x1x32x32xbf16>
    %123 = vector.shape_cast %122 : vector<1x1x32x32xbf16> to vector<32x32xbf16>
    %cst_66 = arith.constant dense<0.000000e+00> : vector<16x32xf32>
    %124 = tpu.matmul %121, %123, %cst_66 {dimension_numbers = #tpu.dot_dimension_numbers<[1], [0], [0], [1], [0, 0, 1, 1], [], []>} : vector<16x32xbf16>, vector<32x32xbf16>, vector<16x32xf32> -> vector<16x32xf32>
    %125 = vector.extract_strided_slice %16 {offsets = [3, 0], sizes = [1, 32], strides = [1, 1]} : vector<4x32xf32> to vector<1x32xf32>
    %126 = vector.broadcast %125 : vector<1x32xf32> to vector<16x32xf32>
    %127 = arith.addf %124, %126 : vector<16x32xf32>
    %128 = arith.addf %4, %127 : vector<16x32xf32>
    %129 = vector.extract_strided_slice %14 {offsets = [0, 0], sizes = [1, 32], strides = [1, 1]} : vector<6x32xf32> to vector<1x32xf32>
    %130 = vector.extract_strided_slice %14 {offsets = [1, 0], sizes = [1, 32], strides = [1, 1]} : vector<6x32xf32> to vector<1x32xf32>
    %cst_67 = arith.constant dense<0.000000e+00> : vector<16xf32>
    %131 = vector.multi_reduction <add>, %128, %cst_67 [1] : vector<16x32xf32> to vector<16xf32>
    %132 = vector.shape_cast %131 : vector<16xf32> to vector<16x1xf32>
    %cst_68 = arith.constant 3.200000e+01 : f32
    %133 = vector.broadcast %cst_68 : f32 to vector<16x1xf32>
    %134 = arith.divf %132, %133 : vector<16x1xf32>
    %135 = vector.broadcast %134 : vector<16x1xf32> to vector<16x32xf32>
    %136 = arith.subf %128, %135 : vector<16x32xf32>
    %137 = arith.mulf %136, %136 : vector<16x32xf32>
    %cst_69 = arith.constant dense<0.000000e+00> : vector<16xf32>
    %138 = vector.multi_reduction <add>, %137, %cst_69 [1] : vector<16x32xf32> to vector<16xf32>
    %139 = vector.shape_cast %138 : vector<16xf32> to vector<16x1xf32>
    %cst_70 = arith.constant 3.200000e+01 : f32
    %140 = vector.broadcast %cst_70 : f32 to vector<16x1xf32>
    %141 = arith.divf %139, %140 : vector<16x1xf32>
    %142 = vector.broadcast %134 : vector<16x1xf32> to vector<16x32xf32>
    %143 = arith.subf %128, %142 : vector<16x32xf32>
    %cst_71 = arith.constant 9.99999974E-6 : f32
    %144 = vector.broadcast %cst_71 : f32 to vector<16x1xf32>
    %145 = arith.addf %141, %144 : vector<16x1xf32>
    %146 = math.rsqrt %145 : vector<16x1xf32>
    %147 = vector.broadcast %146 : vector<16x1xf32> to vector<16x32xf32>
    %148 = arith.mulf %143, %147 : vector<16x32xf32>
    %149 = vector.broadcast %129 : vector<1x32xf32> to vector<16x32xf32>
    %150 = arith.mulf %148, %149 : vector<16x32xf32>
    %151 = vector.broadcast %130 : vector<1x32xf32> to vector<16x32xf32>
    %152 = arith.addf %150, %151 : vector<16x32xf32>
    %153 = arith.addf %152, %8 : vector<16x32xf32>
    %154 = arith.truncf %153 : vector<16x32xf32> to vector<16x32xbf16>
    %c0_72 = arith.constant 0 : index
    %c0_73 = arith.constant 0 : index
    %c0_74 = arith.constant 0 : index
    %c0_75 = arith.constant 0 : index
    %155 = vector.load %arg11[%c0_72, %c0_73, %c0_74, %c0_75] : memref<1x4x32x32xbf16, #tpu.memory_space<vmem>>, vector<1x1x32x32xbf16>
    %156 = vector.shape_cast %155 : vector<1x1x32x32xbf16> to vector<32x32xbf16>
    %cst_76 = arith.constant dense<0.000000e+00> : vector<16x32xf32>
    %157 = tpu.matmul %154, %156, %cst_76 {dimension_numbers = #tpu.dot_dimension_numbers<[1], [0], [0], [1], [0, 0, 1, 1], [], []>} : vector<16x32xbf16>, vector<32x32xbf16>, vector<16x32xf32> -> vector<16x32xf32>
    %158 = vector.extract_strided_slice %18 {offsets = [0, 0], sizes = [1, 32], strides = [1, 1]} : vector<4x32xf32> to vector<1x32xf32>
    %159 = vector.broadcast %158 : vector<1x32xf32> to vector<16x32xf32>
    %160 = arith.addf %157, %159 : vector<16x32xf32>
    %161 = arith.addf %6, %10 : vector<8x32xf32>
    %162 = arith.truncf %161 : vector<8x32xf32> to vector<8x32xbf16>
    %c0_77 = arith.constant 0 : index
    %c1_78 = arith.constant 1 : index
    %c0_79 = arith.constant 0 : index
    %c0_80 = arith.constant 0 : index
    %163 = vector.load %arg11[%c0_77, %c1_78, %c0_79, %c0_80] : memref<1x4x32x32xbf16, #tpu.memory_space<vmem>>, vector<1x1x32x32xbf16>
    %164 = vector.shape_cast %163 : vector<1x1x32x32xbf16> to vector<32x32xbf16>
    %cst_81 = arith.constant dense<0.000000e+00> : vector<8x32xf32>
    %165 = tpu.matmul %162, %164, %cst_81 {dimension_numbers = #tpu.dot_dimension_numbers<[1], [0], [0], [1], [0, 0, 1, 1], [], []>} : vector<8x32xbf16>, vector<32x32xbf16>, vector<8x32xf32> -> vector<8x32xf32>
    %166 = vector.extract_strided_slice %18 {offsets = [1, 0], sizes = [1, 32], strides = [1, 1]} : vector<4x32xf32> to vector<1x32xf32>
    %167 = vector.broadcast %166 : vector<1x32xf32> to vector<8x32xf32>
    %168 = arith.addf %165, %167 : vector<8x32xf32>
    %169 = arith.truncf %6 : vector<8x32xf32> to vector<8x32xbf16>
    %c0_82 = arith.constant 0 : index
    %c2 = arith.constant 2 : index
    %c0_83 = arith.constant 0 : index
    %c0_84 = arith.constant 0 : index
    %170 = vector.load %arg11[%c0_82, %c2, %c0_83, %c0_84] : memref<1x4x32x32xbf16, #tpu.memory_space<vmem>>, vector<1x1x32x32xbf16>
    %171 = vector.shape_cast %170 : vector<1x1x32x32xbf16> to vector<32x32xbf16>
    %cst_85 = arith.constant dense<0.000000e+00> : vector<8x32xf32>
    %172 = tpu.matmul %169, %171, %cst_85 {dimension_numbers = #tpu.dot_dimension_numbers<[1], [0], [0], [1], [0, 0, 1, 1], [], []>} : vector<8x32xbf16>, vector<32x32xbf16>, vector<8x32xf32> -> vector<8x32xf32>
    %173 = vector.extract_strided_slice %18 {offsets = [2, 0], sizes = [1, 32], strides = [1, 1]} : vector<4x32xf32> to vector<1x32xf32>
    %174 = vector.broadcast %173 : vector<1x32xf32> to vector<8x32xf32>
    %175 = arith.addf %172, %174 : vector<8x32xf32>
    %176 = arith.truncf %160 : vector<16x32xf32> to vector<16x32xbf16>
    %177 = vector.shape_cast %176 : vector<16x32xbf16> to vector<1x16x32xbf16>
    %178 = arith.truncf %168 : vector<8x32xf32> to vector<8x32xbf16>
    %179 = vector.shape_cast %178 : vector<8x32xbf16> to vector<1x8x32xbf16>
    %180 = arith.truncf %175 : vector<8x32xf32> to vector<8x32xbf16>
    %181 = vector.shape_cast %180 : vector<8x32xbf16> to vector<1x8x32xbf16>
    %182 = vector.shape_cast %12 : vector<1x1x8xf32> to vector<1x1x8xf32>
    %183 = vector.broadcast %182 : vector<1x1x8xf32> to vector<1x16x8xf32>
    %cst_86 = arith.constant 0.000000e+00 : f32
    %184 = vector.broadcast %cst_86 : f32 to vector<1x16x8xf32>
    %185 = vector.extract_strided_slice %177 {offsets = [0, 0, 0], sizes = [1, 16, 8], strides = [1, 1, 1]} : vector<1x16x32xbf16> to vector<1x16x8xbf16>
    %186 = vector.extract_strided_slice %179 {offsets = [0, 0, 0], sizes = [1, 8, 8], strides = [1, 1, 1]} : vector<1x8x32xbf16> to vector<1x8x8xbf16>
    "tpu.trace_start"() <{level = 10 : i32, message = "bqd,bkd->bqk"}> : () -> ()
    %cst_87 = arith.constant dense<0.000000e+00> : vector<1x16x8xf32>
    %187 = tpu.matmul %185, %186, %cst_87 {dimension_numbers = #tpu.dot_dimension_numbers<[2], [2], [1], [1], [0, 0, 0, 1, 1, 1], [0], [0]>} : vector<1x16x8xbf16>, vector<1x8x8xbf16>, vector<1x16x8xf32> -> vector<1x16x8xf32>
    "tpu.trace_stop"() : () -> ()
    %188 = arith.addf %187, %183 : vector<1x16x8xf32>
    %cst_88 = arith.constant dense<0xFF800000> : vector<1x16xf32>
    %189 = vector.multi_reduction <maximumf>, %188, %cst_88 [2] : vector<1x16x8xf32> to vector<1x16xf32>
    %190 = vector.shape_cast %189 : vector<1x16xf32> to vector<1x16x1xf32>
    %191 = vector.broadcast %190 : vector<1x16x1xf32> to vector<1x16x8xf32>
    %192 = arith.subf %188, %191 : vector<1x16x8xf32>
    %193 = math.exp %192 : vector<1x16x8xf32>
    %cst_89 = arith.constant dense<0.000000e+00> : vector<1x16xf32>
    %194 = vector.multi_reduction <add>, %193, %cst_89 [2] : vector<1x16x8xf32> to vector<1x16xf32>
    %195 = vector.shape_cast %194 : vector<1x16xf32> to vector<1x16x1xf32>
    %196 = tpu.reciprocal %195 {approx = true} : vector<1x16x1xf32> -> vector<1x16x1xf32>
    %197 = vector.broadcast %196 : vector<1x16x1xf32> to vector<1x16x8xf32>
    %198 = arith.mulf %193, %197 : vector<1x16x8xf32>
    %199 = arith.addf %184, %198 : vector<1x16x8xf32>
    %200 = arith.truncf %198 : vector<1x16x8xf32> to vector<1x16x8xbf16>
    %201 = vector.extract_strided_slice %181 {offsets = [0, 0, 0], sizes = [1, 8, 8], strides = [1, 1, 1]} : vector<1x8x32xbf16> to vector<1x8x8xbf16>
    "tpu.trace_start"() <{level = 10 : i32, message = "bqk,bkd->bqd"}> : () -> ()
    %cst_90 = arith.constant dense<0.000000e+00> : vector<1x16x8xf32>
    %202 = tpu.matmul %200, %201, %cst_90 {dimension_numbers = #tpu.dot_dimension_numbers<[2], [1], [1], [2], [0, 0, 0, 1, 1, 2], [0], [0]>} : vector<1x16x8xbf16>, vector<1x8x8xbf16>, vector<1x16x8xf32> -> vector<1x16x8xf32>
    "tpu.trace_stop"() : () -> ()
    %c0_91 = arith.constant 0 : index
    %c0_92 = arith.constant 0 : index
    %c0_93 = arith.constant 0 : index
    %203 = vector.load %arg20[%c0_91, %c0_92, %c0_93] : memref<1x16x32xf32, #tpu.memory_space<vmem>>, vector<1x16x8xf32>
    tpu.vector_store %arg20[%c0_91, %c0_92, %c0_93], %202 {strides = array<i32>} : memref<1x16x32xf32, #tpu.memory_space<vmem>>, vector<1x16x8xf32>,
    %204 = vector.extract_strided_slice %177 {offsets = [0, 0, 8], sizes = [1, 16, 8], strides = [1, 1, 1]} : vector<1x16x32xbf16> to vector<1x16x8xbf16>
    %205 = vector.extract_strided_slice %179 {offsets = [0, 0, 8], sizes = [1, 8, 8], strides = [1, 1, 1]} : vector<1x8x32xbf16> to vector<1x8x8xbf16>
    "tpu.trace_start"() <{level = 10 : i32, message = "bqd,bkd->bqk"}> : () -> ()
    %cst_94 = arith.constant dense<0.000000e+00> : vector<1x16x8xf32>
    %206 = tpu.matmul %204, %205, %cst_94 {dimension_numbers = #tpu.dot_dimension_numbers<[2], [2], [1], [1], [0, 0, 0, 1, 1, 1], [0], [0]>} : vector<1x16x8xbf16>, vector<1x8x8xbf16>, vector<1x16x8xf32> -> vector<1x16x8xf32>
    "tpu.trace_stop"() : () -> ()
    %207 = arith.addf %206, %183 : vector<1x16x8xf32>
    %cst_95 = arith.constant dense<0xFF800000> : vector<1x16xf32>
    %208 = vector.multi_reduction <maximumf>, %207, %cst_95 [2] : vector<1x16x8xf32> to vector<1x16xf32>
    %209 = vector.shape_cast %208 : vector<1x16xf32> to vector<1x16x1xf32>
    %210 = vector.broadcast %209 : vector<1x16x1xf32> to vector<1x16x8xf32>
    %211 = arith.subf %207, %210 : vector<1x16x8xf32>
    %212 = math.exp %211 : vector<1x16x8xf32>
    %cst_96 = arith.constant dense<0.000000e+00> : vector<1x16xf32>
    %213 = vector.multi_reduction <add>, %212, %cst_96 [2] : vector<1x16x8xf32> to vector<1x16xf32>
    %214 = vector.shape_cast %213 : vector<1x16xf32> to vector<1x16x1xf32>
    %215 = tpu.reciprocal %214 {approx = true} : vector<1x16x1xf32> -> vector<1x16x1xf32>
    %216 = vector.broadcast %215 : vector<1x16x1xf32> to vector<1x16x8xf32>
    %217 = arith.mulf %212, %216 : vector<1x16x8xf32>
    %218 = arith.addf %199, %217 : vector<1x16x8xf32>
    %219 = arith.truncf %217 : vector<1x16x8xf32> to vector<1x16x8xbf16>
    %220 = vector.extract_strided_slice %181 {offsets = [0, 0, 8], sizes = [1, 8, 8], strides = [1, 1, 1]} : vector<1x8x32xbf16> to vector<1x8x8xbf16>
    "tpu.trace_start"() <{level = 10 : i32, message = "bqk,bkd->bqd"}> : () -> ()
    %cst_97 = arith.constant dense<0.000000e+00> : vector<1x16x8xf32>
    %221 = tpu.matmul %219, %220, %cst_97 {dimension_numbers = #tpu.dot_dimension_numbers<[2], [1], [1], [2], [0, 0, 0, 1, 1, 2], [0], [0]>} : vector<1x16x8xbf16>, vector<1x8x8xbf16>, vector<1x16x8xf32> -> vector<1x16x8xf32>
    "tpu.trace_stop"() : () -> ()
    %c0_98 = arith.constant 0 : index
    %c0_99 = arith.constant 0 : index
    %c8_100 = arith.constant 8 : index
    %222 = vector.load %arg20[%c0_98, %c0_99, %c8_100] : memref<1x16x32xf32, #tpu.memory_space<vmem>>, vector<1x16x8xf32>
    tpu.vector_store %arg20[%c0_98, %c0_99, %c8_100], %221 {strides = array<i32>} : memref<1x16x32xf32, #tpu.memory_space<vmem>>, vector<1x16x8xf32>,
    %223 = vector.extract_strided_slice %177 {offsets = [0, 0, 16], sizes = [1, 16, 8], strides = [1, 1, 1]} : vector<1x16x32xbf16> to vector<1x16x8xbf16>
    %224 = vector.extract_strided_slice %179 {offsets = [0, 0, 16], sizes = [1, 8, 8], strides = [1, 1, 1]} : vector<1x8x32xbf16> to vector<1x8x8xbf16>
    "tpu.trace_start"() <{level = 10 : i32, message = "bqd,bkd->bqk"}> : () -> ()
    %cst_101 = arith.constant dense<0.000000e+00> : vector<1x16x8xf32>
    %225 = tpu.matmul %223, %224, %cst_101 {dimension_numbers = #tpu.dot_dimension_numbers<[2], [2], [1], [1], [0, 0, 0, 1, 1, 1], [0], [0]>} : vector<1x16x8xbf16>, vector<1x8x8xbf16>, vector<1x16x8xf32> -> vector<1x16x8xf32>
    "tpu.trace_stop"() : () -> ()
    %226 = arith.addf %225, %183 : vector<1x16x8xf32>
    %cst_102 = arith.constant dense<0xFF800000> : vector<1x16xf32>
    %227 = vector.multi_reduction <maximumf>, %226, %cst_102 [2] : vector<1x16x8xf32> to vector<1x16xf32>
    %228 = vector.shape_cast %227 : vector<1x16xf32> to vector<1x16x1xf32>
    %229 = vector.broadcast %228 : vector<1x16x1xf32> to vector<1x16x8xf32>
    %230 = arith.subf %226, %229 : vector<1x16x8xf32>
    %231 = math.exp %230 : vector<1x16x8xf32>
    %cst_103 = arith.constant dense<0.000000e+00> : vector<1x16xf32>
    %232 = vector.multi_reduction <add>, %231, %cst_103 [2] : vector<1x16x8xf32> to vector<1x16xf32>
    %233 = vector.shape_cast %232 : vector<1x16xf32> to vector<1x16x1xf32>
    %234 = tpu.reciprocal %233 {approx = true} : vector<1x16x1xf32> -> vector<1x16x1xf32>
    %235 = vector.broadcast %234 : vector<1x16x1xf32> to vector<1x16x8xf32>
    %236 = arith.mulf %231, %235 : vector<1x16x8xf32>
    %237 = arith.addf %218, %236 : vector<1x16x8xf32>
    %238 = arith.truncf %236 : vector<1x16x8xf32> to vector<1x16x8xbf16>
    %239 = vector.extract_strided_slice %181 {offsets = [0, 0, 16], sizes = [1, 8, 8], strides = [1, 1, 1]} : vector<1x8x32xbf16> to vector<1x8x8xbf16>
    "tpu.trace_start"() <{level = 10 : i32, message = "bqk,bkd->bqd"}> : () -> ()
    %cst_104 = arith.constant dense<0.000000e+00> : vector<1x16x8xf32>
    %240 = tpu.matmul %238, %239, %cst_104 {dimension_numbers = #tpu.dot_dimension_numbers<[2], [1], [1], [2], [0, 0, 0, 1, 1, 2], [0], [0]>} : vector<1x16x8xbf16>, vector<1x8x8xbf16>, vector<1x16x8xf32> -> vector<1x16x8xf32>
    "tpu.trace_stop"() : () -> ()
    %c0_105 = arith.constant 0 : index
    %c0_106 = arith.constant 0 : index
    %c16_107 = arith.constant 16 : index
    %241 = vector.load %arg20[%c0_105, %c0_106, %c16_107] : memref<1x16x32xf32, #tpu.memory_space<vmem>>, vector<1x16x8xf32>
    tpu.vector_store %arg20[%c0_105, %c0_106, %c16_107], %240 {strides = array<i32>} : memref<1x16x32xf32, #tpu.memory_space<vmem>>, vector<1x16x8xf32>,
    %242 = vector.extract_strided_slice %177 {offsets = [0, 0, 24], sizes = [1, 16, 8], strides = [1, 1, 1]} : vector<1x16x32xbf16> to vector<1x16x8xbf16>
    %243 = vector.extract_strided_slice %179 {offsets = [0, 0, 24], sizes = [1, 8, 8], strides = [1, 1, 1]} : vector<1x8x32xbf16> to vector<1x8x8xbf16>
    "tpu.trace_start"() <{level = 10 : i32, message = "bqd,bkd->bqk"}> : () -> ()
    %cst_108 = arith.constant dense<0.000000e+00> : vector<1x16x8xf32>
    %244 = tpu.matmul %242, %243, %cst_108 {dimension_numbers = #tpu.dot_dimension_numbers<[2], [2], [1], [1], [0, 0, 0, 1, 1, 1], [0], [0]>} : vector<1x16x8xbf16>, vector<1x8x8xbf16>, vector<1x16x8xf32> -> vector<1x16x8xf32>
    "tpu.trace_stop"() : () -> ()
    %245 = arith.addf %244, %183 : vector<1x16x8xf32>
    %cst_109 = arith.constant dense<0xFF800000> : vector<1x16xf32>
    %246 = vector.multi_reduction <maximumf>, %245, %cst_109 [2] : vector<1x16x8xf32> to vector<1x16xf32>
    %247 = vector.shape_cast %246 : vector<1x16xf32> to vector<1x16x1xf32>
    %248 = vector.broadcast %247 : vector<1x16x1xf32> to vector<1x16x8xf32>
    %249 = arith.subf %245, %248 : vector<1x16x8xf32>
    %250 = math.exp %249 : vector<1x16x8xf32>
    %cst_110 = arith.constant dense<0.000000e+00> : vector<1x16xf32>
    %251 = vector.multi_reduction <add>, %250, %cst_110 [2] : vector<1x16x8xf32> to vector<1x16xf32>
    %252 = vector.shape_cast %251 : vector<1x16xf32> to vector<1x16x1xf32>
    %253 = tpu.reciprocal %252 {approx = true} : vector<1x16x1xf32> -> vector<1x16x1xf32>
    %254 = vector.broadcast %253 : vector<1x16x1xf32> to vector<1x16x8xf32>
    %255 = arith.mulf %250, %254 : vector<1x16x8xf32>
    %256 = arith.addf %237, %255 : vector<1x16x8xf32>
    %257 = arith.truncf %255 : vector<1x16x8xf32> to vector<1x16x8xbf16>
    %258 = vector.extract_strided_slice %181 {offsets = [0, 0, 24], sizes = [1, 8, 8], strides = [1, 1, 1]} : vector<1x8x32xbf16> to vector<1x8x8xbf16>
    "tpu.trace_start"() <{level = 10 : i32, message = "bqk,bkd->bqd"}> : () -> ()
    %cst_111 = arith.constant dense<0.000000e+00> : vector<1x16x8xf32>
    %259 = tpu.matmul %257, %258, %cst_111 {dimension_numbers = #tpu.dot_dimension_numbers<[2], [1], [1], [2], [0, 0, 0, 1, 1, 2], [0], [0]>} : vector<1x16x8xbf16>, vector<1x8x8xbf16>, vector<1x16x8xf32> -> vector<1x16x8xf32>
    "tpu.trace_stop"() : () -> ()
    %c0_112 = arith.constant 0 : index
    %c0_113 = arith.constant 0 : index
    %c24_114 = arith.constant 24 : index
    %260 = vector.load %arg20[%c0_112, %c0_113, %c24_114] : memref<1x16x32xf32, #tpu.memory_space<vmem>>, vector<1x16x8xf32>
    tpu.vector_store %arg20[%c0_112, %c0_113, %c24_114], %259 {strides = array<i32>} : memref<1x16x32xf32, #tpu.memory_space<vmem>>, vector<1x16x8xf32>,
    %c0_115 = arith.constant 0 : index
    %c0_116 = arith.constant 0 : index
    %c0_117 = arith.constant 0 : index
    %261 = vector.load %arg20[%c0_115, %c0_116, %c0_117] : memref<1x16x32xf32, #tpu.memory_space<vmem>>, vector<1x16x32xf32>
    %262 = vector.shape_cast %261 : vector<1x16x32xf32> to vector<16x32xf32>
    %cst_118 = arith.constant 2.500000e-01 : f32
    %263 = vector.broadcast %cst_118 : f32 to vector<1x16x8xf32>
    %264 = arith.mulf %256, %263 : vector<1x16x8xf32>
    %265 = arith.truncf %262 : vector<16x32xf32> to vector<16x32xbf16>
    %c0_119 = arith.constant 0 : index
    %c3 = arith.constant 3 : index
    %c0_120 = arith.constant 0 : index
    %c0_121 = arith.constant 0 : index
    %266 = vector.load %arg11[%c0_119, %c3, %c0_120, %c0_121] : memref<1x4x32x32xbf16, #tpu.memory_space<vmem>>, vector<1x1x32x32xbf16>
    %267 = vector.shape_cast %266 : vector<1x1x32x32xbf16> to vector<32x32xbf16>
    %cst_122 = arith.constant dense<0.000000e+00> : vector<16x32xf32>
    %268 = tpu.matmul %265, %267, %cst_122 {dimension_numbers = #tpu.dot_dimension_numbers<[1], [0], [0], [1], [0, 0, 1, 1], [], []>} : vector<16x32xbf16>, vector<32x32xbf16>, vector<16x32xf32> -> vector<16x32xf32>
    %269 = vector.extract_strided_slice %18 {offsets = [3, 0], sizes = [1, 32], strides = [1, 1]} : vector<4x32xf32> to vector<1x32xf32>
    %270 = vector.broadcast %269 : vector<1x32xf32> to vector<16x32xf32>
    %271 = arith.addf %268, %270 : vector<16x32xf32>
    %272 = arith.addf %152, %271 : vector<16x32xf32>
    %273 = vector.extract_strided_slice %14 {offsets = [2, 0], sizes = [1, 32], strides = [1, 1]} : vector<6x32xf32> to vector<1x32xf32>
    %274 = vector.extract_strided_slice %14 {offsets = [3, 0], sizes = [1, 32], strides = [1, 1]} : vector<6x32xf32> to vector<1x32xf32>
    %cst_123 = arith.constant dense<0.000000e+00> : vector<16xf32>
    %275 = vector.multi_reduction <add>, %272, %cst_123 [1] : vector<16x32xf32> to vector<16xf32>
    %276 = vector.shape_cast %275 : vector<16xf32> to vector<16x1xf32>
    %cst_124 = arith.constant 3.200000e+01 : f32
    %277 = vector.broadcast %cst_124 : f32 to vector<16x1xf32>
    %278 = arith.divf %276, %277 : vector<16x1xf32>
    %279 = vector.broadcast %278 : vector<16x1xf32> to vector<16x32xf32>
    %280 = arith.subf %272, %279 : vector<16x32xf32>
    %281 = arith.mulf %280, %280 : vector<16x32xf32>
    %cst_125 = arith.constant dense<0.000000e+00> : vector<16xf32>
    %282 = vector.multi_reduction <add>, %281, %cst_125 [1] : vector<16x32xf32> to vector<16xf32>
    %283 = vector.shape_cast %282 : vector<16xf32> to vector<16x1xf32>
    %cst_126 = arith.constant 3.200000e+01 : f32
    %284 = vector.broadcast %cst_126 : f32 to vector<16x1xf32>
    %285 = arith.divf %283, %284 : vector<16x1xf32>
    %286 = vector.broadcast %278 : vector<16x1xf32> to vector<16x32xf32>
    %287 = arith.subf %272, %286 : vector<16x32xf32>
    %cst_127 = arith.constant 9.99999974E-6 : f32
    %288 = vector.broadcast %cst_127 : f32 to vector<16x1xf32>
    %289 = arith.addf %285, %288 : vector<16x1xf32>
    %290 = math.rsqrt %289 : vector<16x1xf32>
    %291 = vector.broadcast %290 : vector<16x1xf32> to vector<16x32xf32>
    %292 = arith.mulf %287, %291 : vector<16x32xf32>
    %293 = vector.broadcast %273 : vector<1x32xf32> to vector<16x32xf32>
    %294 = arith.mulf %292, %293 : vector<16x32xf32>
    %295 = vector.broadcast %274 : vector<1x32xf32> to vector<16x32xf32>
    %296 = arith.addf %294, %295 : vector<16x32xf32>
    %297 = arith.truncf %296 : vector<16x32xf32> to vector<16x32xbf16>
    %c0_128 = arith.constant 0 : index
    %c0_129 = arith.constant 0 : index
    %c0_130 = arith.constant 0 : index
    %298 = vector.load %arg13[%c0_128, %c0_129, %c0_130] : memref<1x32x64xbf16, #tpu.memory_space<vmem>>, vector<1x32x64xbf16>
    %299 = vector.shape_cast %298 : vector<1x32x64xbf16> to vector<32x64xbf16>
    %cst_131 = arith.constant dense<0.000000e+00> : vector<16x64xf32>
    %300 = tpu.matmul %297, %299, %cst_131 {dimension_numbers = #tpu.dot_dimension_numbers<[1], [0], [0], [1], [0, 0, 1, 1], [], []>} : vector<16x32xbf16>, vector<32x64xbf16>, vector<16x64xf32> -> vector<16x64xf32>
    %c0_132 = arith.constant 0 : index
    %c0_133 = arith.constant 0 : index
    %c0_134 = arith.constant 0 : index
    %301 = vector.load %arg14[%c0_132, %c0_133, %c0_134] : memref<1x1x64xf32, #tpu.memory_space<vmem>>, vector<1x1x64xf32>
    %302 = vector.shape_cast %301 : vector<1x1x64xf32> to vector<1x64xf32>
    %303 = vector.broadcast %302 : vector<1x64xf32> to vector<16x64xf32>
    %304 = arith.addf %300, %303 : vector<16x64xf32>
    %cst_135 = arith.constant 0.000000e+00 : f32
    %305 = vector.broadcast %cst_135 : f32 to vector<16x64xf32>
    %306 = arith.maximumf %304, %305 : vector<16x64xf32>
    %307 = arith.truncf %306 : vector<16x64xf32> to vector<16x64xbf16>
    %c0_136 = arith.constant 0 : index
    %c0_137 = arith.constant 0 : index
    %c0_138 = arith.constant 0 : index
    %308 = vector.load %arg15[%c0_136, %c0_137, %c0_138] : memref<1x64x32xbf16, #tpu.memory_space<vmem>>, vector<1x64x32xbf16>
    %309 = vector.shape_cast %308 : vector<1x64x32xbf16> to vector<64x32xbf16>
    %cst_139 = arith.constant dense<0.000000e+00> : vector<16x32xf32>
    %310 = tpu.matmul %307, %309, %cst_139 {dimension_numbers = #tpu.dot_dimension_numbers<[1], [0], [0], [1], [0, 0, 1, 1], [], []>} : vector<16x64xbf16>, vector<64x32xbf16>, vector<16x32xf32> -> vector<16x32xf32>
    %c0_140 = arith.constant 0 : index
    %c0_141 = arith.constant 0 : index
    %c0_142 = arith.constant 0 : index
    %311 = vector.load %arg16[%c0_140, %c0_141, %c0_142] : memref<1x1x32xf32, #tpu.memory_space<vmem>>, vector<1x1x32xf32>
    %312 = vector.shape_cast %311 : vector<1x1x32xf32> to vector<1x32xf32>
    %313 = vector.broadcast %312 : vector<1x32xf32> to vector<16x32xf32>
    %314 = arith.addf %310, %313 : vector<16x32xf32>
    %315 = arith.addf %296, %314 : vector<16x32xf32>
    %316 = vector.extract_strided_slice %14 {offsets = [4, 0], sizes = [1, 32], strides = [1, 1]} : vector<6x32xf32> to vector<1x32xf32>
    %317 = vector.extract_strided_slice %14 {offsets = [5, 0], sizes = [1, 32], strides = [1, 1]} : vector<6x32xf32> to vector<1x32xf32>
    %cst_143 = arith.constant dense<0.000000e+00> : vector<16xf32>
    %318 = vector.multi_reduction <add>, %315, %cst_143 [1] : vector<16x32xf32> to vector<16xf32>
    %319 = vector.shape_cast %318 : vector<16xf32> to vector<16x1xf32>
    %cst_144 = arith.constant 3.200000e+01 : f32
    %320 = vector.broadcast %cst_144 : f32 to vector<16x1xf32>
    %321 = arith.divf %319, %320 : vector<16x1xf32>
    %322 = vector.broadcast %321 : vector<16x1xf32> to vector<16x32xf32>
    %323 = arith.subf %315, %322 : vector<16x32xf32>
    %324 = arith.mulf %323, %323 : vector<16x32xf32>
    %cst_145 = arith.constant dense<0.000000e+00> : vector<16xf32>
    %325 = vector.multi_reduction <add>, %324, %cst_145 [1] : vector<16x32xf32> to vector<16xf32>
    %326 = vector.shape_cast %325 : vector<16xf32> to vector<16x1xf32>
    %cst_146 = arith.constant 3.200000e+01 : f32
    %327 = vector.broadcast %cst_146 : f32 to vector<16x1xf32>
    %328 = arith.divf %326, %327 : vector<16x1xf32>
    %329 = vector.broadcast %321 : vector<16x1xf32> to vector<16x32xf32>
    %330 = arith.subf %315, %329 : vector<16x32xf32>
    %cst_147 = arith.constant 9.99999974E-6 : f32
    %331 = vector.broadcast %cst_147 : f32 to vector<16x1xf32>
    %332 = arith.addf %328, %331 : vector<16x1xf32>
    %333 = math.rsqrt %332 : vector<16x1xf32>
    %334 = vector.broadcast %333 : vector<16x1xf32> to vector<16x32xf32>
    %335 = arith.mulf %330, %334 : vector<16x32xf32>
    %336 = vector.broadcast %316 : vector<1x32xf32> to vector<16x32xf32>
    %337 = arith.mulf %335, %336 : vector<16x32xf32>
    %338 = vector.broadcast %317 : vector<1x32xf32> to vector<16x32xf32>
    %339 = arith.addf %337, %338 : vector<16x32xf32>
    %340 = vector.shape_cast %339 : vector<16x32xf32> to vector<1x16x32xf32>
    %c0_148 = arith.constant 0 : index
    %c0_149 = arith.constant 0 : index
    %c0_150 = arith.constant 0 : index
    %341 = vector.load %arg18[%c0_148, %c0_149, %c0_150] : memref<1x16x32xf32, #tpu.memory_space<vmem>>, vector<1x16x32xf32>
    tpu.vector_store %arg18[%c0_148, %c0_149, %c0_150], %340 {strides = array<i32>} : memref<1x16x32xf32, #tpu.memory_space<vmem>>, vector<1x16x32xf32>,
    %c0_151 = arith.constant 0 : index
    %c0_152 = arith.constant 0 : index
    %c0_153 = arith.constant 0 : index
    %342 = vector.load %arg19[%c0_151, %c0_152, %c0_153] : memref<1x16x8xf32, #tpu.memory_space<vmem>>, vector<1x16x8xf32>
    tpu.vector_store %arg19[%c0_151, %c0_152, %c0_153], %264 {strides = array<i32>} : memref<1x16x8xf32, #tpu.memory_space<vmem>>, vector<1x16x8xf32>,
    return
  }
  func.func @transform_0(%arg0: i32, %arg1: i32) -> (i32, i32, i32) {
    %c0_i32 = arith.constant 0 : i32
    %c0_i32_0 = arith.constant 0 : i32
    %c0_i32_1 = arith.constant 0 : i32
    return %arg0, %c0_i32, %c0_i32_0 : i32, i32, i32
  }
  func.func @transform_1(%arg0: i32, %arg1: i32) -> (i32, i32, i32) {
    %c0_i32 = arith.constant 0 : i32
    %c0_i32_0 = arith.constant 0 : i32
    %c0_i32_1 = arith.constant 0 : i32
    return %arg0, %c0_i32, %c0_i32_0 : i32, i32, i32
  }
  func.func @transform_2(%arg0: i32, %arg1: i32) -> (i32, i32, i32) {
    %c0_i32 = arith.constant 0 : i32
    %c0_i32_0 = arith.constant 0 : i32
    %c0_i32_1 = arith.constant 0 : i32
    return %arg0, %c0_i32, %c0_i32_0 : i32, i32, i32
  }
  func.func @transform_3(%arg0: i32, %arg1: i32) -> (i32, i32, i32) {
    %c0_i32 = arith.constant 0 : i32
    %c0_i32_0 = arith.constant 0 : i32
    %c0_i32_1 = arith.constant 0 : i32
    return %arg0, %c0_i32, %c0_i32_0 : i32, i32, i32
  }
  func.func @transform_4(%arg0: i32, %arg1: i32) -> (i32, i32, i32) {
    %c0_i32 = arith.constant 0 : i32
    %c0_i32_0 = arith.constant 0 : i32
    %c0_i32_1 = arith.constant 0 : i32
    return %arg0, %c0_i32, %c0_i32_0 : i32, i32, i32
  }
  func.func @transform_5(%arg0: i32, %arg1: i32) -> (i32, i32, i32) {
    %c0_i32 = arith.constant 0 : i32
    %c0_i32_0 = arith.constant 0 : i32
    %c0_i32_1 = arith.constant 0 : i32
    return %arg0, %c0_i32, %c0_i32_0 : i32, i32, i32
  }
  func.func @transform_6(%arg0: i32, %arg1: i32) -> (i32, i32, i32) {
    %c0_i32 = arith.constant 0 : i32
    %c0_i32_0 = arith.constant 0 : i32
    %c0_i32_1 = arith.constant 0 : i32
    return %arg1, %c0_i32, %c0_i32_0 : i32, i32, i32
  }
  func.func @transform_7(%arg0: i32, %arg1: i32) -> (i32, i32, i32, i32) {
    %c0_i32 = arith.constant 0 : i32
    %c0_i32_0 = arith.constant 0 : i32
    %c0_i32_1 = arith.constant 0 : i32
    %c0_i32_2 = arith.constant 0 : i32
    return %arg1, %c0_i32, %c0_i32_0, %c0_i32_1 : i32, i32, i32, i32
  }
  func.func @transform_8(%arg0: i32, %arg1: i32) -> (i32, i32, i32) {
    %c0_i32 = arith.constant 0 : i32
    %c0_i32_0 = arith.constant 0 : i32
    %c0_i32_1 = arith.constant 0 : i32
    return %arg1, %c0_i32, %c0_i32_0 : i32, i32, i32
  }
  func.func @transform_9(%arg0: i32, %arg1: i32) -> (i32, i32, i32, i32) {
    %c0_i32 = arith.constant 0 : i32
    %c0_i32_0 = arith.constant 0 : i32
    %c0_i32_1 = arith.constant 0 : i32
    %c0_i32_2 = arith.constant 0 : i32
    return %arg1, %c0_i32, %c0_i32_0, %c0_i32_1 : i32, i32, i32, i32
  }
  func.func @transform_10(%arg0: i32, %arg1: i32) -> (i32, i32, i32) {
    %c0_i32 = arith.constant 0 : i32
    %c0_i32_0 = arith.constant 0 : i32
    %c0_i32_1 = arith.constant 0 : i32
    return %arg1, %c0_i32, %c0_i32_0 : i32, i32, i32
  }
  func.func @transform_11(%arg0: i32, %arg1: i32) -> (i32, i32, i32) {
    %c0_i32 = arith.constant 0 : i32
    %c0_i32_0 = arith.constant 0 : i32
    %c0_i32_1 = arith.constant 0 : i32
    return %arg1, %c0_i32, %c0_i32_0 : i32, i32, i32
  }
  func.func @transform_12(%arg0: i32, %arg1: i32) -> (i32, i32, i32) {
    %c0_i32 = arith.constant 0 : i32
    %c0_i32_0 = arith.constant 0 : i32
    %c0_i32_1 = arith.constant 0 : i32
    return %arg1, %c0_i32, %c0_i32_0 : i32, i32, i32
  }
  func.func @transform_13(%arg0: i32, %arg1: i32) -> (i32, i32, i32) {
    %c0_i32 = arith.constant 0 : i32
    %c0_i32_0 = arith.constant 0 : i32
    %c0_i32_1 = arith.constant 0 : i32
    return %arg1, %c0_i32, %c0_i32_0 : i32, i32, i32
  }
  func.func @transform_14(%arg0: i32, %arg1: i32) -> (i32, i32, i32) {
    %c0_i32 = arith.constant 0 : i32
    %c0_i32_0 = arith.constant 0 : i32
    %c0_i32_1 = arith.constant 0 : i32
    return %arg1, %c0_i32, %c0_i32_0 : i32, i32, i32
  }
  func.func @transform_15(%arg0: i32, %arg1: i32) -> (i32, i32, i32) {
    %c0_i32 = arith.constant 0 : i32
    %c0_i32_0 = arith.constant 0 : i32
    %c0_i32_1 = arith.constant 0 : i32
    return %arg1, %c0_i32, %c0_i32_0 : i32, i32, i32
  }
  func.func @transform_16(%arg0: i32, %arg1: i32) -> (i32, i32, i32) {
    %c0_i32 = arith.constant 0 : i32
    %c0_i32_0 = arith.constant 0 : i32
    %c0_i32_1 = arith.constant 0 : i32
    return %arg0, %c0_i32, %c0_i32_0 : i32, i32, i32
  }
  func.func @transform_17(%arg0: i32, %arg1: i32) -> (i32, i32, i32) {
    %c0_i32 = arith.constant 0 : i32
    %c0_i32_0 = arith.constant 0 : i32
    %c0_i32_1 = arith.constant 0 : i32
    return %arg0, %c0_i32, %c0_i32_0 : i32, i32, i32
  }
}

</mosaic_0001>

<llo_original>
// kernel: tpu_custom_call.1
$region0: #{tpu_custom_call.1}
  #allocation0 [shape = 'u32[]', space=smem, size = 0x4, offset = 0x4, fixed_abs, tag = 'smem constant byte address 0x4 - core index']
  #allocation1 [shape = 'u32[144,128]{1,0:T(1,128)}', space=vmem, size = 0x12000, scoped, tag = 'internal scratch']
  #allocation2 [shape = 'f32[1,16,32]{2,1,0:T(8,128)}', space=vmem, size = 0x2000, scoped, tag = 'scratch operand']
  %s0 = inlined_call_operand.hbm [shape: f32[2,16,32], index: 0, kind: input, shape index: {}]
  %s1 = inlined_call_operand.hbm [shape: f32[2,8,32], index: 1, kind: input, shape index: {}]
  %s2 = inlined_call_operand.vmem [shape: f32[2,1,16], index: 2, kind: input, shape index: {}]
  %s3 = inlined_call_operand.vmem [shape: f32[2,1,8], index: 3, kind: input, shape index: {}]
  %s4 = inlined_call_operand.hbm [shape: f32[2,16,32], index: 4, kind: input, shape index: {}]
  %s5 = inlined_call_operand.hbm [shape: f32[2,8,32], index: 5, kind: input, shape index: {}]
  %s6 = inlined_call_operand.hbm [shape: bf16[2,32,64], index: 6, kind: input, shape index: {}]
  %s7 = inlined_call_operand.hbm [shape: bf16[2,2,32,32], index: 7, kind: input, shape index: {}]
  %s8 = inlined_call_operand.hbm [shape: f32[2,4,32], index: 8, kind: input, shape index: {}]
  %s9 = inlined_call_operand.vmem [shape: bf16[2,4,32,32], index: 9, kind: input, shape index: {}]
  %s10 = inlined_call_operand.hbm [shape: f32[2,4,32], index: 10, kind: input, shape index: {}]
  %s11 = inlined_call_operand.hbm [shape: bf16[2,32,64], index: 11, kind: input, shape index: {}]
  %s12 = inlined_call_operand.vmem [shape: f32[2,1,64], index: 12, kind: input, shape index: {}]
  %s13 = inlined_call_operand.vmem [shape: bf16[2,64,32], index: 13, kind: input, shape index: {}]
  %s14 = inlined_call_operand.vmem [shape: f32[2,1,32], index: 14, kind: input, shape index: {}]
  %s15 = inlined_call_operand.vmem [shape: f32[2,6,32], index: 15, kind: input, shape index: {}]
  %s16 = inlined_call_operand.hbm [shape: f32[2,16,32], index: 16, kind: output, shape index: {0}]
  %s17 = inlined_call_operand.vmem [shape: f32[2,16,8], index: 17, kind: output, shape index: {1}]
  %18 = xla_tuple %s16, %s17
  %s19 = sld [smem:[#allocation0]]
  $region145: #{tpu_custom_call.1} parent=0
    _
  %s21 = ssub.s32 1, %s19
  %s22 = scalar_select 0, %s21, %s19
  $region1: #{tpu_custom_call.1} parent=0
    #allocation3 [shape = 'u8[16384]{0}', space=vmem, size = 0x4000, scoped, tag = 'input window, operand 0']
    #allocation4 [shape = 's32[2]{0}', space=sflag, size = 0x8, scoped, tag = 'scoped memory for tpu_custom_call.1']
    #allocation5 [shape = 's32[2]{0}', space=sflag, size = 0x8, scoped, tag = 'scoped memory for tpu_custom_call.1']
    #allocation6 [shape = 'u8[8192]{0}', space=vmem, size = 0x2000, scoped, tag = 'input window, operand 1']
    #allocation7 [shape = 's32[2]{0}', space=sflag, size = 0x8, scoped, tag = 'scoped memory for tpu_custom_call.1']
    #allocation8 [shape = 'u8[16384]{0}', space=vmem, size = 0x4000, scoped, tag = 'input window, operand 4']
    #allocation9 [shape = 'u8[8192]{0}', space=vmem, size = 0x2000, scoped, tag = 'input window, operand 5']
    #allocation10 [shape = 's32[2]{0}', space=sflag, size = 0x8, scoped, tag = 'scoped memory for tpu_custom_call.1']
    #allocation11 [shape = 'u8[16384]{0}', space=vmem, size = 0x4000, scoped, tag = 'input window, operand 6']
    #allocation12 [shape = 'u8[32768]{0}', space=vmem, size = 0x8000, scoped, tag = 'input window, operand 7']
    #allocation13 [shape = 's32[2]{0}', space=sflag, size = 0x8, scoped, tag = 'scoped memory for tpu_custom_call.1']
    #allocation14 [shape = 'u8[4096]{0}', space=vmem, size = 0x1000, scoped, tag = 'input window, operand 8']
    #allocation15 [shape = 'u8[4096]{0}', space=vmem, size = 0x1000, scoped, tag = 'input window, operand 10']
    #allocation16 [shape = 's32[2]{0}', space=sflag, size = 0x8, scoped, tag = 'scoped memory for tpu_custom_call.1']
    #allocation17 [shape = 'u8[16384]{0}', space=vmem, size = 0x4000, scoped, tag = 'input window, operand 11']
    #allocation18 [shape = 'u8[16384]{0}', space=vmem, size = 0x4000, scoped, tag = 'output window, operand 0']
    %23 = vsyncpa [#allocation4], 0
    %s24 = scalar_lea.sflag [#allocation4], 1
    %25 = vsyncpa %s24, 0
    %26 = vsyncpa [#allocation7], 0
    %s27 = scalar_lea.sflag [#allocation7], 1
    %28 = vsyncpa %s27, 0
    %29 = vsyncpa [#allocation10], 0
    %s30 = scalar_lea.sflag [#allocation10], 1
    %31 = vsyncpa %s30, 0
    %32 = vsyncpa [#allocation13], 0
    %s33 = scalar_lea.sflag [#allocation13], 1
    %34 = vsyncpa %s33, 0
    %35 = vsyncpa [#allocation16], 0
    %s36 = scalar_lea.sflag [#allocation16], 1
    %37 = vsyncpa %s36, 0
    %38 = vsyncpa [#allocation5], 0
    %s39 = scalar_lea.sflag [#allocation5], 1
    %40 = vsyncpa %s39, 0
    loop: start=0, step=1, limit=6
    $region2: #{tpu_custom_call.1} parent=1 // loop_pre_header
      _
    $region3: #{tpu_custom_call.1} parent=1 // loop_header
      %s42 = sphi 0, %s46
      %p43 = scmp.ge.s32.totalorder %s42, 6
      %s49 = sphi 0, %s61
      %s50 = sphi 0, %s57
      %s51 = sphi 0, %s49
      %s52 = sphi 0, %s50
      %s53 = sphi 0, %s51
      %s54 = sphi 0, %s52
      %s64 = sphi 0, %s66
      %s67 = sphi 0, %s64
      %s68 = sphi 0, %s67
      %s84 = sphi 0, %s68
      %s90 = sphi 0, %s92
      %s93 = sphi 0, %s90
      %s94 = sphi 0, %s93
      %s110 = sphi 0, %s94
      %s116 = sphi 0, %s118
      %s119 = sphi 0, %s116
      %s120 = sphi 0, %s119
      %s136 = sphi 0, %s120
      %s142 = sphi 0, %s144
      %s145 = sphi 0, %s142
      %s146 = sphi 0, %s145
      %s162 = sphi 0, %s146
      %s168 = sphi 0, %s170
      %s171 = sphi 0, %s168
      %s172 = sphi 0, %s171
      %s188 = sphi 0, %s172
      %s194 = sphi 0, %s196
      %s197 = sphi 0, %s194
      %s198 = sphi 0, %s197
      %s214 = sphi 0, %s198
      %s220 = sphi 0, %s222
      %s223 = sphi 0, %s220
      %s224 = sphi 0, %s223
      %s240 = sphi 0, %s224
      %s246 = sphi 0, %s248
      %s249 = sphi 0, %s246
      %s250 = sphi 0, %s249
      %s266 = sphi 0, %s250
      %s272 = sphi 0, %s274
      %s275 = sphi 0, %s272
      %s276 = sphi 0, %s275
      %s292 = sphi 0, %s276
      %s298 = sphi 0, %s300
      %s301 = sphi 0, %s298
      %s302 = sphi 0, %s301
      %s318 = sphi 0, %s302
      %s324 = sphi 0, %s326
      %s327 = sphi 0, %s324
      %s328 = sphi 0, %s327
      %s344 = sphi 0, %s328
      %s350 = sphi 0, %s352
      %s353 = sphi 0, %s350
      %s354 = sphi 0, %s353
      %s370 = sphi 0, %s354
      %s376 = sphi 0, %s378
      %s379 = sphi 0, %s376
      %s380 = sphi 0, %s379
      %s396 = sphi 0, %s380
      %s402 = sphi 0, %s404
      %s405 = sphi 0, %s402
      %s406 = sphi 0, %s405
      %s422 = sphi 0, %s406
      %s428 = sphi 0, %s430
      %s431 = sphi 0, %s428
      %s432 = sphi 0, %s431
      %s448 = sphi 0, %s432
      %s454 = sphi 0, %s456
      %s457 = sphi 0, %s454
      %s458 = sphi 0, %s457
      %s474 = sphi 0, %s458
      %s480 = sphi 0, %s482
      %s483 = sphi 0, %s480
      %s484 = sphi 0, %s483
      %s500 = sphi 0, %s484
      %s506 = sphi 0, %s508
      %s509 = sphi 0, %s506
      %s510 = sphi 0, %s509
      %s526 = sphi 0, %s510
    $region4: #{tpu_custom_call.1} parent=1 // loop_header_branch
      %45 = sbr.rel (%p43) target = $region8
    $region5: #{tpu_custom_call.1} parent=1 // loop_body
      %s47 = ssub.s32 %s42, 1
      %s48 = ssub.s32 %s42, 2
      %s55 = sadd.s32 1, %s50
      %p56 = scmp.ge.s32.totalorder %s55, 2
      %s57 = scalar_select %p56, 0, %s55
      %s58 = sadd.s32 1, %s49
      %s59 = scalar_select %p56, %s58, %s49
      %p60 = scmp.ge.s32.totalorder %s59, 2
      %s61 = scalar_select %p60, 0, %s59
      %s62 = ssub.s32 %s49, %s61
      %p63 = scmp.eq.s32.totalorder %s62, 0
      %s65 = sadd.s32 %s64, 1
      %s66 = scalar_select %p63, %s64, %s65
      %p69 = pneg %p63
      %p70 = scmp.eq.s32.totalorder %s42, 3
      %p71 = por %p69, %p70
      %p72 = scmp.ne.s32.totalorder %s64, %s67
      %p73 = scmp.eq.s32.totalorder %s42, 0
      %p74 = por %p72, %p73
      %p75 = scmp.ne.s32.totalorder %s64, %s67
      %p76 = scmp.eq.s32.totalorder %s47, 3
      %p77 = por %p75, %p76
      %p78 = scmp.ne.s32.totalorder %s67, %s68
      %p79 = scmp.eq.s32.totalorder %s47, 0
      %p80 = por %p78, %p79
      %p81 = scmp.ne.s32.totalorder %s67, %s68
      %p82 = scmp.eq.s32.totalorder %s48, 3
      %p83 = por %p81, %p82
      %p85 = scmp.ne.s32.totalorder %s68, %s84
      %p86 = scmp.eq.s32.totalorder %s48, 0
      %p87 = por %p85, %p86
      %s88 = ssub.s32 %s49, %s61
      %p89 = scmp.eq.s32.totalorder %s88, 0
      %s91 = sadd.s32 %s90, 1
      %s92 = scalar_select %p89, %s90, %s91
      %p95 = pneg %p89
      %p96 = scmp.eq.s32.totalorder %s42, 3
      %p97 = por %p95, %p96
      %p98 = scmp.ne.s32.totalorder %s90, %s93
      %p99 = scmp.eq.s32.totalorder %s42, 0
      %p100 = por %p98, %p99
      %p101 = scmp.ne.s32.totalorder %s90, %s93
      %p102 = scmp.eq.s32.totalorder %s47, 3
      %p103 = por %p101, %p102
      %p104 = scmp.ne.s32.totalorder %s93, %s94
      %p105 = scmp.eq.s32.totalorder %s47, 0
      %p106 = por %p104, %p105
      %p107 = scmp.ne.s32.totalorder %s93, %s94
      %p108 = scmp.eq.s32.totalorder %s48, 3
      %p109 = por %p107, %p108
      %p111 = scmp.ne.s32.totalorder %s94, %s110
      %p112 = scmp.eq.s32.totalorder %s48, 0
      %p113 = por %p111, %p112
      %s114 = ssub.s32 %s49, %s61
      %p115 = scmp.eq.s32.totalorder %s114, 0
      %s117 = sadd.s32 %s116, 1
      %s118 = scalar_select %p115, %s116, %s117
      %p121 = pneg %p115
      %p122 = scmp.eq.s32.totalorder %s42, 3
      %p123 = por %p121, %p122
      %p124 = scmp.ne.s32.totalorder %s116, %s119
      %p125 = scmp.eq.s32.totalorder %s42, 0
      %p126 = por %p124, %p125
      %p127 = scmp.ne.s32.totalorder %s116, %s119
      %p128 = scmp.eq.s32.totalorder %s47, 3
      %p129 = por %p127, %p128
      %p130 = scmp.ne.s32.totalorder %s119, %s120
      %p131 = scmp.eq.s32.totalorder %s47, 0
      %p132 = por %p130, %p131
      %p133 = scmp.ne.s32.totalorder %s119, %s120
      %p134 = scmp.eq.s32.totalorder %s48, 3
      %p135 = por %p133, %p134
      %p137 = scmp.ne.s32.totalorder %s120, %s136
      %p138 = scmp.eq.s32.totalorder %s48, 0
      %p139 = por %p137, %p138
      %s140 = ssub.s32 %s49, %s61
      %p141 = scmp.eq.s32.totalorder %s140, 0
      %s143 = sadd.s32 %s142, 1
      %s144 = scalar_select %p141, %s142, %s143
      %p147 = pneg %p141
      %p148 = scmp.eq.s32.totalorder %s42, 3
      %p149 = por %p147, %p148
      %p150 = scmp.ne.s32.totalorder %s142, %s145
      %p151 = scmp.eq.s32.totalorder %s42, 0
      %p152 = por %p150, %p151
      %p153 = scmp.ne.s32.totalorder %s142, %s145
      %p154 = scmp.eq.s32.totalorder %s47, 3
      %p155 = por %p153, %p154
      %p156 = scmp.ne.s32.totalorder %s145, %s146
      %p157 = scmp.eq.s32.totalorder %s47, 0
      %p158 = por %p156, %p157
      %p159 = scmp.ne.s32.totalorder %s145, %s146
      %p160 = scmp.eq.s32.totalorder %s48, 3
      %p161 = por %p159, %p160
      %p163 = scmp.ne.s32.totalorder %s146, %s162
      %p164 = scmp.eq.s32.totalorder %s48, 0
      %p165 = por %p163, %p164
      %s166 = ssub.s32 %s49, %s61
      %p167 = scmp.eq.s32.totalorder %s166, 0
      %s169 = sadd.s32 %s168, 1
      %s170 = scalar_select %p167, %s168, %s169
      %p173 = pneg %p167
      %p174 = scmp.eq.s32.totalorder %s42, 3
      %p175 = por %p173, %p174
      %p176 = scmp.ne.s32.totalorder %s168, %s171
      %p177 = scmp.eq.s32.totalorder %s42, 0
      %p178 = por %p176, %p177
      %p179 = scmp.ne.s32.totalorder %s168, %s171
      %p180 = scmp.eq.s32.totalorder %s47, 3
      %p181 = por %p179, %p180
      %p182 = scmp.ne.s32.totalorder %s171, %s172
      %p183 = scmp.eq.s32.totalorder %s47, 0
      %p184 = por %p182, %p183
      %p185 = scmp.ne.s32.totalorder %s171, %s172
      %p186 = scmp.eq.s32.totalorder %s48, 3
      %p187 = por %p185, %p186
      %p189 = scmp.ne.s32.totalorder %s172, %s188
      %p190 = scmp.eq.s32.totalorder %s48, 0
      %p191 = por %p189, %p190
      %s192 = ssub.s32 %s49, %s61
      %p193 = scmp.eq.s32.totalorder %s192, 0
      %s195 = sadd.s32 %s194, 1
      %s196 = scalar_select %p193, %s194, %s195
      %p199 = pneg %p193
      %p200 = scmp.eq.s32.totalorder %s42, 3
      %p201 = por %p199, %p200
      %p202 = scmp.ne.s32.totalorder %s194, %s197
      %p203 = scmp.eq.s32.totalorder %s42, 0
      %p204 = por %p202, %p203
      %p205 = scmp.ne.s32.totalorder %s194, %s197
      %p206 = scmp.eq.s32.totalorder %s47, 3
      %p207 = por %p205, %p206
      %p208 = scmp.ne.s32.totalorder %s197, %s198
      %p209 = scmp.eq.s32.totalorder %s47, 0
      %p210 = por %p208, %p209
      %p211 = scmp.ne.s32.totalorder %s197, %s198
      %p212 = scmp.eq.s32.totalorder %s48, 3
      %p213 = por %p211, %p212
      %p215 = scmp.ne.s32.totalorder %s198, %s214
      %p216 = scmp.eq.s32.totalorder %s48, 0
      %p217 = por %p215, %p216
      %s218 = ssub.s32 %s50, %s57
      %p219 = scmp.eq.s32.totalorder %s218, 0
      %s221 = sadd.s32 %s220, 1
      %s222 = scalar_select %p219, %s220, %s221
      %p225 = pneg %p219
      %p226 = scmp.eq.s32.totalorder %s42, 3
      %p227 = por %p225, %p226
      %p228 = scmp.ne.s32.totalorder %s220, %s223
      %p229 = scmp.eq.s32.totalorder %s42, 0
      %p230 = por %p228, %p229
      %p231 = scmp.ne.s32.totalorder %s220, %s223
      %p232 = scmp.eq.s32.totalorder %s47, 3
      %p233 = por %p231, %p232
      %p234 = scmp.ne.s32.totalorder %s223, %s224
      %p235 = scmp.eq.s32.totalorder %s47, 0
      %p236 = por %p234, %p235
      %p237 = scmp.ne.s32.totalorder %s223, %s224
      %p238 = scmp.eq.s32.totalorder %s48, 3
      %p239 = por %p237, %p238
      %p241 = scmp.ne.s32.totalorder %s224, %s240
      %p242 = scmp.eq.s32.totalorder %s48, 0
      %p243 = por %p241, %p242
      %s244 = ssub.s32 %s50, %s57
      %p245 = scmp.eq.s32.totalorder %s244, 0
      %s247 = sadd.s32 %s246, 1
      %s248 = scalar_select %p245, %s246, %s247
      %p251 = pneg %p245
      %p252 = scmp.eq.s32.totalorder %s42, 3
      %p253 = por %p251, %p252
      %p254 = scmp.ne.s32.totalorder %s246, %s249
      %p255 = scmp.eq.s32.totalorder %s42, 0
      %p256 = por %p254, %p255
      %p257 = scmp.ne.s32.totalorder %s246, %s249
      %p258 = scmp.eq.s32.totalorder %s47, 3
      %p259 = por %p257, %p258
      %p260 = scmp.ne.s32.totalorder %s249, %s250
      %p261 = scmp.eq.s32.totalorder %s47, 0
      %p262 = por %p260, %p261
      %p263 = scmp.ne.s32.totalorder %s249, %s250
      %p264 = scmp.eq.s32.totalorder %s48, 3
      %p265 = por %p263, %p264
      %p267 = scmp.ne.s32.totalorder %s250, %s266
      %p268 = scmp.eq.s32.totalorder %s48, 0
      %p269 = por %p267, %p268
      %s270 = ssub.s32 %s50, %s57
      %p271 = scmp.eq.s32.totalorder %s270, 0
      %s273 = sadd.s32 %s272, 1
      %s274 = scalar_select %p271, %s272, %s273
      %p277 = pneg %p271
      %p278 = scmp.eq.s32.totalorder %s42, 3
      %p279 = por %p277, %p278
      %p280 = scmp.ne.s32.totalorder %s272, %s275
      %p281 = scmp.eq.s32.totalorder %s42, 0
      %p282 = por %p280, %p281
      %p283 = scmp.ne.s32.totalorder %s272, %s275
      %p284 = scmp.eq.s32.totalorder %s47, 3
      %p285 = por %p283, %p284
      %p286 = scmp.ne.s32.totalorder %s275, %s276
      %p287 = scmp.eq.s32.totalorder %s47, 0
      %p288 = por %p286, %p287
      %p289 = scmp.ne.s32.totalorder %s275, %s276
      %p290 = scmp.eq.s32.totalorder %s48, 3
      %p291 = por %p289, %p290
      %p293 = scmp.ne.s32.totalorder %s276, %s292
      %p294 = scmp.eq.s32.totalorder %s48, 0
      %p295 = por %p293, %p294
      %s296 = ssub.s32 %s50, %s57
      %p297 = scmp.eq.s32.totalorder %s296, 0
      %s299 = sadd.s32 %s298, 1
      %s300 = scalar_select %p297, %s298, %s299
      %p303 = pneg %p297
      %p304 = scmp.eq.s32.totalorder %s42, 3
      %p305 = por %p303, %p304
      %p306 = scmp.ne.s32.totalorder %s298, %s301
      %p307 = scmp.eq.s32.totalorder %s42, 0
      %p308 = por %p306, %p307
      %p309 = scmp.ne.s32.totalorder %s298, %s301
      %p310 = scmp.eq.s32.totalorder %s47, 3
      %p311 = por %p309, %p310
      %p312 = scmp.ne.s32.totalorder %s301, %s302
      %p313 = scmp.eq.s32.totalorder %s47, 0
      %p314 = por %p312, %p313
      %p315 = scmp.ne.s32.totalorder %s301, %s302
      %p316 = scmp.eq.s32.totalorder %s48, 3
      %p317 = por %p315, %p316
      %p319 = scmp.ne.s32.totalorder %s302, %s318
      %p320 = scmp.eq.s32.totalorder %s48, 0
      %p321 = por %p319, %p320
      %s322 = ssub.s32 %s50, %s57
      %p323 = scmp.eq.s32.totalorder %s322, 0
      %s325 = sadd.s32 %s324, 1
      %s326 = scalar_select %p323, %s324, %s325
      %p329 = pneg %p323
      %p330 = scmp.eq.s32.totalorder %s42, 3
      %p331 = por %p329, %p330
      %p332 = scmp.ne.s32.totalorder %s324, %s327
      %p333 = scmp.eq.s32.totalorder %s42, 0
      %p334 = por %p332, %p333
      %p335 = scmp.ne.s32.totalorder %s324, %s327
      %p336 = scmp.eq.s32.totalorder %s47, 3
      %p337 = por %p335, %p336
      %p338 = scmp.ne.s32.totalorder %s327, %s328
      %p339 = scmp.eq.s32.totalorder %s47, 0
      %p340 = por %p338, %p339
      %p341 = scmp.ne.s32.totalorder %s327, %s328
      %p342 = scmp.eq.s32.totalorder %s48, 3
      %p343 = por %p341, %p342
      %p345 = scmp.ne.s32.totalorder %s328, %s344
      %p346 = scmp.eq.s32.totalorder %s48, 0
      %p347 = por %p345, %p346
      %s348 = ssub.s32 %s50, %s57
      %p349 = scmp.eq.s32.totalorder %s348, 0
      %s351 = sadd.s32 %s350, 1
      %s352 = scalar_select %p349, %s350, %s351
      %p355 = pneg %p349
      %p356 = scmp.eq.s32.totalorder %s42, 3
      %p357 = por %p355, %p356
      %p358 = scmp.ne.s32.totalorder %s350, %s353
      %p359 = scmp.eq.s32.totalorder %s42, 0
      %p360 = por %p358, %p359
      %p361 = scmp.ne.s32.totalorder %s350, %s353
      %p362 = scmp.eq.s32.totalorder %s47, 3
      %p363 = por %p361, %p362
      %p364 = scmp.ne.s32.totalorder %s353, %s354
      %p365 = scmp.eq.s32.totalorder %s47, 0
      %p366 = por %p364, %p365
      %p367 = scmp.ne.s32.totalorder %s353, %s354
      %p368 = scmp.eq.s32.totalorder %s48, 3
      %p369 = por %p367, %p368
      %p371 = scmp.ne.s32.totalorder %s354, %s370
      %p372 = scmp.eq.s32.totalorder %s48, 0
      %p373 = por %p371, %p372
      %s374 = ssub.s32 %s50, %s57
      %p375 = scmp.eq.s32.totalorder %s374, 0
      %s377 = sadd.s32 %s376, 1
      %s378 = scalar_select %p375, %s376, %s377
      %p381 = pneg %p375
      %p382 = scmp.eq.s32.totalorder %s42, 3
      %p383 = por %p381, %p382
      %p384 = scmp.ne.s32.totalorder %s376, %s379
      %p385 = scmp.eq.s32.totalorder %s42, 0
      %p386 = por %p384, %p385
      %p387 = scmp.ne.s32.totalorder %s376, %s379
      %p388 = scmp.eq.s32.totalorder %s47, 3
      %p389 = por %p387, %p388
      %p390 = scmp.ne.s32.totalorder %s379, %s380
      %p391 = scmp.eq.s32.totalorder %s47, 0
      %p392 = por %p390, %p391
      %p393 = scmp.ne.s32.totalorder %s379, %s380
      %p394 = scmp.eq.s32.totalorder %s48, 3
      %p395 = por %p393, %p394
      %p397 = scmp.ne.s32.totalorder %s380, %s396
      %p398 = scmp.eq.s32.totalorder %s48, 0
      %p399 = por %p397, %p398
      %s400 = ssub.s32 %s50, %s57
      %p401 = scmp.eq.s32.totalorder %s400, 0
      %s403 = sadd.s32 %s402, 1
      %s404 = scalar_select %p401, %s402, %s403
      %p407 = pneg %p401
      %p408 = scmp.eq.s32.totalorder %s42, 3
      %p409 = por %p407, %p408
      %p410 = scmp.ne.s32.totalorder %s402, %s405
      %p411 = scmp.eq.s32.totalorder %s42, 0
      %p412 = por %p410, %p411
      %p413 = scmp.ne.s32.totalorder %s402, %s405
      %p414 = scmp.eq.s32.totalorder %s47, 3
      %p415 = por %p413, %p414
      %p416 = scmp.ne.s32.totalorder %s405, %s406
      %p417 = scmp.eq.s32.totalorder %s47, 0
      %p418 = por %p416, %p417
      %p419 = scmp.ne.s32.totalorder %s405, %s406
      %p420 = scmp.eq.s32.totalorder %s48, 3
      %p421 = por %p419, %p420
      %p423 = scmp.ne.s32.totalorder %s406, %s422
      %p424 = scmp.eq.s32.totalorder %s48, 0
      %p425 = por %p423, %p424
      %s426 = ssub.s32 %s50, %s57
      %p427 = scmp.eq.s32.totalorder %s426, 0
      %s429 = sadd.s32 %s428, 1
      %s430 = scalar_select %p427, %s428, %s429
      %p433 = pneg %p427
      %p434 = scmp.eq.s32.totalorder %s42, 3
      %p435 = por %p433, %p434
      %p436 = scmp.ne.s32.totalorder %s428, %s431
      %p437 = scmp.eq.s32.totalorder %s42, 0
      %p438 = por %p436, %p437
      %p439 = scmp.ne.s32.totalorder %s428, %s431
      %p440 = scmp.eq.s32.totalorder %s47, 3
      %p441 = por %p439, %p440
      %p442 = scmp.ne.s32.totalorder %s431, %s432
      %p443 = scmp.eq.s32.totalorder %s47, 0
      %p444 = por %p442, %p443
      %p445 = scmp.ne.s32.totalorder %s431, %s432
      %p446 = scmp.eq.s32.totalorder %s48, 3
      %p447 = por %p445, %p446
      %p449 = scmp.ne.s32.totalorder %s432, %s448
      %p450 = scmp.eq.s32.totalorder %s48, 0
      %p451 = por %p449, %p450
      %s452 = ssub.s32 %s50, %s57
      %p453 = scmp.eq.s32.totalorder %s452, 0
      %s455 = sadd.s32 %s454, 1
      %s456 = scalar_select %p453, %s454, %s455
      %p459 = pneg %p453
      %p460 = scmp.eq.s32.totalorder %s42, 3
      %p461 = por %p459, %p460
      %p462 = scmp.ne.s32.totalorder %s454, %s457
      %p463 = scmp.eq.s32.totalorder %s42, 0
      %p464 = por %p462, %p463
      %p465 = scmp.ne.s32.totalorder %s454, %s457
      %p466 = scmp.eq.s32.totalorder %s47, 3
      %p467 = por %p465, %p466
      %p468 = scmp.ne.s32.totalorder %s457, %s458
      %p469 = scmp.eq.s32.totalorder %s47, 0
      %p470 = por %p468, %p469
      %p471 = scmp.ne.s32.totalorder %s457, %s458
      %p472 = scmp.eq.s32.totalorder %s48, 3
      %p473 = por %p471, %p472
      %p475 = scmp.ne.s32.totalorder %s458, %s474
      %p476 = scmp.eq.s32.totalorder %s48, 0
      %p477 = por %p475, %p476
      %s478 = ssub.s32 %s49, %s61
      %p479 = scmp.eq.s32.totalorder %s478, 0
      %s481 = sadd.s32 %s480, 1
      %s482 = scalar_select %p479, %s480, %s481
      %p485 = pneg %p479
      %p486 = scmp.eq.s32.totalorder %s42, 3
      %p487 = por %p485, %p486
      %p488 = scmp.ne.s32.totalorder %s480, %s483
      %p489 = scmp.eq.s32.totalorder %s42, 0
      %p490 = por %p488, %p489
      %p491 = scmp.ne.s32.totalorder %s480, %s483
      %p492 = scmp.eq.s32.totalorder %s47, 3
      %p493 = por %p491, %p492
      %p494 = scmp.ne.s32.totalorder %s483, %s484
      %p495 = scmp.eq.s32.totalorder %s47, 0
      %p496 = por %p494, %p495
      %p497 = scmp.ne.s32.totalorder %s483, %s484
      %p498 = scmp.eq.s32.totalorder %s48, 3
      %p499 = por %p497, %p498
      %p501 = scmp.ne.s32.totalorder %s484, %s500
      %p502 = scmp.eq.s32.totalorder %s48, 0
      %p503 = por %p501, %p502
      %s504 = ssub.s32 %s49, %s61
      %p505 = scmp.eq.s32.totalorder %s504, 0
      %s507 = sadd.s32 %s506, 1
      %s508 = scalar_select %p505, %s506, %s507
      %p511 = pneg %p505
      %p512 = scmp.eq.s32.totalorder %s42, 3
      %p513 = por %p511, %p512
      %p514 = scmp.ne.s32.totalorder %s506, %s509
      %p515 = scmp.eq.s32.totalorder %s42, 0
      %p516 = por %p514, %p515
      %p517 = scmp.ne.s32.totalorder %s506, %s509
      %p518 = scmp.eq.s32.totalorder %s47, 3
      %p519 = por %p517, %p518
      %p520 = scmp.ne.s32.totalorder %s509, %s510
      %p521 = scmp.eq.s32.totalorder %s47, 0
      %p522 = por %p520, %p521
      %p523 = scmp.ne.s32.totalorder %s509, %s510
      %p524 = scmp.eq.s32.totalorder %s48, 3
      %p525 = por %p523, %p524
      %p527 = scmp.ne.s32.totalorder %s510, %s526
      %p528 = scmp.eq.s32.totalorder %s48, 0
      %p529 = por %p527, %p528
      %p530 = scmp.le.s32.totalorder 1, %s42
      %p531 = scmp.lt.s32.totalorder %s42, 5
      %p532 = pnand %p530, %p531
      %p533 = pneg %p532
      // Predicated region
      $region9: #{tpu_custom_call.1} parent=5 // pred_check
        _
      $region10: #{tpu_custom_call.1} parent=5 // pred_check_branch
        %535 = sbr.rel (%p532) target = $region12
      $region11: #{tpu_custom_call.1} parent=5 // pred_region
        %s536 = ssub.s32 %s42, 1
      $region12: #{tpu_custom_call.1} parent=5 // pred_fallthru
        _
      %p537 = scmp.lt.s32.totalorder %s42, 4
      // Predicated region
      $region13: #{tpu_custom_call.1} parent=5 // pred_check
        %p538 = pneg %p537
      $region14: #{tpu_custom_call.1} parent=5 // pred_check_branch
        %540 = sbr.rel (%p538) target = $region16
      $region15: #{tpu_custom_call.1} parent=5 // pred_region
        // Predicated region
        $region17: #{tpu_custom_call.1} parent=15 // pred_check
          %p541 = pneg %p74
        $region18: #{tpu_custom_call.1} parent=15 // pred_check_branch
          %543 = sbr.rel (%p541) target = $region20
        $region19: #{tpu_custom_call.1} parent=15 // pred_region
          %s544 = sand.u32 %s64, 1
          %s545 = scalar_lea.sflag [#allocation4], %s544
          %s546 = sand.u32 %s64, 1
          %s547 = smul.addr %s546, 16
          %s548 = scalar_lea.vmem [#allocation3], %s547
          %s550 = ssub.s32 256, 256
          %551 = vsyncadd %s545, %s550
          %s552 = smul.addr %s49, 2
          %s553 = smul.addr %s552, 128
          %s554 = scalar_lea.hbm %s0, %s553
          %s555 = sshll.u32 %s548, 4
          %s556 = int_to_ptr.vmem [resolvable:$true] %s555
          %561 = dma.hbm_to_vmem [thread:$0]  %s554, 256, %s556, %s545, 128, 128, 8
        $region20: #{tpu_custom_call.1} parent=15 // pred_fallthru
          _
        // Predicated region
        $region21: #{tpu_custom_call.1} parent=15 // pred_check
          %p562 = pneg %p100
        $region22: #{tpu_custom_call.1} parent=15 // pred_check_branch
          %564 = sbr.rel (%p562) target = $region24
        $region23: #{tpu_custom_call.1} parent=15 // pred_region
          %s565 = sand.u32 %s42, 1
          %s566 = scalar_lea.sflag [#allocation7], %s565
          %s567 = sand.u32 %s90, 1
          %s568 = smul.addr %s567, 8
          %s569 = scalar_lea.vmem [#allocation6], %s568
          %s571 = ssub.s32 128, 128
          %572 = vsyncadd %s566, %s571
          %s573 = smul.addr %s49, 128
          %s574 = scalar_lea.hbm %s1, %s573
          %s576 = sshll.u32 %s569, 4
          %s577 = int_to_ptr.vmem [resolvable:$true] %s576
          %579 = dma.hbm_to_vmem [thread:$0]  %s574, 128, %s577, %s566
        $region24: #{tpu_custom_call.1} parent=15 // pred_fallthru
          _
        // Predicated region
        $region25: #{tpu_custom_call.1} parent=15 // pred_check
          %p580 = pneg %p126
        $region26: #{tpu_custom_call.1} parent=15 // pred_check_branch
          %582 = sbr.rel (%p580) target = $region28
        $region27: #{tpu_custom_call.1} parent=15 // pred_region
          %p583 = scmp.lt.s32.totalorder %s49, 1
          %s584 = scalar_select %p583, %s49, 1
          %s585 = scalar_lea.vmem %s2, %s584
        $region28: #{tpu_custom_call.1} parent=15 // pred_fallthru
          _
        // Predicated region
        $region29: #{tpu_custom_call.1} parent=15 // pred_check
          %p586 = pneg %p152
        $region30: #{tpu_custom_call.1} parent=15 // pred_check_branch
          %588 = sbr.rel (%p586) target = $region32
        $region31: #{tpu_custom_call.1} parent=15 // pred_region
          %p589 = scmp.lt.s32.totalorder %s49, 1
          %s590 = scalar_select %p589, %s49, 1
          %s591 = scalar_lea.vmem %s3, %s590
        $region32: #{tpu_custom_call.1} parent=15 // pred_fallthru
          _
        // Predicated region
        $region33: #{tpu_custom_call.1} parent=15 // pred_check
          %p592 = pneg %p178
        $region34: #{tpu_custom_call.1} parent=15 // pred_check_branch
          %594 = sbr.rel (%p592) target = $region36
        $region35: #{tpu_custom_call.1} parent=15 // pred_region
          %s595 = sand.u32 %s42, 1
          %s596 = scalar_lea.sflag [#allocation7], %s595
          %s597 = sand.u32 %s168, 1
          %s598 = smul.addr %s597, 16
          %s599 = scalar_lea.vmem [#allocation8], %s598
          %s601 = ssub.s32 256, 256
          %602 = vsyncadd %s596, %s601
          %s603 = smul.addr %s49, 2
          %s604 = smul.addr %s603, 128
          %s605 = scalar_lea.hbm %s4, %s604
          %s606 = sshll.u32 %s599, 4
          %s607 = int_to_ptr.vmem [resolvable:$true] %s606
          %612 = dma.hbm_to_vmem [thread:$0]  %s605, 256, %s607, %s596, 128, 128, 8
        $region36: #{tpu_custom_call.1} parent=15 // pred_fallthru
          _
        // Predicated region
        $region37: #{tpu_custom_call.1} parent=15 // pred_check
          %p613 = pneg %p204
        $region38: #{tpu_custom_call.1} parent=15 // pred_check_branch
          %615 = sbr.rel (%p613) target = $region40
        $region39: #{tpu_custom_call.1} parent=15 // pred_region
          %s616 = sand.u32 %s42, 1
          %s617 = scalar_lea.sflag [#allocation10], %s616
          %s618 = sand.u32 %s194, 1
          %s619 = smul.addr %s618, 8
          %s620 = scalar_lea.vmem [#allocation9], %s619
          %s622 = ssub.s32 128, 128
          %623 = vsyncadd %s617, %s622
          %s624 = smul.addr %s49, 128
          %s625 = scalar_lea.hbm %s5, %s624
          %s627 = sshll.u32 %s620, 4
          %s628 = int_to_ptr.vmem [resolvable:$true] %s627
          %630 = dma.hbm_to_vmem [thread:$0]  %s625, 128, %s628, %s617
        $region40: #{tpu_custom_call.1} parent=15 // pred_fallthru
          _
        // Predicated region
        $region41: #{tpu_custom_call.1} parent=15 // pred_check
          %p631 = pneg %p230
        $region42: #{tpu_custom_call.1} parent=15 // pred_check_branch
          %633 = sbr.rel (%p631) target = $region44
        $region43: #{tpu_custom_call.1} parent=15 // pred_region
          %s634 = sand.u32 %s42, 1
          %s635 = scalar_lea.sflag [#allocation10], %s634
          %s636 = sand.u32 %s220, 1
          %s637 = smul.addr %s636, 16
          %s638 = scalar_lea.vmem [#allocation11], %s637
          %s640 = ssub.s32 256, 256
          %641 = vsyncadd %s635, %s640
          %s642 = smul.addr %s50, 4
          %s643 = smul.addr %s642, 64
          %s644 = scalar_lea.hbm %s6, %s643
          %s645 = sshll.u32 %s638, 4
          %s646 = int_to_ptr.vmem [resolvable:$true] %s645
          %651 = dma.hbm_to_vmem [thread:$0]  %s644, 256, %s646, %s635, 64, 64, 4
        $region44: #{tpu_custom_call.1} parent=15 // pred_fallthru
          _
        // Predicated region
        $region45: #{tpu_custom_call.1} parent=15 // pred_check
          %p652 = pneg %p256
        $region46: #{tpu_custom_call.1} parent=15 // pred_check_branch
          %654 = sbr.rel (%p652) target = $region48
        $region47: #{tpu_custom_call.1} parent=15 // pred_region
          %s655 = sand.u32 %s42, 1
          %s656 = scalar_lea.sflag [#allocation13], %s655
          %s657 = sand.u32 %s246, 1
          %s658 = smul.addr %s657, 32
          %s659 = scalar_lea.vmem [#allocation12], %s658
          %s661 = ssub.s32 512, 512
          %662 = vsyncadd %s656, %s661
          %s663 = smul.addr %s50, 8
          %s664 = smul.addr %s663, 64
          %s665 = scalar_lea.hbm %s7, %s664
          %s666 = sshll.u32 %s659, 4
          %s667 = int_to_ptr.vmem [resolvable:$true] %s666
          %672 = dma.hbm_to_vmem [thread:$0]  %s665, 512, %s667, %s656, 64, 64, 4
        $region48: #{tpu_custom_call.1} parent=15 // pred_fallthru
          _
        // Predicated region
        $region49: #{tpu_custom_call.1} parent=15 // pred_check
          %p673 = pneg %p282
        $region50: #{tpu_custom_call.1} parent=15 // pred_check_branch
          %675 = sbr.rel (%p673) target = $region52
        $region51: #{tpu_custom_call.1} parent=15 // pred_region
          %s676 = sand.u32 %s42, 1
          %s677 = scalar_lea.sflag [#allocation13], %s676
          %s678 = sand.u32 %s272, 1
          %s679 = smul.addr %s678, 4
          %s680 = scalar_lea.vmem [#allocation14], %s679
          %s682 = ssub.s32 64, 64
          %683 = vsyncadd %s677, %s682
          %s684 = smul.addr %s50, 64
          %s685 = scalar_lea.hbm %s8, %s684
          %s687 = sshll.u32 %s680, 4
          %s688 = int_to_ptr.vmem [resolvable:$true] %s687
          %690 = dma.hbm_to_vmem [thread:$0]  %s685, 64, %s688, %s677
        $region52: #{tpu_custom_call.1} parent=15 // pred_fallthru
          _
        // Predicated region
        $region53: #{tpu_custom_call.1} parent=15 // pred_check
          %p691 = pneg %p308
        $region54: #{tpu_custom_call.1} parent=15 // pred_check_branch
          %693 = sbr.rel (%p691) target = $region56
        $region55: #{tpu_custom_call.1} parent=15 // pred_region
          %p694 = scmp.lt.s32.totalorder %s50, 1
          %s695 = scalar_select %p694, %s50, 1
          %s696 = smul.addr %s695, 16
          %s697 = smul.addr %s696, 4
          %s698 = scalar_lea.vmem %s9, %s697
        $region56: #{tpu_custom_call.1} parent=15 // pred_fallthru
          _
        // Predicated region
        $region57: #{tpu_custom_call.1} parent=15 // pred_check
          %p699 = pneg %p334
        $region58: #{tpu_custom_call.1} parent=15 // pred_check_branch
          %701 = sbr.rel (%p699) target = $region60
        $region59: #{tpu_custom_call.1} parent=15 // pred_region
          %s702 = sand.u32 %s42, 1
          %s703 = scalar_lea.sflag [#allocation16], %s702
          %s704 = sand.u32 %s324, 1
          %s705 = smul.addr %s704, 4
          %s706 = scalar_lea.vmem [#allocation15], %s705
          %s708 = ssub.s32 64, 64
          %709 = vsyncadd %s703, %s708
          %s710 = smul.addr %s50, 64
          %s711 = scalar_lea.hbm %s10, %s710
          %s713 = sshll.u32 %s706, 4
          %s714 = int_to_ptr.vmem [resolvable:$true] %s713
          %716 = dma.hbm_to_vmem [thread:$0]  %s711, 64, %s714, %s703
        $region60: #{tpu_custom_call.1} parent=15 // pred_fallthru
          _
        // Predicated region
        $region61: #{tpu_custom_call.1} parent=15 // pred_check
          %p717 = pneg %p360
        $region62: #{tpu_custom_call.1} parent=15 // pred_check_branch
          %719 = sbr.rel (%p717) target = $region64
        $region63: #{tpu_custom_call.1} parent=15 // pred_region
          %s720 = sand.u32 %s42, 1
          %s721 = scalar_lea.sflag [#allocation16], %s720
          %s722 = sand.u32 %s350, 1
          %s723 = smul.addr %s722, 16
          %s724 = scalar_lea.vmem [#allocation17], %s723
          %s726 = ssub.s32 256, 256
          %727 = vsyncadd %s721, %s726
          %s728 = smul.addr %s50, 4
          %s729 = smul.addr %s728, 64
          %s730 = scalar_lea.hbm %s11, %s729
          %s731 = sshll.u32 %s724, 4
          %s732 = int_to_ptr.vmem [resolvable:$true] %s731
          %737 = dma.hbm_to_vmem [thread:$0]  %s730, 256, %s732, %s721, 64, 64, 4
        $region64: #{tpu_custom_call.1} parent=15 // pred_fallthru
          _
        // Predicated region
        $region65: #{tpu_custom_call.1} parent=15 // pred_check
          %p738 = pneg %p386
        $region66: #{tpu_custom_call.1} parent=15 // pred_check_branch
          %740 = sbr.rel (%p738) target = $region68
        $region67: #{tpu_custom_call.1} parent=15 // pred_region
          %p741 = scmp.lt.s32.totalorder %s50, 1
          %s742 = scalar_select %p741, %s50, 1
          %s743 = scalar_lea.vmem %s12, %s742
        $region68: #{tpu_custom_call.1} parent=15 // pred_fallthru
          _
        // Predicated region
        $region69: #{tpu_custom_call.1} parent=15 // pred_check
          %p744 = pneg %p412
        $region70: #{tpu_custom_call.1} parent=15 // pred_check_branch
          %746 = sbr.rel (%p744) target = $region72
        $region71: #{tpu_custom_call.1} parent=15 // pred_region
          %p747 = scmp.lt.s32.totalorder %s50, 1
          %s748 = scalar_select %p747, %s50, 1
          %s749 = smul.addr %s748, 8
          %s750 = smul.addr %s749, 4
          %s751 = scalar_lea.vmem %s13, %s750
        $region72: #{tpu_custom_call.1} parent=15 // pred_fallthru
          _
        // Predicated region
        $region73: #{tpu_custom_call.1} parent=15 // pred_check
          %p752 = pneg %p438
        $region74: #{tpu_custom_call.1} parent=15 // pred_check_branch
          %754 = sbr.rel (%p752) target = $region76
        $region75: #{tpu_custom_call.1} parent=15 // pred_region
          %p755 = scmp.lt.s32.totalorder %s50, 1
          %s756 = scalar_select %p755, %s50, 1
          %s757 = scalar_lea.vmem %s14, %s756
        $region76: #{tpu_custom_call.1} parent=15 // pred_fallthru
          _
        // Predicated region
        $region77: #{tpu_custom_call.1} parent=15 // pred_check
          %p758 = pneg %p464
        $region78: #{tpu_custom_call.1} parent=15 // pred_check_branch
          %760 = sbr.rel (%p758) target = $region80
        $region79: #{tpu_custom_call.1} parent=15 // pred_region
          %p761 = scmp.lt.s32.totalorder %s50, 1
          %s762 = scalar_select %p761, %s50, 1
          %s763 = smul.addr %s762, 8
          %s764 = scalar_lea.vmem %s15, %s763
        $region80: #{tpu_custom_call.1} parent=15 // pred_fallthru
          _
      $region16: #{tpu_custom_call.1} parent=5 // pred_fallthru
        _
      %p765 = scmp.le.s32.totalorder 1, %s42
      %p766 = scmp.lt.s32.totalorder %s42, 5
      %p767 = pnand %p765, %p766
      %p768 = pneg %p767
      // Predicated region
      $region81: #{tpu_custom_call.1} parent=5 // pred_check
        _
      $region82: #{tpu_custom_call.1} parent=5 // pred_check_branch
        %770 = sbr.rel (%p767) target = $region84
      $region83: #{tpu_custom_call.1} parent=5 // pred_region
        %s771 = ssub.s32 %s42, 1
        %s772 = sand.u32 %s67, 1
        %s773 = scalar_lea.sflag [#allocation4], %s772
        %s774 = sand.u32 %s67, 1
        %s775 = smul.addr %s774, 16
        %s776 = scalar_lea.vmem [#allocation3], %s775
        // Predicated region
        $region85: #{tpu_custom_call.1} parent=83 // pred_check
          %p777 = pneg %p80
        $region86: #{tpu_custom_call.1} parent=83 // pred_check_branch
          %779 = sbr.rel (%p777) target = $region88
        $region87: #{tpu_custom_call.1} parent=83 // pred_region
          %780 = dma.done %s773, 256
        $region88: #{tpu_custom_call.1} parent=83 // pred_fallthru
          _
        %s781 = sand.u32 %s47, 1
        %s782 = scalar_lea.sflag [#allocation7], %s781
        %s783 = sand.u32 %s93, 1
        %s784 = smul.addr %s783, 8
        %s785 = scalar_lea.vmem [#allocation6], %s784
        // Predicated region
        $region89: #{tpu_custom_call.1} parent=83 // pred_check
          %p786 = pneg %p106
        $region90: #{tpu_custom_call.1} parent=83 // pred_check_branch
          %788 = sbr.rel (%p786) target = $region92
        $region91: #{tpu_custom_call.1} parent=83 // pred_region
          %789 = dma.done %s782, 128
        $region92: #{tpu_custom_call.1} parent=83 // pred_fallthru
          _
        %s790 = sand.u32 %s47, 1
        %s791 = scalar_lea.sflag [#allocation7], %s790
        %s792 = sand.u32 %s171, 1
        %s793 = smul.addr %s792, 16
        %s794 = scalar_lea.vmem [#allocation8], %s793
        // Predicated region
        $region93: #{tpu_custom_call.1} parent=83 // pred_check
          %p795 = pneg %p184
        $region94: #{tpu_custom_call.1} parent=83 // pred_check_branch
          %797 = sbr.rel (%p795) target = $region96
        $region95: #{tpu_custom_call.1} parent=83 // pred_region
          %798 = dma.done %s791, 256
        $region96: #{tpu_custom_call.1} parent=83 // pred_fallthru
          _
        %s799 = sand.u32 %s47, 1
        %s800 = scalar_lea.sflag [#allocation10], %s799
        %s801 = sand.u32 %s197, 1
        %s802 = smul.addr %s801, 8
        %s803 = scalar_lea.vmem [#allocation9], %s802
        // Predicated region
        $region97: #{tpu_custom_call.1} parent=83 // pred_check
          %p804 = pneg %p210
        $region98: #{tpu_custom_call.1} parent=83 // pred_check_branch
          %806 = sbr.rel (%p804) target = $region100
        $region99: #{tpu_custom_call.1} parent=83 // pred_region
          %807 = dma.done %s800, 128
        $region100: #{tpu_custom_call.1} parent=83 // pred_fallthru
          _
        %s808 = sand.u32 %s47, 1
        %s809 = scalar_lea.sflag [#allocation10], %s808
        %s810 = sand.u32 %s223, 1
        %s811 = smul.addr %s810, 16
        %s812 = scalar_lea.vmem [#allocation11], %s811
        // Predicated region
        $region101: #{tpu_custom_call.1} parent=83 // pred_check
          %p813 = pneg %p236
        $region102: #{tpu_custom_call.1} parent=83 // pred_check_branch
          %815 = sbr.rel (%p813) target = $region104
        $region103: #{tpu_custom_call.1} parent=83 // pred_region
          %816 = dma.done %s809, 256
        $region104: #{tpu_custom_call.1} parent=83 // pred_fallthru
          _
        %s817 = sand.u32 %s47, 1
        %s818 = scalar_lea.sflag [#allocation13], %s817
        %s819 = sand.u32 %s249, 1
        %s820 = smul.addr %s819, 32
        %s821 = scalar_lea.vmem [#allocation12], %s820
        // Predicated region
        $region105: #{tpu_custom_call.1} parent=83 // pred_check
          %p822 = pneg %p262
        $region106: #{tpu_custom_call.1} parent=83 // pred_check_branch
          %824 = sbr.rel (%p822) target = $region108
        $region107: #{tpu_custom_call.1} parent=83 // pred_region
          %825 = dma.done %s818, 512
        $region108: #{tpu_custom_call.1} parent=83 // pred_fallthru
          _
        %s826 = sand.u32 %s47, 1
        %s827 = scalar_lea.sflag [#allocation13], %s826
        %s828 = sand.u32 %s275, 1
        %s829 = smul.addr %s828, 4
        %s830 = scalar_lea.vmem [#allocation14], %s829
        // Predicated region
        $region109: #{tpu_custom_call.1} parent=83 // pred_check
          %p831 = pneg %p288
        $region110: #{tpu_custom_call.1} parent=83 // pred_check_branch
          %833 = sbr.rel (%p831) target = $region112
        $region111: #{tpu_custom_call.1} parent=83 // pred_region
          %834 = dma.done %s827, 64
        $region112: #{tpu_custom_call.1} parent=83 // pred_fallthru
          _
        %s835 = sand.u32 %s47, 1
        %s836 = scalar_lea.sflag [#allocation16], %s835
        %s837 = sand.u32 %s327, 1
        %s838 = smul.addr %s837, 4
        %s839 = scalar_lea.vmem [#allocation15], %s838
        // Predicated region
        $region113: #{tpu_custom_call.1} parent=83 // pred_check
          %p840 = pneg %p340
        $region114: #{tpu_custom_call.1} parent=83 // pred_check_branch
          %842 = sbr.rel (%p840) target = $region116
        $region115: #{tpu_custom_call.1} parent=83 // pred_region
          %843 = dma.done %s836, 64
        $region116: #{tpu_custom_call.1} parent=83 // pred_fallthru
          _
        %s844 = sand.u32 %s47, 1
        %s845 = scalar_lea.sflag [#allocation16], %s844
        %s846 = sand.u32 %s353, 1
        %s847 = smul.addr %s846, 16
        %s848 = scalar_lea.vmem [#allocation17], %s847
        // Predicated region
        $region117: #{tpu_custom_call.1} parent=83 // pred_check
          %p849 = pneg %p366
        $region118: #{tpu_custom_call.1} parent=83 // pred_check_branch
          %851 = sbr.rel (%p849) target = $region120
        $region119: #{tpu_custom_call.1} parent=83 // pred_region
          %852 = dma.done %s845, 256
        $region120: #{tpu_custom_call.1} parent=83 // pred_fallthru
          _
        %s853 = sand.u32 %s67, 1
        %s854 = scalar_lea.sflag [#allocation4], %s853
        %s855 = sand.u32 %s67, 1
        %s856 = smul.addr %s855, 16
        %s857 = scalar_lea.vmem [#allocation3], %s856
        %p858 = pneg %p80
        %p859 = pneg %p77
        %s860 = sand.u32 %s47, 1
        %s861 = scalar_lea.sflag [#allocation7], %s860
        %s862 = sand.u32 %s93, 1
        %s863 = smul.addr %s862, 8
        %s864 = scalar_lea.vmem [#allocation6], %s863
        %p865 = pneg %p106
        %p866 = pneg %p103
        %p867 = scmp.lt.s32.totalorder %s51, 1
        %s868 = scalar_select %p867, %s51, 1
        %s869 = scalar_lea.vmem %s2, %s868
        %p870 = pneg %p132
        %p871 = pneg %p129
        %p872 = scmp.lt.s32.totalorder %s51, 1
        %s873 = scalar_select %p872, %s51, 1
        %s874 = scalar_lea.vmem %s3, %s873
        %p875 = pneg %p158
        %p876 = pneg %p155
        %s877 = sand.u32 %s47, 1
        %s878 = scalar_lea.sflag [#allocation7], %s877
        %s879 = sand.u32 %s171, 1
        %s880 = smul.addr %s879, 16
        %s881 = scalar_lea.vmem [#allocation8], %s880
        %p882 = pneg %p184
        %p883 = pneg %p181
        %s884 = sand.u32 %s47, 1
        %s885 = scalar_lea.sflag [#allocation10], %s884
        %s886 = sand.u32 %s197, 1
        %s887 = smul.addr %s886, 8
        %s888 = scalar_lea.vmem [#allocation9], %s887
        %p889 = pneg %p210
        %p890 = pneg %p207
        %s891 = sand.u32 %s47, 1
        %s892 = scalar_lea.sflag [#allocation10], %s891
        %s893 = sand.u32 %s223, 1
        %s894 = smul.addr %s893, 16
        %s895 = scalar_lea.vmem [#allocation11], %s894
        %p896 = pneg %p236
        %p897 = pneg %p233
        %s898 = sand.u32 %s47, 1
        %s899 = scalar_lea.sflag [#allocation13], %s898
        %s900 = sand.u32 %s249, 1
        %s901 = smul.addr %s900, 32
        %s902 = scalar_lea.vmem [#allocation12], %s901
        %p903 = pneg %p262
        %p904 = pneg %p259
        %s905 = sand.u32 %s47, 1
        %s906 = scalar_lea.sflag [#allocation13], %s905
        %s907 = sand.u32 %s275, 1
        %s908 = smul.addr %s907, 4
        %s909 = scalar_lea.vmem [#allocation14], %s908
        %p910 = pneg %p288
        %p911 = pneg %p285
        %p912 = scmp.lt.s32.totalorder %s52, 1
        %s913 = scalar_select %p912, %s52, 1
        %s914 = smul.addr %s913, 16
        %s915 = smul.addr %s914, 4
        %s916 = scalar_lea.vmem %s9, %s915
        %p917 = pneg %p314
        %p918 = pneg %p311
        %s919 = sand.u32 %s47, 1
        %s920 = scalar_lea.sflag [#allocation16], %s919
        %s921 = sand.u32 %s327, 1
        %s922 = smul.addr %s921, 4
        %s923 = scalar_lea.vmem [#allocation15], %s922
        %p924 = pneg %p340
        %p925 = pneg %p337
        %s926 = sand.u32 %s47, 1
        %s927 = scalar_lea.sflag [#allocation16], %s926
        %s928 = sand.u32 %s353, 1
        %s929 = smul.addr %s928, 16
        %s930 = scalar_lea.vmem [#allocation17], %s929
        %p931 = pneg %p366
        %p932 = pneg %p363
        %p933 = scmp.lt.s32.totalorder %s52, 1
        %s934 = scalar_select %p933, %s52, 1
        %s935 = scalar_lea.vmem %s12, %s934
        %p936 = pneg %p392
        %p937 = pneg %p389
        %p938 = scmp.lt.s32.totalorder %s52, 1
        %s939 = scalar_select %p938, %s52, 1
        %s940 = smul.addr %s939, 8
        %s941 = smul.addr %s940, 4
        %s942 = scalar_lea.vmem %s13, %s941
        %p943 = pneg %p418
        %p944 = pneg %p415
        %p945 = scmp.lt.s32.totalorder %s52, 1
        %s946 = scalar_select %p945, %s52, 1
        %s947 = scalar_lea.vmem %s14, %s946
        %p948 = pneg %p444
        %p949 = pneg %p441
        %p950 = scmp.lt.s32.totalorder %s52, 1
        %s951 = scalar_select %p950, %s52, 1
        %s952 = smul.addr %s951, 8
        %s953 = scalar_lea.vmem %s15, %s952
        %p954 = pneg %p470
        %p955 = pneg %p467
        %p956 = pneg %p496
        %p957 = pneg %p493
        %s958 = sand.u32 %s483, 1
        %s959 = scalar_lea.sflag [#allocation5], %s958
        %s960 = sand.u32 %s483, 1
        %s961 = smul.addr %s960, 16
        %s962 = scalar_lea.vmem [#allocation18], %s961
        %p963 = pneg %p522
        %p964 = pneg %p519
        %p965 = scmp.lt.s32.totalorder %s51, 1
        %s966 = scalar_select %p965, %s51, 1
        %s967 = smul.addr %s966, 2
        %s968 = smul.addr %s967, 8
        %s969 = scalar_lea.vmem %s17, %s968
        %p970 = scmp.lt.s32.totalorder %s51, 1
        %s971 = scalar_select %p970, %s51, 1
        %s972 = scalar_lea.vmem %s2, %s971
        %p973 = scmp.lt.s32.totalorder %s51, 1
        %s974 = scalar_select %p973, %s51, 1
        %s975 = scalar_lea.vmem %s3, %s974
        %p976 = scmp.lt.s32.totalorder %s52, 1
        %s977 = scalar_select %p976, %s52, 1
        %s978 = smul.addr %s977, 16
        %s979 = smul.addr %s978, 4
        %s980 = scalar_lea.vmem %s9, %s979
        %p981 = scmp.lt.s32.totalorder %s52, 1
        %s982 = scalar_select %p981, %s52, 1
        %s983 = scalar_lea.vmem %s12, %s982
        %p984 = scmp.lt.s32.totalorder %s52, 1
        %s985 = scalar_select %p984, %s52, 1
        %s986 = smul.addr %s985, 8
        %s987 = smul.addr %s986, 4
        %s988 = scalar_lea.vmem %s13, %s987
        %p989 = scmp.lt.s32.totalorder %s52, 1
        %s990 = scalar_select %p989, %s52, 1
        %s991 = scalar_lea.vmem %s14, %s990
        %p992 = scmp.lt.s32.totalorder %s52, 1
        %s993 = scalar_select %p992, %s52, 1
        %s994 = smul.addr %s993, 8
        %s995 = scalar_lea.vmem %s15, %s994
        %p996 = scmp.lt.s32.totalorder %s51, 1
        %s997 = scalar_select %p996, %s51, 1
        %s998 = smul.addr %s997, 2
        %s999 = smul.addr %s998, 8
        %s1000 = scalar_lea.vmem %s17, %s999
        %p1002 = scmp.eq.s32.totalorder %s52, 0
        // Predicated region
        $region121: #{tpu_custom_call.1} parent=83 // pred_check
          %p1003 = pneg %p1002
        $region122: #{tpu_custom_call.1} parent=83 // pred_check_branch
          %1005 = sbr.rel (%p1003) target = $region124
        $region123: #{tpu_custom_call.1} parent=83 // pred_region
          %v1006 = vld [vmem:[%s776] sm:$0xff]
          %v1007 = vld [vmem:[%s776 + $0x8] sm:$0xff]
          %vm1008 = vcmask 261120
          %1009 = vst.msk [vmem:[%s962] sm:$0xff] %vm1008, %v1006
          %1010 = vst.msk [vmem:[%s962 + $0x8] sm:$0xff] %vm1008, %v1007
        $region124: #{tpu_custom_call.1} parent=83 // pred_fallthru
          _
        %v1011 = vld [vmem:[%s962] sm:$0xff]
        %v1012 = vld [vmem:[%s962 + $0x8] sm:$0xff]
        %v1013 = vld [vmem:[%s785] sm:$0xff]
        %v1014 = vld [vmem:[%s794] sm:$0xff]
        %v1015 = vld [vmem:[%s794 + $0x8] sm:$0xff]
        %v1016 = vld [vmem:[%s803] sm:$0xff]
        %v1017 = vld [vmem:[%s972] sm:$0x1]
        %v1018 = vld [vmem:[%s975] sm:$0x1]
        %v1019 = vld [vmem:[%s995] sm:$0x3f]
        %v1020 = vld [vmem:[%s830] sm:$0xf]
        %v1021 = vld [vmem:[%s839] sm:$0xf]
        %v1022 = vadd.f32 %v1011, %v1014
        %v1023 = vadd.f32 %v1012, %v1015
        %v1024 = vpack.c.bf16 %v1023, %v1022
        %v1025 = vld [vmem:[%s812] sm:$0xf]
        %v1026 = vld [vmem:[%s812 + $0x4] sm:$0xf]
        %v1027 = vld [vmem:[%s812 + $0x8] sm:$0xf]
        %v1028 = vld [vmem:[%s812 + $0xc] sm:$0xf]
        %v1033 = vunpack.c.l.b16 %v1025
        %v1034 = vunpack.c.l.b16 %v1026
        %v1035 = vunpack.c.l.b16 %v1027
        %v1036 = vunpack.c.l.b16 %v1028
        %v1037 = vpack.c.b16 %v1034, %v1033
        %v1038 = vpack.c.b16 %v1036, %v1035
        %vm1041 = vcmask 261120
        %v1043 = vsel %vm1041, %v1024, 0
        %1045 = vmatprep.subr.bf16.mxu0 0
        %1046 = vmatpush1.bf16.msra.mxu0 0
        %1047 = vmatprep.subr.bf16.mxu0 0
        %1048 = vmatpush1.bf16.msra.mxu0 0
        %1049 = vmatprep.subr.bf16.mxu0 0
        %1050 = vmatpush1.bf16.msra.mxu0 0
        %1051 = vmatprep.subr.bf16.mxu0 0
        %1052 = vmatpush1.bf16.msra.mxu0 0
        %1053 = vmatprep.subr.bf16.mxu0 0
        %1054 = vmatpush1.bf16.msra.mxu0 0
        %1055 = vmatprep.subr.bf16.mxu0 0
        %1056 = vmatpush1.bf16.msra.mxu0 0
        %1057 = vmatprep.subr.bf16.mxu0 0
        %1058 = vmatpush1.bf16.msra.mxu0 %v1038
        %1059 = vmatprep.subr.bf16.mxu0 0
        %1060 = vmatpush1.bf16.msra.mxu0 %v1037
        %1061 = vmatprep.subr.bf16.mxu0 0
        %1062 = vmatpush2.bf16.msra.mxu0 0
        %1063 = vmatprep.subr.bf16.mxu0 0
        %1064 = vmatpush2.bf16.msra.mxu0 0
        %1065 = vmatprep.subr.bf16.mxu0 0
        %1066 = vmatpush2.bf16.msra.mxu0 0
        %1067 = vmatprep.subr.bf16.mxu0 0
        %1068 = vmatpush2.bf16.msra.mxu0 0
        %1069 = vmatprep.subr.bf16.mxu0 0
        %1070 = vmatpush2.bf16.msra.mxu0 0
        %1071 = vmatprep.subr.bf16.mxu0 0
        %1072 = vmatpush2.bf16.msra.mxu0 0
        %1073 = vmatprep.subr.bf16.mxu0 0
        %1074 = vmatpush2.bf16.msra.mxu0 0
        %1075 = vmatprep.subr.bf16.mxu0 0
        %1076 = vmatpush2.bf16.msra.mxu0 0
        %1077 = vmatprep.mubr.bf16.mxu0 0
        %1078 = vmatmul.mubr.bf16.gmra.mxu0 %v1043
        %v1079 = vpop.f32.mrf.mxu0
        %v1080 = vadd.f32 0.0, %v1079
        %v1081 = vpop.f32.mrf.mxu0
        %v1082 = vpop.f32.mrf.mxu0
        %v1083 = vadd.f32 0.0, %v1082
        %v1084 = vpop.f32.mrf.mxu0
        %1085 = vdwg.mxu0
        %v1086 = vlaneseq
        %v1087 = vshrl.u32 %v1086, 7
        %v1088 = vsub.s32 0, %v1087
        %v1089 = vrot.slane %v1020, %v1088
        %v1090 = vadd.f32 %v1080, %v1089
        %v1091 = vadd.f32 %v1083, %v1089
        %v1092 = vlaneseq
        %v1093 = vshrl.u32 %v1092, 7
        %v1094 = vsub.s32 1, %v1093
        %v1095 = vrot.slane %v1020, %v1094
        %1097 = vrot.lane.b32.xlu0 %v1095, 32
        %v1098 = vpop.permute.xlu0 %1097
        %v1100 = vadd.f32 %v1080, %v1098
        %v1101 = vadd.f32 %v1083, %v1098
        %v1102 = vpack.c.bf16 %v1012, %v1011
        %v1103 = vld [vmem:[%s821] sm:$0xf]
        %v1104 = vld [vmem:[%s821 + $0x4] sm:$0xf]
        %v1105 = vld [vmem:[%s821 + $0x8] sm:$0xf]
        %v1106 = vld [vmem:[%s821 + $0xc] sm:$0xf]
        %v1107 = vlaneseq
        %v1108 = vshrl.u32 %v1107, 7
        %v1109 = vsub.s32 2, %v1108
        %v1110 = vrot.slane %v1020, %v1109
        %v1115 = vunpack.c.l.b16 %v1103
        %v1116 = vunpack.c.l.b16 %v1104
        %v1117 = vunpack.c.l.b16 %v1105
        %v1118 = vunpack.c.l.b16 %v1106
        %v1119 = vpack.c.b16 %v1116, %v1115
        %v1120 = vpack.c.b16 %v1118, %v1117
        %v1124 = vsel %vm1041, %v1102, 0
        %1126 = vmatprep.subr.bf16.mxu0 0
        %1127 = vmatpush1.bf16.msra.mxu0 0
        %1128 = vmatprep.subr.bf16.mxu0 0
        %1129 = vmatpush1.bf16.msra.mxu0 0
        %1130 = vmatprep.subr.bf16.mxu0 0
        %1131 = vmatpush1.bf16.msra.mxu0 0
        %1132 = vmatprep.subr.bf16.mxu0 0
        %1133 = vmatpush1.bf16.msra.mxu0 0
        %1134 = vmatprep.subr.bf16.mxu0 0
        %1135 = vmatpush1.bf16.msra.mxu0 0
        %1136 = vmatprep.subr.bf16.mxu0 0
        %1137 = vmatpush1.bf16.msra.mxu0 0
        %1138 = vmatprep.subr.bf16.mxu0 0
        %1139 = vmatpush1.bf16.msra.mxu0 %v1120
        %1140 = vmatprep.subr.bf16.mxu0 0
        %1141 = vmatpush1.bf16.msra.mxu0 %v1119
        %1142 = vmatprep.subr.bf16.mxu0 0
        %1143 = vmatpush2.bf16.msra.mxu0 0
        %1144 = vmatprep.subr.bf16.mxu0 0
        %1145 = vmatpush2.bf16.msra.mxu0 0
        %1146 = vmatprep.subr.bf16.mxu0 0
        %1147 = vmatpush2.bf16.msra.mxu0 0
        %1148 = vmatprep.subr.bf16.mxu0 0
        %1149 = vmatpush2.bf16.msra.mxu0 0
        %1150 = vmatprep.subr.bf16.mxu0 0
        %1151 = vmatpush2.bf16.msra.mxu0 0
        %1152 = vmatprep.subr.bf16.mxu0 0
        %1153 = vmatpush2.bf16.msra.mxu0 0
        %1154 = vmatprep.subr.bf16.mxu0 0
        %1155 = vmatpush2.bf16.msra.mxu0 0
        %1156 = vmatprep.subr.bf16.mxu0 0
        %1157 = vmatpush2.bf16.msra.mxu0 0
        %1158 = vmatprep.mubr.bf16.mxu0 0
        %1159 = vmatmul.mubr.bf16.gmra.mxu0 %v1124
        %v1160 = vpop.f32.mrf.mxu0
        %v1161 = vadd.f32 %v1110, %v1160
        %v1162 = vpop.f32.mrf.mxu0
        %v1163 = vpop.f32.mrf.mxu0
        %v1164 = vadd.f32 %v1110, %v1163
        %v1165 = vpop.f32.mrf.mxu0
        %1166 = vdwg.mxu0
        %v1167 = vpack.c.bf16 %v1091, %v1090
        %v1168 = vpack.c.bf16 %v1101, %v1100
        %v1169 = vpack.c.bf16 %v1164, %v1161
        %v1171 = vlaneseq
        %v1172 = vshrl.u32 %v1171, 7
        %v1173 = vsub.s32 0, %v1172
        %v1174 = vrot.slane %v1017, %v1173
        %1177 = vrot.lane.b32.xlu0 %v1168, 96
        %v1178 = vpop.permute.xlu0 %1177
        %vm1179 = vcmask 64512
        %v1181 = vsel %vm1179, %v1167, 0
        %v1184 = vsel %vm1179, %v1178, 0
        %1186 = vmatprep.subr.bf16.mxu0 0
        %1187 = vmatpush1.bf16.xpose.msra.mxu0 0
        %1188 = vmatprep.subr.bf16.mxu0 0
        %1189 = vmatpush1.bf16.xpose.msra.mxu0 0
        %1190 = vmatprep.subr.bf16.mxu0 0
        %1191 = vmatpush1.bf16.xpose.msra.mxu0 0
        %1192 = vmatprep.subr.bf16.mxu0 0
        %1193 = vmatpush1.bf16.xpose.msra.mxu0 0
        %1194 = vmatprep.subr.bf16.mxu0 0
        %1195 = vmatpush1.bf16.xpose.msra.mxu0 0
        %1196 = vmatprep.subr.bf16.mxu0 0
        %1197 = vmatpush1.bf16.xpose.msra.mxu0 0
        %1198 = vmatprep.subr.bf16.mxu0 0
        %1199 = vmatpush1.bf16.xpose.msra.mxu0 0
        %1200 = vmatprep.subr.bf16.mxu0 0
        %1201 = vmatpush1.bf16.xpose.msra.mxu0 %v1184
        %1202 = vmatprep.subr.bf16.mxu0 0
        %1203 = vmatpush2.bf16.xpose.msra.mxu0 0
        %1204 = vmatprep.subr.bf16.mxu0 0
        %1205 = vmatpush2.bf16.xpose.msra.mxu0 0
        %1206 = vmatprep.subr.bf16.mxu0 0
        %1207 = vmatpush2.bf16.xpose.msra.mxu0 0
        %1208 = vmatprep.subr.bf16.mxu0 0
        %1209 = vmatpush2.bf16.xpose.msra.mxu0 0
        %1210 = vmatprep.subr.bf16.mxu0 0
        %1211 = vmatpush2.bf16.xpose.msra.mxu0 0
        %1212 = vmatprep.subr.bf16.mxu0 0
        %1213 = vmatpush2.bf16.xpose.msra.mxu0 0
        %1214 = vmatprep.subr.bf16.mxu0 0
        %1215 = vmatpush2.bf16.xpose.msra.mxu0 0
        %1216 = vmatprep.subr.bf16.mxu0 0
        %1217 = vmatpush2.bf16.xpose.msra.mxu0 0
        %1218 = vmatprep.mubr.bf16.mxu0 0
        %1219 = vmatmul.mubr.bf16.gmra.mxu0 %v1181
        %v1220 = vpop.f32.mrf.mxu0
        %v1221 = vadd.f32 %v1174, %v1220
        %v1222 = vpop.f32.mrf.mxu0
        %v1223 = vpop.f32.mrf.mxu0
        %v1224 = vadd.f32 %v1174, %v1223
        %v1225 = vpop.f32.mrf.mxu0
        %1226 = vdwg.mxu0
        %vm1227 = vcmask 130048
        %v1228 = vsel %vm1227, %v1221, -inf
        %1229 = vmax.xlane.f32.xlu0 %v1228
        %v1230 = vpop.xlane.xlu0 %1229
        %v1231 = vsel %vm1227, %v1224, -inf
        %1232 = vmax.xlane.f32.xlu0 %v1231
        %v1233 = vpop.xlane.xlu0 %1232
        %v1234 = vsub.f32 %v1221, %v1230
        %v1235 = vsub.f32 %v1224, %v1233
        %v1236 = vmul.f32 %v1234, 1.442695
        %v1237 = vpow.pop %v1236
        %v1238 = vmul.f32 %v1235, 1.442695
        %v1239 = vpow.pop %v1238
        %v1240 = vsel %vm1227, %v1237, 0.0
        %1241 = vadd.xlane.f32.xlu0 %v1240
        %v1242 = vpop.xlane.xlu0 %1241
        %v1243 = vsel %vm1227, %v1239, 0.0
        %1244 = vadd.xlane.f32.xlu0 %v1243
        %v1245 = vpop.xlane.xlu0 %1244
        %v1246 = vrcp.pop %v1242
        %v1247 = vrcp.pop %v1245
        %v1248 = vmul.f32 %v1237, %v1246
        %v1249 = vmul.f32 %v1239, %v1247
        %v1250 = vpack.c.bf16 %v1249, %v1248
        %v1252 = vsel %vm1227, %v1250, 0
        %1254 = vmatprep.subr.bf16.mxu0 0
        %1255 = vmatpush1.bf16.msra.mxu0 0
        %1256 = vmatprep.subr.bf16.mxu0 0
        %1257 = vmatpush1.bf16.msra.mxu0 0
        %1258 = vmatprep.subr.bf16.mxu0 0
        %1259 = vmatpush1.bf16.msra.mxu0 0
        %1260 = vmatprep.subr.bf16.mxu0 0
        %1261 = vmatpush1.bf16.msra.mxu0 0
        %1262 = vmatprep.subr.bf16.mxu0 0
        %1263 = vmatpush1.bf16.msra.mxu0 0
        %1264 = vmatprep.subr.bf16.mxu0 0
        %1265 = vmatpush1.bf16.msra.mxu0 0
        %1266 = vmatprep.subr.bf16.mxu0 0
        %1267 = vmatpush1.bf16.msra.mxu0 0
        %1268 = vmatprep.subr.bf16.mxu0 0
        %1269 = vmatpush1.bf16.msra.mxu0 %v1169
        %1270 = vmatprep.subr.bf16.mxu0 0
        %1271 = vmatpush2.bf16.msra.mxu0 0
        %1272 = vmatprep.subr.bf16.mxu0 0
        %1273 = vmatpush2.bf16.msra.mxu0 0
        %1274 = vmatprep.subr.bf16.mxu0 0
        %1275 = vmatpush2.bf16.msra.mxu0 0
        %1276 = vmatprep.subr.bf16.mxu0 0
        %1277 = vmatpush2.bf16.msra.mxu0 0
        %1278 = vmatprep.subr.bf16.mxu0 0
        %1279 = vmatpush2.bf16.msra.mxu0 0
        %1280 = vmatprep.subr.bf16.mxu0 0
        %1281 = vmatpush2.bf16.msra.mxu0 0
        %1282 = vmatprep.subr.bf16.mxu0 0
        %1283 = vmatpush2.bf16.msra.mxu0 0
        %1284 = vmatprep.subr.bf16.mxu0 0
        %1285 = vmatpush2.bf16.msra.mxu0 0
        %1286 = vmatprep.mubr.bf16.mxu0 0
        %1287 = vmatmul.mubr.bf16.gmra.mxu0 %v1252
        %v1288 = vpop.f32.mrf.mxu0
        %v1289 = vadd.f32 0.0, %v1288
        %v1290 = vpop.f32.mrf.mxu0
        %v1291 = vpop.f32.mrf.mxu0
        %v1292 = vadd.f32 0.0, %v1291
        %v1293 = vpop.f32.mrf.mxu0
        %1294 = vdwg.mxu0
        %1295 = vst.msk [vmem:[#allocation2] sm:$0xff] %vm1179, %v1289
        %1296 = vst.msk [vmem:[#allocation2 + $0x8] sm:$0xff] %vm1179, %v1292
        %1298 = vrot.lane.b32.xlu0 %v1167, 120
        %v1299 = vpop.permute.xlu0 %1298
        %1300 = vrot.lane.b32.xlu0 %v1168, 88
        %v1301 = vpop.permute.xlu0 %1300
        %v1303 = vsel %vm1179, %v1299, 0
        %v1306 = vsel %vm1179, %v1301, 0
        %1308 = vmatprep.subr.bf16.mxu0 0
        %1309 = vmatpush1.bf16.xpose.msra.mxu0 0
        %1310 = vmatprep.subr.bf16.mxu0 0
        %1311 = vmatpush1.bf16.xpose.msra.mxu0 0
        %1312 = vmatprep.subr.bf16.mxu0 0
        %1313 = vmatpush1.bf16.xpose.msra.mxu0 0
        %1314 = vmatprep.subr.bf16.mxu0 0
        %1315 = vmatpush1.bf16.xpose.msra.mxu0 0
        %1316 = vmatprep.subr.bf16.mxu0 0
        %1317 = vmatpush1.bf16.xpose.msra.mxu0 0
        %1318 = vmatprep.subr.bf16.mxu0 0
        %1319 = vmatpush1.bf16.xpose.msra.mxu0 0
        %1320 = vmatprep.subr.bf16.mxu0 0
        %1321 = vmatpush1.bf16.xpose.msra.mxu0 0
        %1322 = vmatprep.subr.bf16.mxu0 0
        %1323 = vmatpush1.bf16.xpose.msra.mxu0 %v1306
        %1324 = vmatprep.subr.bf16.mxu0 0
        %1325 = vmatpush2.bf16.xpose.msra.mxu0 0
        %1326 = vmatprep.subr.bf16.mxu0 0
        %1327 = vmatpush2.bf16.xpose.msra.mxu0 0
        %1328 = vmatprep.subr.bf16.mxu0 0
        %1329 = vmatpush2.bf16.xpose.msra.mxu0 0
        %1330 = vmatprep.subr.bf16.mxu0 0
        %1331 = vmatpush2.bf16.xpose.msra.mxu0 0
        %1332 = vmatprep.subr.bf16.mxu0 0
        %1333 = vmatpush2.bf16.xpose.msra.mxu0 0
        %1334 = vmatprep.subr.bf16.mxu0 0
        %1335 = vmatpush2.bf16.xpose.msra.mxu0 0
        %1336 = vmatprep.subr.bf16.mxu0 0
        %1337 = vmatpush2.bf16.xpose.msra.mxu0 0
        %1338 = vmatprep.subr.bf16.mxu0 0
        %1339 = vmatpush2.bf16.xpose.msra.mxu0 0
        %1340 = vmatprep.mubr.bf16.mxu0 0
        %1341 = vmatmul.mubr.bf16.gmra.mxu0 %v1303
        %v1342 = vpop.f32.mrf.mxu0
        %v1343 = vadd.f32 %v1174, %v1342
        %v1344 = vpop.f32.mrf.mxu0
        %v1345 = vpop.f32.mrf.mxu0
        %v1346 = vadd.f32 %v1174, %v1345
        %v1347 = vpop.f32.mrf.mxu0
        %1348 = vdwg.mxu0
        %v1349 = vsel %vm1227, %v1343, -inf
        %1350 = vmax.xlane.f32.xlu0 %v1349
        %v1351 = vpop.xlane.xlu0 %1350
        %v1352 = vsel %vm1227, %v1346, -inf
        %1353 = vmax.xlane.f32.xlu0 %v1352
        %v1354 = vpop.xlane.xlu0 %1353
        %v1355 = vsub.f32 %v1343, %v1351
        %v1356 = vsub.f32 %v1346, %v1354
        %v1357 = vmul.f32 %v1355, 1.442695
        %v1358 = vpow.pop %v1357
        %v1359 = vmul.f32 %v1356, 1.442695
        %v1360 = vpow.pop %v1359
        %v1361 = vsel %vm1227, %v1358, 0.0
        %1362 = vadd.xlane.f32.xlu0 %v1361
        %v1363 = vpop.xlane.xlu0 %1362
        %v1364 = vsel %vm1227, %v1360, 0.0
        %1365 = vadd.xlane.f32.xlu0 %v1364
        %v1366 = vpop.xlane.xlu0 %1365
        %v1367 = vrcp.pop %v1363
        %v1368 = vrcp.pop %v1366
        %v1369 = vmul.f32 %v1358, %v1367
        %v1370 = vmul.f32 %v1360, %v1368
        %v1371 = vpack.c.bf16 %v1370, %v1369
        %1373 = vrot.lane.b32.xlu0 %v1169, 120
        %v1374 = vpop.permute.xlu0 %1373
        %v1377 = vsel %vm1227, %v1371, 0
        %1379 = vmatprep.subr.bf16.mxu0 0
        %1380 = vmatpush1.bf16.msra.mxu0 0
        %1381 = vmatprep.subr.bf16.mxu0 0
        %1382 = vmatpush1.bf16.msra.mxu0 0
        %1383 = vmatprep.subr.bf16.mxu0 0
        %1384 = vmatpush1.bf16.msra.mxu0 0
        %1385 = vmatprep.subr.bf16.mxu0 0
        %1386 = vmatpush1.bf16.msra.mxu0 0
        %1387 = vmatprep.subr.bf16.mxu0 0
        %1388 = vmatpush1.bf16.msra.mxu0 0
        %1389 = vmatprep.subr.bf16.mxu0 0
        %1390 = vmatpush1.bf16.msra.mxu0 0
        %1391 = vmatprep.subr.bf16.mxu0 0
        %1392 = vmatpush1.bf16.msra.mxu0 0
        %1393 = vmatprep.subr.bf16.mxu0 0
        %1394 = vmatpush1.bf16.msra.mxu0 %v1374
        %1395 = vmatprep.subr.bf16.mxu0 0
        %1396 = vmatpush2.bf16.msra.mxu0 0
        %1397 = vmatprep.subr.bf16.mxu0 0
        %1398 = vmatpush2.bf16.msra.mxu0 0
        %1399 = vmatprep.subr.bf16.mxu0 0
        %1400 = vmatpush2.bf16.msra.mxu0 0
        %1401 = vmatprep.subr.bf16.mxu0 0
        %1402 = vmatpush2.bf16.msra.mxu0 0
        %1403 = vmatprep.subr.bf16.mxu0 0
        %1404 = vmatpush2.bf16.msra.mxu0 0
        %1405 = vmatprep.subr.bf16.mxu0 0
        %1406 = vmatpush2.bf16.msra.mxu0 0
        %1407 = vmatprep.subr.bf16.mxu0 0
        %1408 = vmatpush2.bf16.msra.mxu0 0
        %1409 = vmatprep.subr.bf16.mxu0 0
        %1410 = vmatpush2.bf16.msra.mxu0 0
        %1411 = vmatprep.mubr.bf16.mxu0 0
        %1412 = vmatmul.mubr.bf16.gmra.mxu0 %v1377
        %v1413 = vpop.f32.mrf.mxu0
        %v1414 = vadd.f32 0.0, %v1413
        %v1415 = vpop.f32.mrf.mxu0
        %v1416 = vpop.f32.mrf.mxu0
        %v1417 = vadd.f32 0.0, %v1416
        %v1418 = vpop.f32.mrf.mxu0
        %1419 = vdwg.mxu0
        %1422 = vrot.lane.b32.xlu0 %v1414, 8
        %v1423 = vpop.permute.xlu0 %1422
        %1424 = vrot.lane.b32.xlu0 %v1417, 8
        %v1425 = vpop.permute.xlu0 %1424
        %vm1428 = vcmask 130112
        %1429 = vst.msk [vmem:[#allocation2] sm:$0xff] %vm1428, %v1423
        %1430 = vst.msk [vmem:[#allocation2 + $0x8] sm:$0xff] %vm1428, %v1425
        %1431 = vrot.lane.b32.xlu0 %v1167, 112
        %v1432 = vpop.permute.xlu0 %1431
        %1433 = vrot.lane.b32.xlu0 %v1168, 80
        %v1434 = vpop.permute.xlu0 %1433
        %v1436 = vsel %vm1179, %v1432, 0
        %v1439 = vsel %vm1179, %v1434, 0
        %1441 = vmatprep.subr.bf16.mxu0 0
        %1442 = vmatpush1.bf16.xpose.msra.mxu0 0
        %1443 = vmatprep.subr.bf16.mxu0 0
        %1444 = vmatpush1.bf16.xpose.msra.mxu0 0
        %1445 = vmatprep.subr.bf16.mxu0 0
        %1446 = vmatpush1.bf16.xpose.msra.mxu0 0
        %1447 = vmatprep.subr.bf16.mxu0 0
        %1448 = vmatpush1.bf16.xpose.msra.mxu0 0
        %1449 = vmatprep.subr.bf16.mxu0 0
        %1450 = vmatpush1.bf16.xpose.msra.mxu0 0
        %1451 = vmatprep.subr.bf16.mxu0 0
        %1452 = vmatpush1.bf16.xpose.msra.mxu0 0
        %1453 = vmatprep.subr.bf16.mxu0 0
        %1454 = vmatpush1.bf16.xpose.msra.mxu0 0
        %1455 = vmatprep.subr.bf16.mxu0 0
        %1456 = vmatpush1.bf16.xpose.msra.mxu0 %v1439
        %1457 = vmatprep.subr.bf16.mxu0 0
        %1458 = vmatpush2.bf16.xpose.msra.mxu0 0
        %1459 = vmatprep.subr.bf16.mxu0 0
        %1460 = vmatpush2.bf16.xpose.msra.mxu0 0
        %1461 = vmatprep.subr.bf16.mxu0 0
        %1462 = vmatpush2.bf16.xpose.msra.mxu0 0
        %1463 = vmatprep.subr.bf16.mxu0 0
        %1464 = vmatpush2.bf16.xpose.msra.mxu0 0
        %1465 = vmatprep.subr.bf16.mxu0 0
        %1466 = vmatpush2.bf16.xpose.msra.mxu0 0
        %1467 = vmatprep.subr.bf16.mxu0 0
        %1468 = vmatpush2.bf16.xpose.msra.mxu0 0
        %1469 = vmatprep.subr.bf16.mxu0 0
        %1470 = vmatpush2.bf16.xpose.msra.mxu0 0
        %1471 = vmatprep.subr.bf16.mxu0 0
        %1472 = vmatpush2.bf16.xpose.msra.mxu0 0
        %1473 = vmatprep.mubr.bf16.mxu0 0
        %1474 = vmatmul.mubr.bf16.gmra.mxu0 %v1436
        %v1475 = vpop.f32.mrf.mxu0
        %v1476 = vadd.f32 %v1174, %v1475
        %v1477 = vpop.f32.mrf.mxu0
        %v1478 = vpop.f32.mrf.mxu0
        %v1479 = vadd.f32 %v1174, %v1478
        %v1480 = vpop.f32.mrf.mxu0
        %1481 = vdwg.mxu0
        %v1482 = vsel %vm1227, %v1476, -inf
        %1483 = vmax.xlane.f32.xlu0 %v1482
        %v1484 = vpop.xlane.xlu0 %1483
        %v1485 = vsel %vm1227, %v1479, -inf
        %1486 = vmax.xlane.f32.xlu0 %v1485
        %v1487 = vpop.xlane.xlu0 %1486
        %v1488 = vsub.f32 %v1476, %v1484
        %v1489 = vsub.f32 %v1479, %v1487
        %v1490 = vmul.f32 %v1488, 1.442695
        %v1491 = vpow.pop %v1490
        %v1492 = vmul.f32 %v1489, 1.442695
        %v1493 = vpow.pop %v1492
        %v1494 = vsel %vm1227, %v1491, 0.0
        %1495 = vadd.xlane.f32.xlu0 %v1494
        %v1496 = vpop.xlane.xlu0 %1495
        %v1497 = vsel %vm1227, %v1493, 0.0
        %1498 = vadd.xlane.f32.xlu0 %v1497
        %v1499 = vpop.xlane.xlu0 %1498
        %v1500 = vrcp.pop %v1496
        %v1501 = vrcp.pop %v1499
        %v1502 = vmul.f32 %v1491, %v1500
        %v1503 = vmul.f32 %v1493, %v1501
        %v1504 = vpack.c.bf16 %v1503, %v1502
        %1505 = vrot.lane.b32.xlu0 %v1169, 112
        %v1506 = vpop.permute.xlu0 %1505
        %v1509 = vsel %vm1227, %v1504, 0
        %1511 = vmatprep.subr.bf16.mxu0 0
        %1512 = vmatpush1.bf16.msra.mxu0 0
        %1513 = vmatprep.subr.bf16.mxu0 0
        %1514 = vmatpush1.bf16.msra.mxu0 0
        %1515 = vmatprep.subr.bf16.mxu0 0
        %1516 = vmatpush1.bf16.msra.mxu0 0
        %1517 = vmatprep.subr.bf16.mxu0 0
        %1518 = vmatpush1.bf16.msra.mxu0 0
        %1519 = vmatprep.subr.bf16.mxu0 0
        %1520 = vmatpush1.bf16.msra.mxu0 0
        %1521 = vmatprep.subr.bf16.mxu0 0
        %1522 = vmatpush1.bf16.msra.mxu0 0
        %1523 = vmatprep.subr.bf16.mxu0 0
        %1524 = vmatpush1.bf16.msra.mxu0 0
        %1525 = vmatprep.subr.bf16.mxu0 0
        %1526 = vmatpush1.bf16.msra.mxu0 %v1506
        %1527 = vmatprep.subr.bf16.mxu0 0
        %1528 = vmatpush2.bf16.msra.mxu0 0
        %1529 = vmatprep.subr.bf16.mxu0 0
        %1530 = vmatpush2.bf16.msra.mxu0 0
        %1531 = vmatprep.subr.bf16.mxu0 0
        %1532 = vmatpush2.bf16.msra.mxu0 0
        %1533 = vmatprep.subr.bf16.mxu0 0
        %1534 = vmatpush2.bf16.msra.mxu0 0
        %1535 = vmatprep.subr.bf16.mxu0 0
        %1536 = vmatpush2.bf16.msra.mxu0 0
        %1537 = vmatprep.subr.bf16.mxu0 0
        %1538 = vmatpush2.bf16.msra.mxu0 0
        %1539 = vmatprep.subr.bf16.mxu0 0
        %1540 = vmatpush2.bf16.msra.mxu0 0
        %1541 = vmatprep.subr.bf16.mxu0 0
        %1542 = vmatpush2.bf16.msra.mxu0 0
        %1543 = vmatprep.mubr.bf16.mxu0 0
        %1544 = vmatmul.mubr.bf16.gmra.mxu0 %v1509
        %v1545 = vpop.f32.mrf.mxu0
        %v1546 = vadd.f32 0.0, %v1545
        %v1547 = vpop.f32.mrf.mxu0
        %v1548 = vpop.f32.mrf.mxu0
        %v1549 = vadd.f32 0.0, %v1548
        %v1550 = vpop.f32.mrf.mxu0
        %1551 = vdwg.mxu0
        %1554 = vrot.lane.b32.xlu0 %v1546, 16
        %v1555 = vpop.permute.xlu0 %1554
        %1556 = vrot.lane.b32.xlu0 %v1549, 16
        %v1557 = vpop.permute.xlu0 %1556
        %vm1560 = vcmask 195712
        %1561 = vst.msk [vmem:[#allocation2] sm:$0xff] %vm1560, %v1555
        %1562 = vst.msk [vmem:[#allocation2 + $0x8] sm:$0xff] %vm1560, %v1557
        %1563 = vrot.lane.b32.xlu0 %v1167, 104
        %v1564 = vpop.permute.xlu0 %1563
        %1565 = vrot.lane.b32.xlu0 %v1168, 72
        %v1566 = vpop.permute.xlu0 %1565
        %v1568 = vsel %vm1179, %v1564, 0
        %v1571 = vsel %vm1179, %v1566, 0
        %1573 = vmatprep.subr.bf16.mxu0 0
        %1574 = vmatpush1.bf16.xpose.msra.mxu0 0
        %1575 = vmatprep.subr.bf16.mxu0 0
        %1576 = vmatpush1.bf16.xpose.msra.mxu0 0
        %1577 = vmatprep.subr.bf16.mxu0 0
        %1578 = vmatpush1.bf16.xpose.msra.mxu0 0
        %1579 = vmatprep.subr.bf16.mxu0 0
        %1580 = vmatpush1.bf16.xpose.msra.mxu0 0
        %1581 = vmatprep.subr.bf16.mxu0 0
        %1582 = vmatpush1.bf16.xpose.msra.mxu0 0
        %1583 = vmatprep.subr.bf16.mxu0 0
        %1584 = vmatpush1.bf16.xpose.msra.mxu0 0
        %1585 = vmatprep.subr.bf16.mxu0 0
        %1586 = vmatpush1.bf16.xpose.msra.mxu0 0
        %1587 = vmatprep.subr.bf16.mxu0 0
        %1588 = vmatpush1.bf16.xpose.msra.mxu0 %v1571
        %1589 = vmatprep.subr.bf16.mxu0 0
        %1590 = vmatpush2.bf16.xpose.msra.mxu0 0
        %1591 = vmatprep.subr.bf16.mxu0 0
        %1592 = vmatpush2.bf16.xpose.msra.mxu0 0
        %1593 = vmatprep.subr.bf16.mxu0 0
        %1594 = vmatpush2.bf16.xpose.msra.mxu0 0
        %1595 = vmatprep.subr.bf16.mxu0 0
        %1596 = vmatpush2.bf16.xpose.msra.mxu0 0
        %1597 = vmatprep.subr.bf16.mxu0 0
        %1598 = vmatpush2.bf16.xpose.msra.mxu0 0
        %1599 = vmatprep.subr.bf16.mxu0 0
        %1600 = vmatpush2.bf16.xpose.msra.mxu0 0
        %1601 = vmatprep.subr.bf16.mxu0 0
        %1602 = vmatpush2.bf16.xpose.msra.mxu0 0
        %1603 = vmatprep.subr.bf16.mxu0 0
        %1604 = vmatpush2.bf16.xpose.msra.mxu0 0
        %1605 = vmatprep.mubr.bf16.mxu0 0
        %1606 = vmatmul.mubr.bf16.gmra.mxu0 %v1568
        %v1607 = vpop.f32.mrf.mxu0
        %v1608 = vadd.f32 %v1174, %v1607
        %v1609 = vpop.f32.mrf.mxu0
        %v1610 = vpop.f32.mrf.mxu0
        %v1611 = vadd.f32 %v1174, %v1610
        %v1612 = vpop.f32.mrf.mxu0
        %1613 = vdwg.mxu0
        %v1614 = vsel %vm1227, %v1608, -inf
        %1615 = vmax.xlane.f32.xlu0 %v1614
        %v1616 = vpop.xlane.xlu0 %1615
        %v1617 = vsel %vm1227, %v1611, -inf
        %1618 = vmax.xlane.f32.xlu0 %v1617
        %v1619 = vpop.xlane.xlu0 %1618
        %v1620 = vsub.f32 %v1608, %v1616
        %v1621 = vsub.f32 %v1611, %v1619
        %v1622 = vmul.f32 %v1620, 1.442695
        %v1623 = vpow.pop %v1622
        %v1624 = vmul.f32 %v1621, 1.442695
        %v1625 = vpow.pop %v1624
        %v1626 = vsel %vm1227, %v1623, 0.0
        %1627 = vadd.xlane.f32.xlu0 %v1626
        %v1628 = vpop.xlane.xlu0 %1627
        %v1629 = vsel %vm1227, %v1625, 0.0
        %1630 = vadd.xlane.f32.xlu0 %v1629
        %v1631 = vpop.xlane.xlu0 %1630
        %v1632 = vrcp.pop %v1628
        %v1633 = vrcp.pop %v1631
        %v1634 = vmul.f32 %v1623, %v1632
        %v1635 = vmul.f32 %v1625, %v1633
        %v1636 = vpack.c.bf16 %v1635, %v1634
        %1637 = vrot.lane.b32.xlu0 %v1169, 104
        %v1638 = vpop.permute.xlu0 %1637
        %v1641 = vsel %vm1227, %v1636, 0
        %1643 = vmatprep.subr.bf16.mxu0 0
        %1644 = vmatpush1.bf16.msra.mxu0 0
        %1645 = vmatprep.subr.bf16.mxu0 0
        %1646 = vmatpush1.bf16.msra.mxu0 0
        %1647 = vmatprep.subr.bf16.mxu0 0
        %1648 = vmatpush1.bf16.msra.mxu0 0
        %1649 = vmatprep.subr.bf16.mxu0 0
        %1650 = vmatpush1.bf16.msra.mxu0 0
        %1651 = vmatprep.subr.bf16.mxu0 0
        %1652 = vmatpush1.bf16.msra.mxu0 0
        %1653 = vmatprep.subr.bf16.mxu0 0
        %1654 = vmatpush1.bf16.msra.mxu0 0
        %1655 = vmatprep.subr.bf16.mxu0 0
        %1656 = vmatpush1.bf16.msra.mxu0 0
        %1657 = vmatprep.subr.bf16.mxu0 0
        %1658 = vmatpush1.bf16.msra.mxu0 %v1638
        %1659 = vmatprep.subr.bf16.mxu0 0
        %1660 = vmatpush2.bf16.msra.mxu0 0
        %1661 = vmatprep.subr.bf16.mxu0 0
        %1662 = vmatpush2.bf16.msra.mxu0 0
        %1663 = vmatprep.subr.bf16.mxu0 0
        %1664 = vmatpush2.bf16.msra.mxu0 0
        %1665 = vmatprep.subr.bf16.mxu0 0
        %1666 = vmatpush2.bf16.msra.mxu0 0
        %1667 = vmatprep.subr.bf16.mxu0 0
        %1668 = vmatpush2.bf16.msra.mxu0 0
        %1669 = vmatprep.subr.bf16.mxu0 0
        %1670 = vmatpush2.bf16.msra.mxu0 0
        %1671 = vmatprep.subr.bf16.mxu0 0
        %1672 = vmatpush2.bf16.msra.mxu0 0
        %1673 = vmatprep.subr.bf16.mxu0 0
        %1674 = vmatpush2.bf16.msra.mxu0 0
        %1675 = vmatprep.mubr.bf16.mxu0 0
        %1676 = vmatmul.mubr.bf16.gmra.mxu0 %v1641
        %v1677 = vpop.f32.mrf.mxu0
        %v1678 = vadd.f32 0.0, %v1677
        %v1679 = vpop.f32.mrf.mxu0
        %v1680 = vpop.f32.mrf.mxu0
        %v1681 = vadd.f32 0.0, %v1680
        %v1682 = vpop.f32.mrf.mxu0
        %1683 = vdwg.mxu0
        %1686 = vrot.lane.b32.xlu0 %v1678, 24
        %v1687 = vpop.permute.xlu0 %1686
        %1688 = vrot.lane.b32.xlu0 %v1681, 24
        %v1689 = vpop.permute.xlu0 %1688
        %vm1692 = vcmask 261312
        %1693 = vst.msk [vmem:[#allocation2] sm:$0xff] %vm1692, %v1687
        %1694 = vst.msk [vmem:[#allocation2 + $0x8] sm:$0xff] %vm1692, %v1689
        %v1695 = vld [vmem:[#allocation2] sm:$0xff]
        %v1696 = vld [vmem:[#allocation2 + $0x8] sm:$0xff]
        %v1697 = vpack.c.bf16 %v1696, %v1695
        %s1698 = scalar_lea.vmem %s821, 16 [#allocation12]
        %v1699 = vld [vmem:[%s1698] sm:$0xf]
        %v1700 = vld [vmem:[%s1698 + $0x4] sm:$0xf]
        %v1701 = vld [vmem:[%s1698 + $0x8] sm:$0xf]
        %v1702 = vld [vmem:[%s1698 + $0xc] sm:$0xf]
        %v1703 = vlaneseq
        %v1704 = vshrl.u32 %v1703, 7
        %v1705 = vsub.s32 3, %v1704
        %v1706 = vrot.slane %v1020, %v1705
        %v1711 = vunpack.c.l.b16 %v1699
        %v1712 = vunpack.c.l.b16 %v1700
        %v1713 = vunpack.c.l.b16 %v1701
        %v1714 = vunpack.c.l.b16 %v1702
        %v1715 = vpack.c.b16 %v1712, %v1711
        %v1716 = vpack.c.b16 %v1714, %v1713
        %v1720 = vsel %vm1041, %v1697, 0
        %1722 = vmatprep.subr.bf16.mxu0 0
        %1723 = vmatpush1.bf16.msra.mxu0 0
        %1724 = vmatprep.subr.bf16.mxu0 0
        %1725 = vmatpush1.bf16.msra.mxu0 0
        %1726 = vmatprep.subr.bf16.mxu0 0
        %1727 = vmatpush1.bf16.msra.mxu0 0
        %1728 = vmatprep.subr.bf16.mxu0 0
        %1729 = vmatpush1.bf16.msra.mxu0 0
        %1730 = vmatprep.subr.bf16.mxu0 0
        %1731 = vmatpush1.bf16.msra.mxu0 0
        %1732 = vmatprep.subr.bf16.mxu0 0
        %1733 = vmatpush1.bf16.msra.mxu0 0
        %1734 = vmatprep.subr.bf16.mxu0 0
        %1735 = vmatpush1.bf16.msra.mxu0 %v1716
        %1736 = vmatprep.subr.bf16.mxu0 0
        %1737 = vmatpush1.bf16.msra.mxu0 %v1715
        %1738 = vmatprep.subr.bf16.mxu0 0
        %1739 = vmatpush2.bf16.msra.mxu0 0
        %1740 = vmatprep.subr.bf16.mxu0 0
        %1741 = vmatpush2.bf16.msra.mxu0 0
        %1742 = vmatprep.subr.bf16.mxu0 0
        %1743 = vmatpush2.bf16.msra.mxu0 0
        %1744 = vmatprep.subr.bf16.mxu0 0
        %1745 = vmatpush2.bf16.msra.mxu0 0
        %1746 = vmatprep.subr.bf16.mxu0 0
        %1747 = vmatpush2.bf16.msra.mxu0 0
        %1748 = vmatprep.subr.bf16.mxu0 0
        %1749 = vmatpush2.bf16.msra.mxu0 0
        %1750 = vmatprep.subr.bf16.mxu0 0
        %1751 = vmatpush2.bf16.msra.mxu0 0
        %1752 = vmatprep.subr.bf16.mxu0 0
        %1753 = vmatpush2.bf16.msra.mxu0 0
        %1754 = vmatprep.mubr.bf16.mxu0 0
        %1755 = vmatmul.mubr.bf16.gmra.mxu0 %v1720
        %v1756 = vpop.f32.mrf.mxu0
        %v1757 = vadd.f32 %v1706, %v1756
        %v1758 = vpop.f32.mrf.mxu0
        %v1759 = vpop.f32.mrf.mxu0
        %v1760 = vadd.f32 %v1706, %v1759
        %v1761 = vpop.f32.mrf.mxu0
        %1762 = vdwg.mxu0
        %v1763 = vadd.f32 %v1011, %v1757
        %v1764 = vadd.f32 %v1012, %v1760
        %v1765 = vsel %vm1041, %v1763, 0.0
        %1766 = vadd.xlane.f32.xlu0 %v1765
        %v1767 = vpop.xlane.xlu0 %1766
        %v1768 = vsel %vm1041, %v1764, 0.0
        %1769 = vadd.xlane.f32.xlu0 %v1768
        %v1770 = vpop.xlane.xlu0 %1769
        %v1771 = vrcp.pop 32.0
        %v1772 = vmul.f32 %v1767, %v1771
        %v1773 = vmul.f32 %v1770, %v1771
        %v1774 = vsub.f32 %v1763, %v1772
        %v1775 = vsub.f32 %v1764, %v1773
        %v1776 = vmul.f32 %v1774, %v1774
        %v1777 = vmul.f32 %v1775, %v1775
        %v1778 = vsel %vm1041, %v1776, 0.0
        %1779 = vadd.xlane.f32.xlu0 %v1778
        %v1780 = vpop.xlane.xlu0 %1779
        %v1781 = vsel %vm1041, %v1777, 0.0
        %1782 = vadd.xlane.f32.xlu0 %v1781
        %v1783 = vpop.xlane.xlu0 %1782
        %v1784 = vmul.f32 %v1780, %v1771
        %v1785 = vmul.f32 %v1783, %v1771
        %v1786 = vadd.f32 %v1784, 1e-05
        %v1787 = vadd.f32 %v1785, 1e-05
        %v1788 = vrsqrt.pop %v1786
        %v1789 = vrsqrt.pop %v1787
        %v1790 = vmul.f32 %v1774, %v1788
        %v1791 = vmul.f32 %v1775, %v1789
        %v1792 = vlaneseq
        %v1793 = vshrl.u32 %v1792, 7
        %v1794 = vsub.s32 0, %v1793
        %v1795 = vrot.slane %v1019, %v1794
        %v1796 = vmul.f32 %v1790, %v1795
        %v1797 = vmul.f32 %v1791, %v1795
        %v1798 = vlaneseq
        %v1799 = vshrl.u32 %v1798, 7
        %v1800 = vsub.s32 1, %v1799
        %v1801 = vrot.slane %v1019, %v1800
        %v1802 = vadd.f32 %v1796, %v1801
        %v1803 = vadd.f32 %v1797, %v1801
        %v1804 = vadd.f32 %v1802, %v1014
        %v1805 = vadd.f32 %v1803, %v1015
        %v1806 = vpack.c.bf16 %v1805, %v1804
        %v1807 = vld [vmem:[%s980] sm:$0xf]
        %v1808 = vld [vmem:[%s980 + $0x4] sm:$0xf]
        %v1809 = vld [vmem:[%s980 + $0x8] sm:$0xf]
        %v1810 = vld [vmem:[%s980 + $0xc] sm:$0xf]
        %v1811 = vlaneseq
        %v1812 = vshrl.u32 %v1811, 7
        %v1813 = vsub.s32 0, %v1812
        %v1814 = vrot.slane %v1021, %v1813
        %v1819 = vunpack.c.l.b16 %v1807
        %v1820 = vunpack.c.l.b16 %v1808
        %v1821 = vunpack.c.l.b16 %v1809
        %v1822 = vunpack.c.l.b16 %v1810
        %v1823 = vpack.c.b16 %v1820, %v1819
        %v1824 = vpack.c.b16 %v1822, %v1821
        %v1828 = vsel %vm1041, %v1806, 0
        %1830 = vmatprep.subr.bf16.mxu0 0
        %1831 = vmatpush1.bf16.msra.mxu0 0
        %1832 = vmatprep.subr.bf16.mxu0 0
        %1833 = vmatpush1.bf16.msra.mxu0 0
        %1834 = vmatprep.subr.bf16.mxu0 0
        %1835 = vmatpush1.bf16.msra.mxu0 0
        %1836 = vmatprep.subr.bf16.mxu0 0
        %1837 = vmatpush1.bf16.msra.mxu0 0
        %1838 = vmatprep.subr.bf16.mxu0 0
        %1839 = vmatpush1.bf16.msra.mxu0 0
        %1840 = vmatprep.subr.bf16.mxu0 0
        %1841 = vmatpush1.bf16.msra.mxu0 0
        %1842 = vmatprep.subr.bf16.mxu0 0
        %1843 = vmatpush1.bf16.msra.mxu0 %v1824
        %1844 = vmatprep.subr.bf16.mxu0 0
        %1845 = vmatpush1.bf16.msra.mxu0 %v1823
        %1846 = vmatprep.subr.bf16.mxu0 0
        %1847 = vmatpush2.bf16.msra.mxu0 0
        %1848 = vmatprep.subr.bf16.mxu0 0
        %1849 = vmatpush2.bf16.msra.mxu0 0
        %1850 = vmatprep.subr.bf16.mxu0 0
        %1851 = vmatpush2.bf16.msra.mxu0 0
        %1852 = vmatprep.subr.bf16.mxu0 0
        %1853 = vmatpush2.bf16.msra.mxu0 0
        %1854 = vmatprep.subr.bf16.mxu0 0
        %1855 = vmatpush2.bf16.msra.mxu0 0
        %1856 = vmatprep.subr.bf16.mxu0 0
        %1857 = vmatpush2.bf16.msra.mxu0 0
        %1858 = vmatprep.subr.bf16.mxu0 0
        %1859 = vmatpush2.bf16.msra.mxu0 0
        %1860 = vmatprep.subr.bf16.mxu0 0
        %1861 = vmatpush2.bf16.msra.mxu0 0
        %1862 = vmatprep.mubr.bf16.mxu0 0
        %1863 = vmatmul.mubr.bf16.gmra.mxu0 %v1828
        %v1864 = vpop.f32.mrf.mxu0
        %v1865 = vadd.f32 %v1814, %v1864
        %v1866 = vpop.f32.mrf.mxu0
        %v1867 = vpop.f32.mrf.mxu0
        %v1868 = vadd.f32 %v1814, %v1867
        %v1869 = vpop.f32.mrf.mxu0
        %1870 = vdwg.mxu0
        %v1871 = vadd.f32 %v1013, %v1016
        %v1872 = vpack.c.bf16 %v1871, %v1871
        %s1873 = scalar_lea.vmem %s980, 16
        %v1874 = vld [vmem:[%s1873] sm:$0xf]
        %v1875 = vld [vmem:[%s1873 + $0x4] sm:$0xf]
        %v1876 = vld [vmem:[%s1873 + $0x8] sm:$0xf]
        %v1877 = vld [vmem:[%s1873 + $0xc] sm:$0xf]
        %v1878 = vlaneseq
        %v1879 = vshrl.u32 %v1878, 7
        %v1880 = vsub.s32 1, %v1879
        %v1881 = vrot.slane %v1021, %v1880
        %v1886 = vunpack.c.l.b16 %v1874
        %v1887 = vunpack.c.l.b16 %v1875
        %v1888 = vunpack.c.l.b16 %v1876
        %v1889 = vunpack.c.l.b16 %v1877
        %v1890 = vpack.c.b16 %v1887, %v1886
        %v1891 = vpack.c.b16 %v1889, %v1888
        %v1895 = vsel %vm1041, %v1872, 0
        %1897 = vmatprep.subr.bf16.mxu0 0
        %1898 = vmatpush1.bf16.msra.mxu0 0
        %1899 = vmatprep.subr.bf16.mxu0 0
        %1900 = vmatpush1.bf16.msra.mxu0 0
        %1901 = vmatprep.subr.bf16.mxu0 0
        %1902 = vmatpush1.bf16.msra.mxu0 0
        %1903 = vmatprep.subr.bf16.mxu0 0
        %1904 = vmatpush1.bf16.msra.mxu0 0
        %1905 = vmatprep.subr.bf16.mxu0 0
        %1906 = vmatpush1.bf16.msra.mxu0 0
        %1907 = vmatprep.subr.bf16.mxu0 0
        %1908 = vmatpush1.bf16.msra.mxu0 0
        %1909 = vmatprep.subr.bf16.mxu0 0
        %1910 = vmatpush1.bf16.msra.mxu0 %v1891
        %1911 = vmatprep.subr.bf16.mxu0 0
        %1912 = vmatpush1.bf16.msra.mxu0 %v1890
        %1913 = vmatprep.subr.bf16.mxu0 0
        %1914 = vmatpush2.bf16.msra.mxu0 0
        %1915 = vmatprep.subr.bf16.mxu0 0
        %1916 = vmatpush2.bf16.msra.mxu0 0
        %1917 = vmatprep.subr.bf16.mxu0 0
        %1918 = vmatpush2.bf16.msra.mxu0 0
        %1919 = vmatprep.subr.bf16.mxu0 0
        %1920 = vmatpush2.bf16.msra.mxu0 0
        %1921 = vmatprep.subr.bf16.mxu0 0
        %1922 = vmatpush2.bf16.msra.mxu0 0
        %1923 = vmatprep.subr.bf16.mxu0 0
        %1924 = vmatpush2.bf16.msra.mxu0 0
        %1925 = vmatprep.subr.bf16.mxu0 0
        %1926 = vmatpush2.bf16.msra.mxu0 0
        %1927 = vmatprep.subr.bf16.mxu0 0
        %1928 = vmatpush2.bf16.msra.mxu0 0
        %1929 = vmatprep.mubr.bf16.mxu0 0
        %1930 = vmatmul.mubr.bf16.gmra.mxu0 %v1895
        %v1931 = vpop.f32.mrf.mxu0
        %v1932 = vadd.f32 %v1881, %v1931
        %v1933 = vpop.f32.mrf.mxu0
        %v1934 = vpop.f32.mrf.mxu0
        %v1935 = vpop.f32.mrf.mxu0
        %1936 = vdwg.mxu0
        %v1937 = vpack.c.bf16 %v1013, %v1013
        %s1938 = scalar_lea.vmem %s980, 32
        %v1939 = vld [vmem:[%s1938] sm:$0xf]
        %v1940 = vld [vmem:[%s1938 + $0x4] sm:$0xf]
        %v1941 = vld [vmem:[%s1938 + $0x8] sm:$0xf]
        %v1942 = vld [vmem:[%s1938 + $0xc] sm:$0xf]
        %v1943 = vlaneseq
        %v1944 = vshrl.u32 %v1943, 7
        %v1945 = vsub.s32 2, %v1944
        %v1946 = vrot.slane %v1021, %v1945
        %v1951 = vunpack.c.l.b16 %v1939
        %v1952 = vunpack.c.l.b16 %v1940
        %v1953 = vunpack.c.l.b16 %v1941
        %v1954 = vunpack.c.l.b16 %v1942
        %v1955 = vpack.c.b16 %v1952, %v1951
        %v1956 = vpack.c.b16 %v1954, %v1953
        %v1960 = vsel %vm1041, %v1937, 0
        %1962 = vmatprep.subr.bf16.mxu0 0
        %1963 = vmatpush1.bf16.msra.mxu0 0
        %1964 = vmatprep.subr.bf16.mxu0 0
        %1965 = vmatpush1.bf16.msra.mxu0 0
        %1966 = vmatprep.subr.bf16.mxu0 0
        %1967 = vmatpush1.bf16.msra.mxu0 0
        %1968 = vmatprep.subr.bf16.mxu0 0
        %1969 = vmatpush1.bf16.msra.mxu0 0
        %1970 = vmatprep.subr.bf16.mxu0 0
        %1971 = vmatpush1.bf16.msra.mxu0 0
        %1972 = vmatprep.subr.bf16.mxu0 0
        %1973 = vmatpush1.bf16.msra.mxu0 0
        %1974 = vmatprep.subr.bf16.mxu0 0
        %1975 = vmatpush1.bf16.msra.mxu0 %v1956
        %1976 = vmatprep.subr.bf16.mxu0 0
        %1977 = vmatpush1.bf16.msra.mxu0 %v1955
        %1978 = vmatprep.subr.bf16.mxu0 0
        %1979 = vmatpush2.bf16.msra.mxu0 0
        %1980 = vmatprep.subr.bf16.mxu0 0
        %1981 = vmatpush2.bf16.msra.mxu0 0
        %1982 = vmatprep.subr.bf16.mxu0 0
        %1983 = vmatpush2.bf16.msra.mxu0 0
        %1984 = vmatprep.subr.bf16.mxu0 0
        %1985 = vmatpush2.bf16.msra.mxu0 0
        %1986 = vmatprep.subr.bf16.mxu0 0
        %1987 = vmatpush2.bf16.msra.mxu0 0
        %1988 = vmatprep.subr.bf16.mxu0 0
        %1989 = vmatpush2.bf16.msra.mxu0 0
        %1990 = vmatprep.subr.bf16.mxu0 0
        %1991 = vmatpush2.bf16.msra.mxu0 0
        %1992 = vmatprep.subr.bf16.mxu0 0
        %1993 = vmatpush2.bf16.msra.mxu0 0
        %1994 = vmatprep.mubr.bf16.mxu0 0
        %1995 = vmatmul.mubr.bf16.gmra.mxu0 %v1960
        %v1996 = vpop.f32.mrf.mxu0
        %v1997 = vadd.f32 %v1946, %v1996
        %v1998 = vpop.f32.mrf.mxu0
        %v1999 = vpop.f32.mrf.mxu0
        %v2000 = vpop.f32.mrf.mxu0
        %2001 = vdwg.mxu0
        %v2002 = vpack.c.bf16 %v1868, %v1865
        %v2003 = vpack.c.bf16 %v1932, %v1932
        %v2004 = vpack.c.bf16 %v1997, %v1997
        %v2006 = vlaneseq
        %v2007 = vshrl.u32 %v2006, 7
        %v2008 = vsub.s32 0, %v2007
        %v2009 = vrot.slane %v1018, %v2008
        %v2012 = vsel %vm1179, %v2002, 0
        %v2015 = vsel %vm1179, %v2003, 0
        %2017 = vmatprep.subr.bf16.mxu0 0
        %2018 = vmatpush1.bf16.xpose.msra.mxu0 0
        %2019 = vmatprep.subr.bf16.mxu0 0
        %2020 = vmatpush1.bf16.xpose.msra.mxu0 0
        %2021 = vmatprep.subr.bf16.mxu0 0
        %2022 = vmatpush1.bf16.xpose.msra.mxu0 0
        %2023 = vmatprep.subr.bf16.mxu0 0
        %2024 = vmatpush1.bf16.xpose.msra.mxu0 0
        %2025 = vmatprep.subr.bf16.mxu0 0
        %2026 = vmatpush1.bf16.xpose.msra.mxu0 0
        %2027 = vmatprep.subr.bf16.mxu0 0
        %2028 = vmatpush1.bf16.xpose.msra.mxu0 0
        %2029 = vmatprep.subr.bf16.mxu0 0
        %2030 = vmatpush1.bf16.xpose.msra.mxu0 0
        %2031 = vmatprep.subr.bf16.mxu0 0
        %2032 = vmatpush1.bf16.xpose.msra.mxu0 %v2015
        %2033 = vmatprep.subr.bf16.mxu0 0
        %2034 = vmatpush2.bf16.xpose.msra.mxu0 0
        %2035 = vmatprep.subr.bf16.mxu0 0
        %2036 = vmatpush2.bf16.xpose.msra.mxu0 0
        %2037 = vmatprep.subr.bf16.mxu0 0
        %2038 = vmatpush2.bf16.xpose.msra.mxu0 0
        %2039 = vmatprep.subr.bf16.mxu0 0
        %2040 = vmatpush2.bf16.xpose.msra.mxu0 0
        %2041 = vmatprep.subr.bf16.mxu0 0
        %2042 = vmatpush2.bf16.xpose.msra.mxu0 0
        %2043 = vmatprep.subr.bf16.mxu0 0
        %2044 = vmatpush2.bf16.xpose.msra.mxu0 0
        %2045 = vmatprep.subr.bf16.mxu0 0
        %2046 = vmatpush2.bf16.xpose.msra.mxu0 0
        %2047 = vmatprep.subr.bf16.mxu0 0
        %2048 = vmatpush2.bf16.xpose.msra.mxu0 0
        %2049 = vmatprep.mubr.bf16.mxu0 0
        %2050 = vmatmul.mubr.bf16.gmra.mxu0 %v2012
        %v2051 = vpop.f32.mrf.mxu0
        %v2052 = vadd.f32 %v2009, %v2051
        %v2053 = vpop.f32.mrf.mxu0
        %v2054 = vpop.f32.mrf.mxu0
        %v2055 = vadd.f32 %v2009, %v2054
        %v2056 = vpop.f32.mrf.mxu0
        %2057 = vdwg.mxu0
        %v2058 = vsel %vm1179, %v2052, -inf
        %2059 = vmax.xlane.f32.xlu0 %v2058
        %v2060 = vpop.xlane.xlu0 %2059
        %v2061 = vsel %vm1179, %v2055, -inf
        %2062 = vmax.xlane.f32.xlu0 %v2061
        %v2063 = vpop.xlane.xlu0 %2062
        %v2064 = vsub.f32 %v2052, %v2060
        %v2065 = vsub.f32 %v2055, %v2063
        %v2066 = vmul.f32 %v2064, 1.442695
        %v2067 = vpow.pop %v2066
        %v2068 = vmul.f32 %v2065, 1.442695
        %v2069 = vpow.pop %v2068
        %v2070 = vsel %vm1179, %v2067, 0.0
        %2071 = vadd.xlane.f32.xlu0 %v2070
        %v2072 = vpop.xlane.xlu0 %2071
        %v2073 = vsel %vm1179, %v2069, 0.0
        %2074 = vadd.xlane.f32.xlu0 %v2073
        %v2075 = vpop.xlane.xlu0 %2074
        %v2076 = vrcp.pop %v2072
        %v2077 = vrcp.pop %v2075
        %v2078 = vmul.f32 %v2067, %v2076
        %v2079 = vmul.f32 %v2069, %v2077
        %v2080 = vadd.f32 %v2078, 0.0
        %v2081 = vadd.f32 %v2079, 0.0
        %v2082 = vpack.c.bf16 %v2079, %v2078
        %v2084 = vsel %vm1179, %v2082, 0
        %vm2086 = vcmask 1043456
        %v2088 = vsel %vm2086, %v2004, 0
        %2090 = vmatprep.subr.bf16.mxu0 0
        %2091 = vmatpush1.bf16.msra.mxu0 0
        %2092 = vmatprep.subr.bf16.mxu0 0
        %2093 = vmatpush1.bf16.msra.mxu0 0
        %2094 = vmatprep.subr.bf16.mxu0 0
        %2095 = vmatpush1.bf16.msra.mxu0 0
        %2096 = vmatprep.subr.bf16.mxu0 0
        %2097 = vmatpush1.bf16.msra.mxu0 0
        %2098 = vmatprep.subr.bf16.mxu0 0
        %2099 = vmatpush1.bf16.msra.mxu0 0
        %2100 = vmatprep.subr.bf16.mxu0 0
        %2101 = vmatpush1.bf16.msra.mxu0 0
        %2102 = vmatprep.subr.bf16.mxu0 0
        %2103 = vmatpush1.bf16.msra.mxu0 0
        %2104 = vmatprep.subr.bf16.mxu0 0
        %2105 = vmatpush1.bf16.msra.mxu0 %v2088
        %2106 = vmatprep.subr.bf16.mxu0 0
        %2107 = vmatpush2.bf16.msra.mxu0 0
        %2108 = vmatprep.subr.bf16.mxu0 0
        %2109 = vmatpush2.bf16.msra.mxu0 0
        %2110 = vmatprep.subr.bf16.mxu0 0
        %2111 = vmatpush2.bf16.msra.mxu0 0
        %2112 = vmatprep.subr.bf16.mxu0 0
        %2113 = vmatpush2.bf16.msra.mxu0 0
        %2114 = vmatprep.subr.bf16.mxu0 0
        %2115 = vmatpush2.bf16.msra.mxu0 0
        %2116 = vmatprep.subr.bf16.mxu0 0
        %2117 = vmatpush2.bf16.msra.mxu0 0
        %2118 = vmatprep.subr.bf16.mxu0 0
        %2119 = vmatpush2.bf16.msra.mxu0 0
        %2120 = vmatprep.subr.bf16.mxu0 0
        %2121 = vmatpush2.bf16.msra.mxu0 0
        %2122 = vmatprep.mubr.bf16.mxu0 0
        %2123 = vmatmul.mubr.bf16.gmra.mxu0 %v2084
        %v2124 = vpop.f32.mrf.mxu0
        %v2125 = vadd.f32 0.0, %v2124
        %v2126 = vpop.f32.mrf.mxu0
        %v2127 = vpop.f32.mrf.mxu0
        %v2128 = vadd.f32 0.0, %v2127
        %v2129 = vpop.f32.mrf.mxu0
        %2130 = vdwg.mxu0
        %2131 = vst.msk [vmem:[#allocation2] sm:$0xff] %vm1179, %v2125
        %2132 = vst.msk [vmem:[#allocation2 + $0x8] sm:$0xff] %vm1179, %v2128
        %2134 = vrot.lane.b32.xlu0 %v2002, 120
        %v2135 = vpop.permute.xlu0 %2134
        %2137 = vrot.lane.b32.xlu0 %v2003, 120
        %v2138 = vpop.permute.xlu0 %2137
        %v2140 = vsel %vm1179, %v2135, 0
        %v2143 = vsel %vm1179, %v2138, 0
        %2145 = vmatprep.subr.bf16.mxu0 0
        %2146 = vmatpush1.bf16.xpose.msra.mxu0 0
        %2147 = vmatprep.subr.bf16.mxu0 0
        %2148 = vmatpush1.bf16.xpose.msra.mxu0 0
        %2149 = vmatprep.subr.bf16.mxu0 0
        %2150 = vmatpush1.bf16.xpose.msra.mxu0 0
        %2151 = vmatprep.subr.bf16.mxu0 0
        %2152 = vmatpush1.bf16.xpose.msra.mxu0 0
        %2153 = vmatprep.subr.bf16.mxu0 0
        %2154 = vmatpush1.bf16.xpose.msra.mxu0 0
        %2155 = vmatprep.subr.bf16.mxu0 0
        %2156 = vmatpush1.bf16.xpose.msra.mxu0 0
        %2157 = vmatprep.subr.bf16.mxu0 0
        %2158 = vmatpush1.bf16.xpose.msra.mxu0 0
        %2159 = vmatprep.subr.bf16.mxu0 0
        %2160 = vmatpush1.bf16.xpose.msra.mxu0 %v2143
        %2161 = vmatprep.subr.bf16.mxu0 0
        %2162 = vmatpush2.bf16.xpose.msra.mxu0 0
        %2163 = vmatprep.subr.bf16.mxu0 0
        %2164 = vmatpush2.bf16.xpose.msra.mxu0 0
        %2165 = vmatprep.subr.bf16.mxu0 0
        %2166 = vmatpush2.bf16.xpose.msra.mxu0 0
        %2167 = vmatprep.subr.bf16.mxu0 0
        %2168 = vmatpush2.bf16.xpose.msra.mxu0 0
        %2169 = vmatprep.subr.bf16.mxu0 0
        %2170 = vmatpush2.bf16.xpose.msra.mxu0 0
        %2171 = vmatprep.subr.bf16.mxu0 0
        %2172 = vmatpush2.bf16.xpose.msra.mxu0 0
        %2173 = vmatprep.subr.bf16.mxu0 0
        %2174 = vmatpush2.bf16.xpose.msra.mxu0 0
        %2175 = vmatprep.subr.bf16.mxu0 0
        %2176 = vmatpush2.bf16.xpose.msra.mxu0 0
        %2177 = vmatprep.mubr.bf16.mxu0 0
        %2178 = vmatmul.mubr.bf16.gmra.mxu0 %v2140
        %v2179 = vpop.f32.mrf.mxu0
        %v2180 = vadd.f32 %v2009, %v2179
        %v2181 = vpop.f32.mrf.mxu0
        %v2182 = vpop.f32.mrf.mxu0
        %v2183 = vadd.f32 %v2009, %v2182
        %v2184 = vpop.f32.mrf.mxu0
        %2185 = vdwg.mxu0
        %v2186 = vsel %vm1179, %v2180, -inf
        %2187 = vmax.xlane.f32.xlu0 %v2186
        %v2188 = vpop.xlane.xlu0 %2187
        %v2189 = vsel %vm1179, %v2183, -inf
        %2190 = vmax.xlane.f32.xlu0 %v2189
        %v2191 = vpop.xlane.xlu0 %2190
        %v2192 = vsub.f32 %v2180, %v2188
        %v2193 = vsub.f32 %v2183, %v2191
        %v2194 = vmul.f32 %v2192, 1.442695
        %v2195 = vpow.pop %v2194
        %v2196 = vmul.f32 %v2193, 1.442695
        %v2197 = vpow.pop %v2196
        %v2198 = vsel %vm1179, %v2195, 0.0
        %2199 = vadd.xlane.f32.xlu0 %v2198
        %v2200 = vpop.xlane.xlu0 %2199
        %v2201 = vsel %vm1179, %v2197, 0.0
        %2202 = vadd.xlane.f32.xlu0 %v2201
        %v2203 = vpop.xlane.xlu0 %2202
        %v2204 = vrcp.pop %v2200
        %v2205 = vrcp.pop %v2203
        %v2206 = vmul.f32 %v2195, %v2204
        %v2207 = vmul.f32 %v2197, %v2205
        %v2208 = vadd.f32 %v2080, %v2206
        %v2209 = vadd.f32 %v2081, %v2207
        %v2210 = vpack.c.bf16 %v2207, %v2206
        %2212 = vrot.lane.b32.xlu0 %v2004, 120
        %v2213 = vpop.permute.xlu0 %2212
        %v2215 = vsel %vm1179, %v2210, 0
        %v2218 = vsel %vm2086, %v2213, 0
        %2220 = vmatprep.subr.bf16.mxu0 0
        %2221 = vmatpush1.bf16.msra.mxu0 0
        %2222 = vmatprep.subr.bf16.mxu0 0
        %2223 = vmatpush1.bf16.msra.mxu0 0
        %2224 = vmatprep.subr.bf16.mxu0 0
        %2225 = vmatpush1.bf16.msra.mxu0 0
        %2226 = vmatprep.subr.bf16.mxu0 0
        %2227 = vmatpush1.bf16.msra.mxu0 0
        %2228 = vmatprep.subr.bf16.mxu0 0
        %2229 = vmatpush1.bf16.msra.mxu0 0
        %2230 = vmatprep.subr.bf16.mxu0 0
        %2231 = vmatpush1.bf16.msra.mxu0 0
        %2232 = vmatprep.subr.bf16.mxu0 0
        %2233 = vmatpush1.bf16.msra.mxu0 0
        %2234 = vmatprep.subr.bf16.mxu0 0
        %2235 = vmatpush1.bf16.msra.mxu0 %v2218
        %2236 = vmatprep.subr.bf16.mxu0 0
        %2237 = vmatpush2.bf16.msra.mxu0 0
        %2238 = vmatprep.subr.bf16.mxu0 0
        %2239 = vmatpush2.bf16.msra.mxu0 0
        %2240 = vmatprep.subr.bf16.mxu0 0
        %2241 = vmatpush2.bf16.msra.mxu0 0
        %2242 = vmatprep.subr.bf16.mxu0 0
        %2243 = vmatpush2.bf16.msra.mxu0 0
        %2244 = vmatprep.subr.bf16.mxu0 0
        %2245 = vmatpush2.bf16.msra.mxu0 0
        %2246 = vmatprep.subr.bf16.mxu0 0
        %2247 = vmatpush2.bf16.msra.mxu0 0
        %2248 = vmatprep.subr.bf16.mxu0 0
        %2249 = vmatpush2.bf16.msra.mxu0 0
        %2250 = vmatprep.subr.bf16.mxu0 0
        %2251 = vmatpush2.bf16.msra.mxu0 0
        %2252 = vmatprep.mubr.bf16.mxu0 0
        %2253 = vmatmul.mubr.bf16.gmra.mxu0 %v2215
        %v2254 = vpop.f32.mrf.mxu0
        %v2255 = vadd.f32 0.0, %v2254
        %v2256 = vpop.f32.mrf.mxu0
        %v2257 = vpop.f32.mrf.mxu0
        %v2258 = vadd.f32 0.0, %v2257
        %v2259 = vpop.f32.mrf.mxu0
        %2260 = vdwg.mxu0
        %2263 = vrot.lane.b32.xlu0 %v2255, 8
        %v2264 = vpop.permute.xlu0 %2263
        %2265 = vrot.lane.b32.xlu0 %v2258, 8
        %v2266 = vpop.permute.xlu0 %2265
        %2269 = vst.msk [vmem:[#allocation2] sm:$0xff] %vm1428, %v2264
        %2270 = vst.msk [vmem:[#allocation2 + $0x8] sm:$0xff] %vm1428, %v2266
        %2271 = vrot.lane.b32.xlu0 %v2002, 112
        %v2272 = vpop.permute.xlu0 %2271
        %2273 = vrot.lane.b32.xlu0 %v2003, 112
        %v2274 = vpop.permute.xlu0 %2273
        %v2276 = vsel %vm1179, %v2272, 0
        %v2279 = vsel %vm1179, %v2274, 0
        %2281 = vmatprep.subr.bf16.mxu0 0
        %2282 = vmatpush1.bf16.xpose.msra.mxu0 0
        %2283 = vmatprep.subr.bf16.mxu0 0
        %2284 = vmatpush1.bf16.xpose.msra.mxu0 0
        %2285 = vmatprep.subr.bf16.mxu0 0
        %2286 = vmatpush1.bf16.xpose.msra.mxu0 0
        %2287 = vmatprep.subr.bf16.mxu0 0
        %2288 = vmatpush1.bf16.xpose.msra.mxu0 0
        %2289 = vmatprep.subr.bf16.mxu0 0
        %2290 = vmatpush1.bf16.xpose.msra.mxu0 0
        %2291 = vmatprep.subr.bf16.mxu0 0
        %2292 = vmatpush1.bf16.xpose.msra.mxu0 0
        %2293 = vmatprep.subr.bf16.mxu0 0
        %2294 = vmatpush1.bf16.xpose.msra.mxu0 0
        %2295 = vmatprep.subr.bf16.mxu0 0
        %2296 = vmatpush1.bf16.xpose.msra.mxu0 %v2279
        %2297 = vmatprep.subr.bf16.mxu0 0
        %2298 = vmatpush2.bf16.xpose.msra.mxu0 0
        %2299 = vmatprep.subr.bf16.mxu0 0
        %2300 = vmatpush2.bf16.xpose.msra.mxu0 0
        %2301 = vmatprep.subr.bf16.mxu0 0
        %2302 = vmatpush2.bf16.xpose.msra.mxu0 0
        %2303 = vmatprep.subr.bf16.mxu0 0
        %2304 = vmatpush2.bf16.xpose.msra.mxu0 0
        %2305 = vmatprep.subr.bf16.mxu0 0
        %2306 = vmatpush2.bf16.xpose.msra.mxu0 0
        %2307 = vmatprep.subr.bf16.mxu0 0
        %2308 = vmatpush2.bf16.xpose.msra.mxu0 0
        %2309 = vmatprep.subr.bf16.mxu0 0
        %2310 = vmatpush2.bf16.xpose.msra.mxu0 0
        %2311 = vmatprep.subr.bf16.mxu0 0
        %2312 = vmatpush2.bf16.xpose.msra.mxu0 0
        %2313 = vmatprep.mubr.bf16.mxu0 0
        %2314 = vmatmul.mubr.bf16.gmra.mxu0 %v2276
        %v2315 = vpop.f32.mrf.mxu0
        %v2316 = vadd.f32 %v2009, %v2315
        %v2317 = vpop.f32.mrf.mxu0
        %v2318 = vpop.f32.mrf.mxu0
        %v2319 = vadd.f32 %v2009, %v2318
        %v2320 = vpop.f32.mrf.mxu0
        %2321 = vdwg.mxu0
        %v2322 = vsel %vm1179, %v2316, -inf
        %2323 = vmax.xlane.f32.xlu0 %v2322
        %v2324 = vpop.xlane.xlu0 %2323
        %v2325 = vsel %vm1179, %v2319, -inf
        %2326 = vmax.xlane.f32.xlu0 %v2325
        %v2327 = vpop.xlane.xlu0 %2326
        %v2328 = vsub.f32 %v2316, %v2324
        %v2329 = vsub.f32 %v2319, %v2327
        %v2330 = vmul.f32 %v2328, 1.442695
        %v2331 = vpow.pop %v2330
        %v2332 = vmul.f32 %v2329, 1.442695
        %v2333 = vpow.pop %v2332
        %v2334 = vsel %vm1179, %v2331, 0.0
        %2335 = vadd.xlane.f32.xlu0 %v2334
        %v2336 = vpop.xlane.xlu0 %2335
        %v2337 = vsel %vm1179, %v2333, 0.0
        %2338 = vadd.xlane.f32.xlu0 %v2337
        %v2339 = vpop.xlane.xlu0 %2338
        %v2340 = vrcp.pop %v2336
        %v2341 = vrcp.pop %v2339
        %v2342 = vmul.f32 %v2331, %v2340
        %v2343 = vmul.f32 %v2333, %v2341
        %v2344 = vadd.f32 %v2208, %v2342
        %v2345 = vadd.f32 %v2209, %v2343
        %v2346 = vpack.c.bf16 %v2343, %v2342
        %2347 = vrot.lane.b32.xlu0 %v2004, 112
        %v2348 = vpop.permute.xlu0 %2347
        %v2350 = vsel %vm1179, %v2346, 0
        %v2353 = vsel %vm2086, %v2348, 0
        %2355 = vmatprep.subr.bf16.mxu0 0
        %2356 = vmatpush1.bf16.msra.mxu0 0
        %2357 = vmatprep.subr.bf16.mxu0 0
        %2358 = vmatpush1.bf16.msra.mxu0 0
        %2359 = vmatprep.subr.bf16.mxu0 0
        %2360 = vmatpush1.bf16.msra.mxu0 0
        %2361 = vmatprep.subr.bf16.mxu0 0
        %2362 = vmatpush1.bf16.msra.mxu0 0
        %2363 = vmatprep.subr.bf16.mxu0 0
        %2364 = vmatpush1.bf16.msra.mxu0 0
        %2365 = vmatprep.subr.bf16.mxu0 0
        %2366 = vmatpush1.bf16.msra.mxu0 0
        %2367 = vmatprep.subr.bf16.mxu0 0
        %2368 = vmatpush1.bf16.msra.mxu0 0
        %2369 = vmatprep.subr.bf16.mxu0 0
        %2370 = vmatpush1.bf16.msra.mxu0 %v2353
        %2371 = vmatprep.subr.bf16.mxu0 0
        %2372 = vmatpush2.bf16.msra.mxu0 0
        %2373 = vmatprep.subr.bf16.mxu0 0
        %2374 = vmatpush2.bf16.msra.mxu0 0
        %2375 = vmatprep.subr.bf16.mxu0 0
        %2376 = vmatpush2.bf16.msra.mxu0 0
        %2377 = vmatprep.subr.bf16.mxu0 0
        %2378 = vmatpush2.bf16.msra.mxu0 0
        %2379 = vmatprep.subr.bf16.mxu0 0
        %2380 = vmatpush2.bf16.msra.mxu0 0
        %2381 = vmatprep.subr.bf16.mxu0 0
        %2382 = vmatpush2.bf16.msra.mxu0 0
        %2383 = vmatprep.subr.bf16.mxu0 0
        %2384 = vmatpush2.bf16.msra.mxu0 0
        %2385 = vmatprep.subr.bf16.mxu0 0
        %2386 = vmatpush2.bf16.msra.mxu0 0
        %2387 = vmatprep.mubr.bf16.mxu0 0
        %2388 = vmatmul.mubr.bf16.gmra.mxu0 %v2350
        %v2389 = vpop.f32.mrf.mxu0
        %v2390 = vadd.f32 0.0, %v2389
        %v2391 = vpop.f32.mrf.mxu0
        %v2392 = vpop.f32.mrf.mxu0
        %v2393 = vadd.f32 0.0, %v2392
        %v2394 = vpop.f32.mrf.mxu0
        %2395 = vdwg.mxu0
        %2398 = vrot.lane.b32.xlu0 %v2390, 16
        %v2399 = vpop.permute.xlu0 %2398
        %2400 = vrot.lane.b32.xlu0 %v2393, 16
        %v2401 = vpop.permute.xlu0 %2400
        %2404 = vst.msk [vmem:[#allocation2] sm:$0xff] %vm1560, %v2399
        %2405 = vst.msk [vmem:[#allocation2 + $0x8] sm:$0xff] %vm1560, %v2401
        %2406 = vrot.lane.b32.xlu0 %v2002, 104
        %v2407 = vpop.permute.xlu0 %2406
        %2408 = vrot.lane.b32.xlu0 %v2003, 104
        %v2409 = vpop.permute.xlu0 %2408
        %v2411 = vsel %vm1179, %v2407, 0
        %v2414 = vsel %vm1179, %v2409, 0
        %2416 = vmatprep.subr.bf16.mxu0 0
        %2417 = vmatpush1.bf16.xpose.msra.mxu0 0
        %2418 = vmatprep.subr.bf16.mxu0 0
        %2419 = vmatpush1.bf16.xpose.msra.mxu0 0
        %2420 = vmatprep.subr.bf16.mxu0 0
        %2421 = vmatpush1.bf16.xpose.msra.mxu0 0
        %2422 = vmatprep.subr.bf16.mxu0 0
        %2423 = vmatpush1.bf16.xpose.msra.mxu0 0
        %2424 = vmatprep.subr.bf16.mxu0 0
        %2425 = vmatpush1.bf16.xpose.msra.mxu0 0
        %2426 = vmatprep.subr.bf16.mxu0 0
        %2427 = vmatpush1.bf16.xpose.msra.mxu0 0
        %2428 = vmatprep.subr.bf16.mxu0 0
        %2429 = vmatpush1.bf16.xpose.msra.mxu0 0
        %2430 = vmatprep.subr.bf16.mxu0 0
        %2431 = vmatpush1.bf16.xpose.msra.mxu0 %v2414
        %2432 = vmatprep.subr.bf16.mxu0 0
        %2433 = vmatpush2.bf16.xpose.msra.mxu0 0
        %2434 = vmatprep.subr.bf16.mxu0 0
        %2435 = vmatpush2.bf16.xpose.msra.mxu0 0
        %2436 = vmatprep.subr.bf16.mxu0 0
        %2437 = vmatpush2.bf16.xpose.msra.mxu0 0
        %2438 = vmatprep.subr.bf16.mxu0 0
        %2439 = vmatpush2.bf16.xpose.msra.mxu0 0
        %2440 = vmatprep.subr.bf16.mxu0 0
        %2441 = vmatpush2.bf16.xpose.msra.mxu0 0
        %2442 = vmatprep.subr.bf16.mxu0 0
        %2443 = vmatpush2.bf16.xpose.msra.mxu0 0
        %2444 = vmatprep.subr.bf16.mxu0 0
        %2445 = vmatpush2.bf16.xpose.msra.mxu0 0
        %2446 = vmatprep.subr.bf16.mxu0 0
        %2447 = vmatpush2.bf16.xpose.msra.mxu0 0
        %2448 = vmatprep.mubr.bf16.mxu0 0
        %2449 = vmatmul.mubr.bf16.gmra.mxu0 %v2411
        %v2450 = vpop.f32.mrf.mxu0
        %v2451 = vadd.f32 %v2009, %v2450
        %v2452 = vpop.f32.mrf.mxu0
        %v2453 = vpop.f32.mrf.mxu0
        %v2454 = vadd.f32 %v2009, %v2453
        %v2455 = vpop.f32.mrf.mxu0
        %2456 = vdwg.mxu0
        %v2457 = vsel %vm1179, %v2451, -inf
        %2458 = vmax.xlane.f32.xlu0 %v2457
        %v2459 = vpop.xlane.xlu0 %2458
        %v2460 = vsel %vm1179, %v2454, -inf
        %2461 = vmax.xlane.f32.xlu0 %v2460
        %v2462 = vpop.xlane.xlu0 %2461
        %v2463 = vsub.f32 %v2451, %v2459
        %v2464 = vsub.f32 %v2454, %v2462
        %v2465 = vmul.f32 %v2463, 1.442695
        %v2466 = vpow.pop %v2465
        %v2467 = vmul.f32 %v2464, 1.442695
        %v2468 = vpow.pop %v2467
        %v2469 = vsel %vm1179, %v2466, 0.0
        %2470 = vadd.xlane.f32.xlu0 %v2469
        %v2471 = vpop.xlane.xlu0 %2470
        %v2472 = vsel %vm1179, %v2468, 0.0
        %2473 = vadd.xlane.f32.xlu0 %v2472
        %v2474 = vpop.xlane.xlu0 %2473
        %v2475 = vrcp.pop %v2471
        %v2476 = vrcp.pop %v2474
        %v2477 = vmul.f32 %v2466, %v2475
        %v2478 = vmul.f32 %v2468, %v2476
        %v2479 = vadd.f32 %v2344, %v2477
        %v2480 = vadd.f32 %v2345, %v2478
        %v2481 = vpack.c.bf16 %v2478, %v2477
        %2482 = vrot.lane.b32.xlu0 %v2004, 104
        %v2483 = vpop.permute.xlu0 %2482
        %v2485 = vsel %vm1179, %v2481, 0
        %v2488 = vsel %vm2086, %v2483, 0
        %2490 = vmatprep.subr.bf16.mxu0 0
        %2491 = vmatpush1.bf16.msra.mxu0 0
        %2492 = vmatprep.subr.bf16.mxu0 0
        %2493 = vmatpush1.bf16.msra.mxu0 0
        %2494 = vmatprep.subr.bf16.mxu0 0
        %2495 = vmatpush1.bf16.msra.mxu0 0
        %2496 = vmatprep.subr.bf16.mxu0 0
        %2497 = vmatpush1.bf16.msra.mxu0 0
        %2498 = vmatprep.subr.bf16.mxu0 0
        %2499 = vmatpush1.bf16.msra.mxu0 0
        %2500 = vmatprep.subr.bf16.mxu0 0
        %2501 = vmatpush1.bf16.msra.mxu0 0
        %2502 = vmatprep.subr.bf16.mxu0 0
        %2503 = vmatpush1.bf16.msra.mxu0 0
        %2504 = vmatprep.subr.bf16.mxu0 0
        %2505 = vmatpush1.bf16.msra.mxu0 %v2488
        %2506 = vmatprep.subr.bf16.mxu0 0
        %2507 = vmatpush2.bf16.msra.mxu0 0
        %2508 = vmatprep.subr.bf16.mxu0 0
        %2509 = vmatpush2.bf16.msra.mxu0 0
        %2510 = vmatprep.subr.bf16.mxu0 0
        %2511 = vmatpush2.bf16.msra.mxu0 0
        %2512 = vmatprep.subr.bf16.mxu0 0
        %2513 = vmatpush2.bf16.msra.mxu0 0
        %2514 = vmatprep.subr.bf16.mxu0 0
        %2515 = vmatpush2.bf16.msra.mxu0 0
        %2516 = vmatprep.subr.bf16.mxu0 0
        %2517 = vmatpush2.bf16.msra.mxu0 0
        %2518 = vmatprep.subr.bf16.mxu0 0
        %2519 = vmatpush2.bf16.msra.mxu0 0
        %2520 = vmatprep.subr.bf16.mxu0 0
        %2521 = vmatpush2.bf16.msra.mxu0 0
        %2522 = vmatprep.mubr.bf16.mxu0 0
        %2523 = vmatmul.mubr.bf16.gmra.mxu0 %v2485
        %v2524 = vpop.f32.mrf.mxu0
        %v2525 = vadd.f32 0.0, %v2524
        %v2526 = vpop.f32.mrf.mxu0
        %v2527 = vpop.f32.mrf.mxu0
        %v2528 = vadd.f32 0.0, %v2527
        %v2529 = vpop.f32.mrf.mxu0
        %2530 = vdwg.mxu0
        %2533 = vrot.lane.b32.xlu0 %v2525, 24
        %v2534 = vpop.permute.xlu0 %2533
        %2535 = vrot.lane.b32.xlu0 %v2528, 24
        %v2536 = vpop.permute.xlu0 %2535
        %2539 = vst.msk [vmem:[#allocation2] sm:$0xff] %vm1692, %v2534
        %2540 = vst.msk [vmem:[#allocation2 + $0x8] sm:$0xff] %vm1692, %v2536
        %v2541 = vld [vmem:[#allocation2] sm:$0xff]
        %v2542 = vld [vmem:[#allocation2 + $0x8] sm:$0xff]
        %v2543 = vmul.f32 %v2479, 0.25
        %v2544 = vmul.f32 %v2480, 0.25
        %v2545 = vpack.c.bf16 %v2542, %v2541
        %s2546 = scalar_lea.vmem %s980, 48
        %v2547 = vld [vmem:[%s2546] sm:$0xf]
        %v2548 = vld [vmem:[%s2546 + $0x4] sm:$0xf]
        %v2549 = vld [vmem:[%s2546 + $0x8] sm:$0xf]
        %v2550 = vld [vmem:[%s2546 + $0xc] sm:$0xf]
        %v2551 = vlaneseq
        %v2552 = vshrl.u32 %v2551, 7
        %v2553 = vsub.s32 3, %v2552
        %v2554 = vrot.slane %v1021, %v2553
        %v2559 = vunpack.c.l.b16 %v2547
        %v2560 = vunpack.c.l.b16 %v2548
        %v2561 = vunpack.c.l.b16 %v2549
        %v2562 = vunpack.c.l.b16 %v2550
        %v2563 = vpack.c.b16 %v2560, %v2559
        %v2564 = vpack.c.b16 %v2562, %v2561
        %v2568 = vsel %vm1041, %v2545, 0
        %2570 = vmatprep.subr.bf16.mxu0 0
        %2571 = vmatpush1.bf16.msra.mxu0 0
        %2572 = vmatprep.subr.bf16.mxu0 0
        %2573 = vmatpush1.bf16.msra.mxu0 0
        %2574 = vmatprep.subr.bf16.mxu0 0
        %2575 = vmatpush1.bf16.msra.mxu0 0
        %2576 = vmatprep.subr.bf16.mxu0 0
        %2577 = vmatpush1.bf16.msra.mxu0 0
        %2578 = vmatprep.subr.bf16.mxu0 0
        %2579 = vmatpush1.bf16.msra.mxu0 0
        %2580 = vmatprep.subr.bf16.mxu0 0
        %2581 = vmatpush1.bf16.msra.mxu0 0
        %2582 = vmatprep.subr.bf16.mxu0 0
        %2583 = vmatpush1.bf16.msra.mxu0 %v2564
        %2584 = vmatprep.subr.bf16.mxu0 0
        %2585 = vmatpush1.bf16.msra.mxu0 %v2563
        %2586 = vmatprep.subr.bf16.mxu0 0
        %2587 = vmatpush2.bf16.msra.mxu0 0
        %2588 = vmatprep.subr.bf16.mxu0 0
        %2589 = vmatpush2.bf16.msra.mxu0 0
        %2590 = vmatprep.subr.bf16.mxu0 0
        %2591 = vmatpush2.bf16.msra.mxu0 0
        %2592 = vmatprep.subr.bf16.mxu0 0
        %2593 = vmatpush2.bf16.msra.mxu0 0
        %2594 = vmatprep.subr.bf16.mxu0 0
        %2595 = vmatpush2.bf16.msra.mxu0 0
        %2596 = vmatprep.subr.bf16.mxu0 0
        %2597 = vmatpush2.bf16.msra.mxu0 0
        %2598 = vmatprep.subr.bf16.mxu0 0
        %2599 = vmatpush2.bf16.msra.mxu0 0
        %2600 = vmatprep.subr.bf16.mxu0 0
        %2601 = vmatpush2.bf16.msra.mxu0 0
        %2602 = vmatprep.mubr.bf16.mxu0 0
        %2603 = vmatmul.mubr.bf16.gmra.mxu0 %v2568
        %v2604 = vpop.f32.mrf.mxu0
        %v2605 = vadd.f32 %v2554, %v2604
        %v2606 = vpop.f32.mrf.mxu0
        %v2607 = vpop.f32.mrf.mxu0
        %v2608 = vadd.f32 %v2554, %v2607
        %v2609 = vpop.f32.mrf.mxu0
        %2610 = vdwg.mxu0
        %v2611 = vadd.f32 %v1802, %v2605
        %v2612 = vadd.f32 %v1803, %v2608
        %v2613 = vsel %vm1041, %v2611, 0.0
        %2614 = vadd.xlane.f32.xlu0 %v2613
        %v2615 = vpop.xlane.xlu0 %2614
        %v2616 = vsel %vm1041, %v2612, 0.0
        %2617 = vadd.xlane.f32.xlu0 %v2616
        %v2618 = vpop.xlane.xlu0 %2617
        %v2619 = vmul.f32 %v2615, %v1771
        %v2620 = vmul.f32 %v2618, %v1771
        %v2621 = vsub.f32 %v2611, %v2619
        %v2622 = vsub.f32 %v2612, %v2620
        %v2623 = vmul.f32 %v2621, %v2621
        %v2624 = vmul.f32 %v2622, %v2622
        %v2625 = vsel %vm1041, %v2623, 0.0
        %2626 = vadd.xlane.f32.xlu0 %v2625
        %v2627 = vpop.xlane.xlu0 %2626
        %v2628 = vsel %vm1041, %v2624, 0.0
        %2629 = vadd.xlane.f32.xlu0 %v2628
        %v2630 = vpop.xlane.xlu0 %2629
        %v2631 = vmul.f32 %v2627, %v1771
        %v2632 = vmul.f32 %v2630, %v1771
        %v2633 = vadd.f32 %v2631, 1e-05
        %v2634 = vadd.f32 %v2632, 1e-05
        %v2635 = vrsqrt.pop %v2633
        %v2636 = vrsqrt.pop %v2634
        %v2637 = vmul.f32 %v2621, %v2635
        %v2638 = vmul.f32 %v2622, %v2636
        %v2639 = vlaneseq
        %v2640 = vshrl.u32 %v2639, 7
        %v2641 = vsub.s32 2, %v2640
        %v2642 = vrot.slane %v1019, %v2641
        %v2643 = vmul.f32 %v2637, %v2642
        %v2644 = vmul.f32 %v2638, %v2642
        %v2645 = vlaneseq
        %v2646 = vshrl.u32 %v2645, 7
        %v2647 = vsub.s32 3, %v2646
        %v2648 = vrot.slane %v1019, %v2647
        %v2649 = vadd.f32 %v2643, %v2648
        %v2650 = vadd.f32 %v2644, %v2648
        %v2651 = vpack.c.bf16 %v2650, %v2649
        %v2652 = vld [vmem:[%s848] sm:$0xf]
        %v2653 = vld [vmem:[%s848 + $0x4] sm:$0xf]
        %v2654 = vld [vmem:[%s848 + $0x8] sm:$0xf]
        %v2655 = vld [vmem:[%s848 + $0xc] sm:$0xf]
        %v2656 = vld [vmem:[%s983] sm:$0x1]
        %v2658 = vlaneseq
        %v2659 = vshrl.u32 %v2658, 7
        %v2660 = vsub.s32 0, %v2659
        %v2661 = vrot.slane %v2656, %v2660
        %v2667 = vunpack.c.l.b16 %v2652
        %v2668 = vunpack.c.l.b16 %v2653
        %v2669 = vunpack.c.l.b16 %v2654
        %v2670 = vunpack.c.l.b16 %v2655
        %v2671 = vpack.c.b16 %v2668, %v2667
        %v2672 = vpack.c.b16 %v2670, %v2669
        %v2676 = vsel %vm1041, %v2651, 0
        %2678 = vmatprep.subr.bf16.mxu0 0
        %2679 = vmatpush1.bf16.msra.mxu0 0
        %2680 = vmatprep.subr.bf16.mxu0 0
        %2681 = vmatpush1.bf16.msra.mxu0 0
        %2682 = vmatprep.subr.bf16.mxu0 0
        %2683 = vmatpush1.bf16.msra.mxu0 0
        %2684 = vmatprep.subr.bf16.mxu0 0
        %2685 = vmatpush1.bf16.msra.mxu0 0
        %2686 = vmatprep.subr.bf16.mxu0 0
        %2687 = vmatpush1.bf16.msra.mxu0 0
        %2688 = vmatprep.subr.bf16.mxu0 0
        %2689 = vmatpush1.bf16.msra.mxu0 0
        %2690 = vmatprep.subr.bf16.mxu0 0
        %2691 = vmatpush1.bf16.msra.mxu0 %v2672
        %2692 = vmatprep.subr.bf16.mxu0 0
        %2693 = vmatpush1.bf16.msra.mxu0 %v2671
        %2694 = vmatprep.subr.bf16.mxu0 0
        %2695 = vmatpush2.bf16.msra.mxu0 0
        %2696 = vmatprep.subr.bf16.mxu0 0
        %2697 = vmatpush2.bf16.msra.mxu0 0
        %2698 = vmatprep.subr.bf16.mxu0 0
        %2699 = vmatpush2.bf16.msra.mxu0 0
        %2700 = vmatprep.subr.bf16.mxu0 0
        %2701 = vmatpush2.bf16.msra.mxu0 0
        %2702 = vmatprep.subr.bf16.mxu0 0
        %2703 = vmatpush2.bf16.msra.mxu0 0
        %2704 = vmatprep.subr.bf16.mxu0 0
        %2705 = vmatpush2.bf16.msra.mxu0 0
        %2706 = vmatprep.subr.bf16.mxu0 0
        %2707 = vmatpush2.bf16.msra.mxu0 0
        %2708 = vmatprep.subr.bf16.mxu0 0
        %2709 = vmatpush2.bf16.msra.mxu0 0
        %2710 = vmatprep.mubr.bf16.mxu0 0
        %2711 = vmatmul.mubr.bf16.gmra.mxu0 %v2676
        %v2712 = vpop.f32.mrf.mxu0
        %v2713 = vadd.f32 %v2661, %v2712
        %v2714 = vpop.f32.mrf.mxu0
        %v2715 = vpop.f32.mrf.mxu0
        %v2716 = vadd.f32 %v2661, %v2715
        %v2717 = vpop.f32.mrf.mxu0
        %2718 = vdwg.mxu0
        %v2719 = vmax.f32 %v2713, 0.0
        %v2720 = vmax.f32 %v2716, 0.0
        %v2721 = vpack.c.bf16 %v2720, %v2719
        %v2722 = vld [vmem:[%s988] sm:$0xf]
        %v2723 = vld [vmem:[%s988 + $0x4] sm:$0xf]
        %v2724 = vld [vmem:[%s988 + $0x8] sm:$0xf]
        %v2725 = vld [vmem:[%s988 + $0xc] sm:$0xf]
        %v2726 = vld [vmem:[%s988 + $0x10] sm:$0xf]
        %v2727 = vld [vmem:[%s988 + $0x14] sm:$0xf]
        %v2728 = vld [vmem:[%s988 + $0x18] sm:$0xf]
        %v2729 = vld [vmem:[%s988 + $0x1c] sm:$0xf]
        %v2730 = vld [vmem:[%s991] sm:$0x1]
        %v2732 = vlaneseq
        %v2733 = vshrl.u32 %v2732, 7
        %v2734 = vsub.s32 0, %v2733
        %v2735 = vrot.slane %v2730, %v2734
        %v2745 = vunpack.c.l.b16 %v2722
        %v2746 = vunpack.c.l.b16 %v2723
        %v2747 = vunpack.c.l.b16 %v2724
        %v2748 = vunpack.c.l.b16 %v2725
        %v2749 = vunpack.c.l.b16 %v2726
        %v2750 = vunpack.c.l.b16 %v2727
        %v2751 = vunpack.c.l.b16 %v2728
        %v2752 = vunpack.c.l.b16 %v2729
        %v2753 = vpack.c.b16 %v2746, %v2745
        %v2754 = vpack.c.b16 %v2748, %v2747
        %v2755 = vpack.c.b16 %v2750, %v2749
        %v2756 = vpack.c.b16 %v2752, %v2751
        %vm2761 = vcmask 523264
        %v2763 = vsel %vm2761, %v2721, 0
        %2765 = vmatprep.subr.bf16.mxu0 0
        %2766 = vmatpush1.bf16.msra.mxu0 0
        %2767 = vmatprep.subr.bf16.mxu0 0
        %2768 = vmatpush1.bf16.msra.mxu0 0
        %2769 = vmatprep.subr.bf16.mxu0 0
        %2770 = vmatpush1.bf16.msra.mxu0 0
        %2771 = vmatprep.subr.bf16.mxu0 0
        %2772 = vmatpush1.bf16.msra.mxu0 0
        %2773 = vmatprep.subr.bf16.mxu0 0
        %2774 = vmatpush1.bf16.msra.mxu0 %v2756
        %2775 = vmatprep.subr.bf16.mxu0 0
        %2776 = vmatpush1.bf16.msra.mxu0 %v2755
        %2777 = vmatprep.subr.bf16.mxu0 0
        %2778 = vmatpush1.bf16.msra.mxu0 %v2754
        %2779 = vmatprep.subr.bf16.mxu0 0
        %2780 = vmatpush1.bf16.msra.mxu0 %v2753
        %2781 = vmatprep.subr.bf16.mxu0 0
        %2782 = vmatpush2.bf16.msra.mxu0 0
        %2783 = vmatprep.subr.bf16.mxu0 0
        %2784 = vmatpush2.bf16.msra.mxu0 0
        %2785 = vmatprep.subr.bf16.mxu0 0
        %2786 = vmatpush2.bf16.msra.mxu0 0
        %2787 = vmatprep.subr.bf16.mxu0 0
        %2788 = vmatpush2.bf16.msra.mxu0 0
        %2789 = vmatprep.subr.bf16.mxu0 0
        %2790 = vmatpush2.bf16.msra.mxu0 0
        %2791 = vmatprep.subr.bf16.mxu0 0
        %2792 = vmatpush2.bf16.msra.mxu0 0
        %2793 = vmatprep.subr.bf16.mxu0 0
        %2794 = vmatpush2.bf16.msra.mxu0 0
        %2795 = vmatprep.subr.bf16.mxu0 0
        %2796 = vmatpush2.bf16.msra.mxu0 0
        %2797 = vmatprep.mubr.bf16.mxu0 0
        %2798 = vmatmul.mubr.bf16.gmra.mxu0 %v2763
        %v2799 = vpop.f32.mrf.mxu0
        %v2800 = vadd.f32 %v2735, %v2799
        %v2801 = vpop.f32.mrf.mxu0
        %v2802 = vpop.f32.mrf.mxu0
        %v2803 = vadd.f32 %v2735, %v2802
        %v2804 = vpop.f32.mrf.mxu0
        %2805 = vdwg.mxu0
        %v2806 = vadd.f32 %v2649, %v2800
        %v2807 = vadd.f32 %v2650, %v2803
        %v2808 = vsel %vm1041, %v2806, 0.0
        %2809 = vadd.xlane.f32.xlu0 %v2808
        %v2810 = vpop.xlane.xlu0 %2809
        %v2811 = vsel %vm1041, %v2807, 0.0
        %2812 = vadd.xlane.f32.xlu0 %v2811
        %v2813 = vpop.xlane.xlu0 %2812
        %v2814 = vmul.f32 %v2810, %v1771
        %v2815 = vmul.f32 %v2813, %v1771
        %v2816 = vsub.f32 %v2806, %v2814
        %v2817 = vsub.f32 %v2807, %v2815
        %v2818 = vmul.f32 %v2816, %v2816
        %v2819 = vmul.f32 %v2817, %v2817
        %v2820 = vsel %vm1041, %v2818, 0.0
        %2821 = vadd.xlane.f32.xlu0 %v2820
        %v2822 = vpop.xlane.xlu0 %2821
        %v2823 = vsel %vm1041, %v2819, 0.0
        %2824 = vadd.xlane.f32.xlu0 %v2823
        %v2825 = vpop.xlane.xlu0 %2824
        %v2826 = vmul.f32 %v2822, %v1771
        %v2827 = vmul.f32 %v2825, %v1771
        %v2828 = vadd.f32 %v2826, 1e-05
        %v2829 = vadd.f32 %v2827, 1e-05
        %v2830 = vrsqrt.pop %v2828
        %v2831 = vrsqrt.pop %v2829
        %v2832 = vmul.f32 %v2816, %v2830
        %v2833 = vmul.f32 %v2817, %v2831
        %v2834 = vlaneseq
        %v2835 = vshrl.u32 %v2834, 7
        %v2836 = vsub.s32 4, %v2835
        %v2837 = vrot.slane %v1019, %v2836
        %v2838 = vmul.f32 %v2832, %v2837
        %v2839 = vmul.f32 %v2833, %v2837
        %v2840 = vlaneseq
        %v2841 = vshrl.u32 %v2840, 7
        %v2842 = vsub.s32 5, %v2841
        %v2843 = vrot.slane %v1019, %v2842
        %v2844 = vadd.f32 %v2838, %v2843
        %v2845 = vadd.f32 %v2839, %v2843
        %2846 = vst.msk [vmem:[%s962] sm:$0xff] %vm1041, %v2844
        %2847 = vst.msk [vmem:[%s962 + $0x8] sm:$0xff] %vm1041, %v2845
        %2848 = vst.msk [vmem:[%s1000] sm:$0xff] %vm1179, %v2543
        %2849 = vst.msk [vmem:[%s1000 + $0x8] sm:$0xff] %vm1179, %v2544
        %s2850 = sand.u32 %s483, 1
        %s2851 = scalar_lea.sflag [#allocation5], %s2850
        %s2852 = sand.u32 %s483, 1
        %s2853 = smul.addr %s2852, 16
        %s2854 = scalar_lea.vmem [#allocation18], %s2853
        %p2855 = scmp.lt.s32.totalorder %s51, 1
        %s2856 = scalar_select %p2855, %s51, 1
        %s2857 = smul.addr %s2856, 2
        %s2858 = smul.addr %s2857, 8
        %s2859 = scalar_lea.vmem %s17, %s2858
        // Predicated region
        $region125: #{tpu_custom_call.1} parent=83 // pred_check
          %p2860 = pneg %p493
        $region126: #{tpu_custom_call.1} parent=83 // pred_check_branch
          %2862 = sbr.rel (%p2860) target = $region128
        $region127: #{tpu_custom_call.1} parent=83 // pred_region
          %s2864 = ssub.s32 256, 256
          %2865 = vsyncadd %s2851, %s2864
          %s2866 = smul.addr %s51, 2
          %s2867 = smul.addr %s2866, 128
          %s2868 = scalar_lea.hbm %s16, %s2867
          %s2869 = sshll.u32 %s2854, 4
          %s2870 = int_to_ptr.vmem [resolvable:$true] %s2869
          %2875 = dma.vmem_to_hbm [thread:$0]  %s2870, 256, %s2868, %s2851, 128, 128, 8
        $region128: #{tpu_custom_call.1} parent=83 // pred_fallthru
          _
        // Predicated region
        $region129: #{tpu_custom_call.1} parent=83 // pred_check
          %p2876 = pneg %p519
        $region130: #{tpu_custom_call.1} parent=83 // pred_check_branch
          %2878 = sbr.rel (%p2876) target = $region132
        $region131: #{tpu_custom_call.1} parent=83 // pred_region
          _
        $region132: #{tpu_custom_call.1} parent=83 // pred_fallthru
          _
      $region84: #{tpu_custom_call.1} parent=5 // pred_fallthru
        _
      %p2879 = scmp.le.s32.totalorder 2, %s42
      // Predicated region
      $region133: #{tpu_custom_call.1} parent=5 // pred_check
        %p2880 = pneg %p2879
      $region134: #{tpu_custom_call.1} parent=5 // pred_check_branch
        %2882 = sbr.rel (%p2880) target = $region136
      $region135: #{tpu_custom_call.1} parent=5 // pred_region
        %s2883 = ssub.s32 %s42, 2
        // Predicated region
        $region137: #{tpu_custom_call.1} parent=135 // pred_check
          %p2884 = pneg %p499
        $region138: #{tpu_custom_call.1} parent=135 // pred_check_branch
          %2886 = sbr.rel (%p2884) target = $region140
        $region139: #{tpu_custom_call.1} parent=135 // pred_region
          %s2887 = sand.u32 %s484, 1
          %s2888 = scalar_lea.sflag [#allocation5], %s2887
          %s2889 = sand.u32 %s484, 1
          %s2890 = smul.addr %s2889, 16
          %s2891 = scalar_lea.vmem [#allocation18], %s2890
          %2892 = dma.done %s2888, 256
        $region140: #{tpu_custom_call.1} parent=135 // pred_fallthru
          _
        // Predicated region
        $region141: #{tpu_custom_call.1} parent=135 // pred_check
          %p2893 = pneg %p525
        $region142: #{tpu_custom_call.1} parent=135 // pred_check_branch
          %2895 = sbr.rel (%p2893) target = $region144
        $region143: #{tpu_custom_call.1} parent=135 // pred_region
          %p2896 = scmp.lt.s32.totalorder %s53, 1
          %s2897 = scalar_select %p2896, %s53, 1
          %s2898 = smul.addr %s2897, 2
          %s2899 = smul.addr %s2898, 8
          %s2900 = scalar_lea.vmem %s17, %s2899
        $region144: #{tpu_custom_call.1} parent=135 // pred_fallthru
          _
      $region136: #{tpu_custom_call.1} parent=5 // pred_fallthru
        _
    $region6: #{tpu_custom_call.1} parent=1 // loop_footer
      %s46 = sadd.s32 1, %s42
    $region7: #{tpu_custom_call.1} parent=1 // loop_footer_branch
      %41 = sbr.rel target = $region3
    $region8: #{tpu_custom_call.1} parent=1 // loop_exit
      _
    %2901 = vsyncpa [#allocation4], 1
    %s2902 = scalar_lea.sflag [#allocation4], 1
    %2903 = vsyncpa %s2902, 1
    %2904 = vsyncpa [#allocation7], 1
    %s2905 = scalar_lea.sflag [#allocation7], 1
    %2906 = vsyncpa %s2905, 1
    %2907 = vsyncpa [#allocation10], 1
    %s2908 = scalar_lea.sflag [#allocation10], 1
    %2909 = vsyncpa %s2908, 1
    %2910 = vsyncpa [#allocation13], 1
    %s2911 = scalar_lea.sflag [#allocation13], 1
    %2912 = vsyncpa %s2911, 1
    %2913 = vsyncpa [#allocation16], 1
    %s2914 = scalar_lea.sflag [#allocation16], 1
    %2915 = vsyncpa %s2914, 1
    %2916 = vsyncpa [#allocation5], 1
    %s2917 = scalar_lea.sflag [#allocation5], 1
    %2918 = vsyncpa %s2917, 1

</llo_original>
